<compile_context>
chip_gen: v6e
topology: v6e:2x2x1
jax: 0.10.0
libtpu: 0.0.40
codegen_flags: <defaults>
</compile_context>

<pallas_src>
import jax
import jax.numpy as jnp
from jax.experimental import pallas as pl
from jax.experimental.pallas import tpu as pltpu


def _newton_reciprocal(v):
    # EUP approximate seed (separate issue slot, off the VALU) + one
    # Newton-Raphson refinement: adds only 2 VALU ops, error ~2^-24..2^-28.
    r = pl.reciprocal(v, approx=True)
    return r * (2.0 - v * r)


def _repro_kernel(p1_ref, p2_ref, p3_ref, p4_ref, add4_ref, sub3_ref):
    x = p1_ref[0]      # primals_1[0]
    y = p1_ref[1]      # primals_1[1]
    p2 = p2_ref[...]
    p3 = p3_ref[...]
    p4 = p4_ref[...]

    inv_x = _newton_reciprocal(x)
    inv_y = _newton_reciprocal(y)

    # mul = primals_2 * (x^2 + y^2)
    mul = p2 * (x * x + y * y)
    # add_1 = primals_2 + x / y
    add_1 = p2 + x * inv_y
    # add_2 = 3*x + primals_2*y
    add_2 = x * 3.0 + p2 * y
    # mul_3 = add_1 * add_2
    mul_3 = add_1 * add_2
    # sub_1 = primals_2 - (y - primals_3)^2 / x
    sub = y - p3
    sub_1 = p2 - (sub * sub) * inv_x
    # add_3 = mul + mul_3
    add_3 = mul + mul_3
    # sub_3 = (primals_4 - primals_3) - mul
    sub_3 = (p4 - p3) - mul
    # add_4 = add_3 + sub_1 / sub_3
    add_4 = add_3 + sub_1 * _newton_reciprocal(sub_3)

    add4_ref[...] = add_4
    sub3_ref[...] = sub_3


def _num_tensorcores():
    try:
        kind = jax.devices()[0].device_kind.lower()
        if "v7" in kind:
            return 2
    except Exception:
        pass
    return 1


def _vmem_capacity_bytes():
    try:
        return int(pltpu.get_tpu_info().vmem_capacity_bytes)
    except Exception:
        return 64 * 1024 * 1024


def repro_forward(primals_1, primals_2, primals_3, primals_4):
    """Returns [add_4, primals_1, primals_2, primals_3, sub_3] like the torch module."""
    two, R, C = primals_1.shape
    assert two == 2
    assert primals_2.shape == (R, C)
    dtype = primals_2.dtype
    itemsize = jnp.dtype(dtype).itemsize
    N = R * C

    # --- lane-dense flattening (elementwise -> layout change is free) ------
    lane = None
    for cand in (1024, 512, 256, 128):
        if N % cand == 0:
            lane = cand
            break
    if lane is None:
        rows, lane = R, C                    # fall back to native layout
        reshaped = False
    else:
        rows = N // lane
        reshaped = True
        primals_1 = primals_1.reshape(2, rows, lane)
        primals_2 = primals_2.reshape(rows, lane)
        primals_3 = primals_3.reshape(rows, lane)
        primals_4 = primals_4.reshape(rows, lane)

    # --- tile selection ------------------------------------------------------
    # Live set per grid step: p1 (2 planes) + p2 + p3 + p4 + 2 outputs
    # = 7 tiles, x2 for double buffering = 14 tiles.
    num_cores = _num_tensorcores()
    vmem_cap = _vmem_capacity_bytes()
    vmem_budget = min(40 * 1024 * 1024, vmem_cap // 2)
    max_rows = max(8, vmem_budget // (14 * lane * itemsize))

    if num_cores == 1 and rows <= max_rows:
        tm = rows                                            # grid=(1,): one DMA pair
    else:
        tm_cap = max(8, (min(rows, max_rows, 2048) // 8) * 8)
        steps = max(num_cores, pl.cdiv(rows, tm_cap))
        steps = pl.cdiv(steps, num_cores) * num_cores        # TC-balanced on v7x
        tm = pl.cdiv(rows, steps)
        if tm < rows:
            tm = max(8, pl.cdiv(tm, 8) * 8)                  # (8,128) constraint
        tm = min(tm, rows)
    grid = (pl.cdiv(rows, tm),)

    p1_spec = pl.BlockSpec((2, tm, lane), lambda i: (0, i, 0))
    rc_spec = pl.BlockSpec((tm, lane), lambda i: (i, 0))

    cost = pl.CostEstimate(
        flops=25 * N,
        transcendentals=3 * N,
        bytes_accessed=7 * N * itemsize,   # 5 input planes + 2 output planes
    )

    add_4, sub_3 = pl.pallas_call(
        _repro_kernel,
        out_shape=(
            jax.ShapeDtypeStruct((rows, lane), dtype),
            jax.ShapeDtypeStruct((rows, lane), dtype),
        ),
        grid=grid,
        in_specs=[p1_spec, rc_spec, rc_spec, rc_spec],
        out_specs=(rc_spec, rc_spec),
        compiler_params=pltpu.CompilerParams(
            dimension_semantics=("parallel",),
            vmem_limit_bytes=int(min(vmem_cap * 3 // 4, 96 * 1024 * 1024)),
        ),
        cost_estimate=cost,
    )(primals_1, primals_2, primals_3, primals_4)

    if reshaped:
        add_4 = add_4.reshape(R, C)
        sub_3 = sub_3.reshape(R, C)
        primals_1 = primals_1.reshape(2, R, C)
        primals_2 = primals_2.reshape(R, C)
        primals_3 = primals_3.reshape(R, C)

    return [add_4, primals_1, primals_2, primals_3, sub_3]


def _reference(primals_1, primals_2, primals_3, primals_4):
    x = primals_1[0]
    y = primals_1[1]
    mul = primals_2 * (x ** 2 + y ** 2)
    add_1 = primals_2 + x / y
    add_2 = x * 3.0 + primals_2 * y
    mul_3 = add_1 * add_2
    sub_1 = primals_2 - (y - primals_3) ** 2 / x
    add_3 = mul + mul_3
    sub_3 = (primals_4 - primals_3) - mul
    add_4 = add_3 + sub_1 / sub_3
    return add_4, sub_3


if __name__ == "__main__":
    key = jax.random.PRNGKey(0)
    k1, k2, k3, k4 = jax.random.split(key, 4)

    R, C = 1024, 128
    # keep values away from zero to avoid div-by-zero in x/y, /x, /sub_3
    primals_1 = jax.random.uniform(k1, (2, R, C), jnp.float32, 1.0, 2.0)
    primals_2 = jax.random.uniform(k2, (R, C), jnp.float32, 1.0, 2.0)
    primals_3 = jax.random.uniform(k3, (R, C), jnp.float32, 0.0, 0.5)
    primals_4 = jax.random.uniform(k4, (R, C), jnp.float32, 20.0, 30.0)

    outs = repro_forward(primals_1, primals_2, primals_3, primals_4)
    jax.block_until_ready(outs)

    ref_add4, ref_sub3 = _reference(primals_1, primals_2, primals_3, primals_4)
    assert jnp.allclose(outs[0], ref_add4, rtol=1e-5, atol=1e-5)
    assert jnp.allclose(outs[4], ref_sub3, rtol=1e-5, atol=1e-5)
    assert jnp.array_equal(outs[1], primals_1)
    assert jnp.array_equal(outs[2], primals_2)
    assert jnp.array_equal(outs[3], primals_3)

    print("KERNEL_OK")
</pallas_src>

<mosaic_0001>
module attributes {stable_mosaic.version = 11 : i64} {
  func.func @_repro_kernel(%arg0: i32, %arg1: memref<2x128x1024xf32, #tpu.memory_space<vmem>>, %arg2: memref<128x1024xf32, #tpu.memory_space<vmem>>, %arg3: memref<128x1024xf32, #tpu.memory_space<vmem>>, %arg4: memref<128x1024xf32, #tpu.memory_space<vmem>>, %arg5: memref<128x1024xf32, #tpu.memory_space<vmem>>, %arg6: memref<128x1024xf32, #tpu.memory_space<vmem>>) attributes {dimension_semantics = [#tpu.dimension_semantics<parallel>], iteration_bounds = array<i64: 1>, scalar_prefetch = 0 : i64, scratch_operands = 0 : i64, tpu.core_type = #tpu.core_type<tc>, window_params = [{transform_indices = @transform_0, window_bounds = array<i64: 2, 128, 1024>}, {transform_indices = @transform_1, window_bounds = array<i64: 128, 1024>}, {transform_indices = @transform_2, window_bounds = array<i64: 128, 1024>}, {transform_indices = @transform_3, window_bounds = array<i64: 128, 1024>}, {transform_indices = @transform_4, window_bounds = array<i64: 128, 1024>}, {transform_indices = @transform_5, window_bounds = array<i64: 128, 1024>}]} {
    %c0 = arith.constant 0 : index
    %c0_0 = arith.constant 0 : index
    %c0_1 = arith.constant 0 : index
    %0 = vector.load %arg1[%c0, %c0_0, %c0_1] : memref<2x128x1024xf32, #tpu.memory_space<vmem>>, vector<1x128x1024xf32>
    %1 = vector.shape_cast %0 : vector<1x128x1024xf32> to vector<128x1024xf32>
    %c1 = arith.constant 1 : index
    %c0_2 = arith.constant 0 : index
    %c0_3 = arith.constant 0 : index
    %2 = vector.load %arg1[%c1, %c0_2, %c0_3] : memref<2x128x1024xf32, #tpu.memory_space<vmem>>, vector<1x128x1024xf32>
    %3 = vector.shape_cast %2 : vector<1x128x1024xf32> to vector<128x1024xf32>
    %c0_4 = arith.constant 0 : index
    %c0_5 = arith.constant 0 : index
    %4 = vector.load %arg2[%c0_4, %c0_5] : memref<128x1024xf32, #tpu.memory_space<vmem>>, vector<128x1024xf32>
    %c0_6 = arith.constant 0 : index
    %c0_7 = arith.constant 0 : index
    %5 = vector.load %arg3[%c0_6, %c0_7] : memref<128x1024xf32, #tpu.memory_space<vmem>>, vector<128x1024xf32>
    %c0_8 = arith.constant 0 : index
    %c0_9 = arith.constant 0 : index
    %6 = vector.load %arg4[%c0_8, %c0_9] : memref<128x1024xf32, #tpu.memory_space<vmem>>, vector<128x1024xf32>
    %7 = tpu.reciprocal %1 {approx = true} : vector<128x1024xf32> -> vector<128x1024xf32>
    %8 = arith.mulf %1, %7 : vector<128x1024xf32>
    %cst = arith.constant 2.000000e+00 : f32
    %9 = vector.broadcast %cst : f32 to vector<128x1024xf32>
    %10 = arith.subf %9, %8 : vector<128x1024xf32>
    %11 = arith.mulf %7, %10 : vector<128x1024xf32>
    %12 = tpu.reciprocal %3 {approx = true} : vector<128x1024xf32> -> vector<128x1024xf32>
    %13 = arith.mulf %3, %12 : vector<128x1024xf32>
    %cst_10 = arith.constant 2.000000e+00 : f32
    %14 = vector.broadcast %cst_10 : f32 to vector<128x1024xf32>
    %15 = arith.subf %14, %13 : vector<128x1024xf32>
    %16 = arith.mulf %12, %15 : vector<128x1024xf32>
    %17 = arith.mulf %1, %1 : vector<128x1024xf32>
    %18 = arith.mulf %3, %3 : vector<128x1024xf32>
    %19 = arith.addf %17, %18 : vector<128x1024xf32>
    %20 = arith.mulf %4, %19 : vector<128x1024xf32>
    %21 = arith.mulf %1, %16 : vector<128x1024xf32>
    %22 = arith.addf %4, %21 : vector<128x1024xf32>
    %cst_11 = arith.constant 3.000000e+00 : f32
    %23 = vector.broadcast %cst_11 : f32 to vector<128x1024xf32>
    %24 = arith.mulf %1, %23 : vector<128x1024xf32>
    %25 = arith.mulf %4, %3 : vector<128x1024xf32>
    %26 = arith.addf %24, %25 : vector<128x1024xf32>
    %27 = arith.mulf %22, %26 : vector<128x1024xf32>
    %28 = arith.subf %3, %5 : vector<128x1024xf32>
    %29 = arith.mulf %28, %28 : vector<128x1024xf32>
    %30 = arith.mulf %29, %11 : vector<128x1024xf32>
    %31 = arith.subf %4, %30 : vector<128x1024xf32>
    %32 = arith.addf %20, %27 : vector<128x1024xf32>
    %33 = arith.subf %6, %5 : vector<128x1024xf32>
    %34 = arith.subf %33, %20 : vector<128x1024xf32>
    %35 = tpu.reciprocal %34 {approx = true} : vector<128x1024xf32> -> vector<128x1024xf32>
    %36 = arith.mulf %34, %35 : vector<128x1024xf32>
    %cst_12 = arith.constant 2.000000e+00 : f32
    %37 = vector.broadcast %cst_12 : f32 to vector<128x1024xf32>
    %38 = arith.subf %37, %36 : vector<128x1024xf32>
    %39 = arith.mulf %35, %38 : vector<128x1024xf32>
    %40 = arith.mulf %31, %39 : vector<128x1024xf32>
    %41 = arith.addf %32, %40 : vector<128x1024xf32>
    %c0_13 = arith.constant 0 : index
    %c0_14 = arith.constant 0 : index
    %42 = vector.load %arg5[%c0_13, %c0_14] : memref<128x1024xf32, #tpu.memory_space<vmem>>, vector<128x1024xf32>
    tpu.vector_store %arg5[%c0_13, %c0_14], %41 {strides = array<i32>} : memref<128x1024xf32, #tpu.memory_space<vmem>>, vector<128x1024xf32>,
    %c0_15 = arith.constant 0 : index
    %c0_16 = arith.constant 0 : index
    %43 = vector.load %arg6[%c0_15, %c0_16] : memref<128x1024xf32, #tpu.memory_space<vmem>>, vector<128x1024xf32>
    tpu.vector_store %arg6[%c0_15, %c0_16], %34 {strides = array<i32>} : memref<128x1024xf32, #tpu.memory_space<vmem>>, vector<128x1024xf32>,
    return
  }
  func.func @transform_0(%arg0: i32) -> (i32, i32, i32) {
    %c0_i32 = arith.constant 0 : i32
    %c0_i32_0 = arith.constant 0 : i32
    %c0_i32_1 = arith.constant 0 : i32
    return %c0_i32, %arg0, %c0_i32_0 : i32, i32, i32
  }
  func.func @transform_1(%arg0: i32) -> (i32, i32) {
    %c0_i32 = arith.constant 0 : i32
    %c0_i32_0 = arith.constant 0 : i32
    return %arg0, %c0_i32 : i32, i32
  }
  func.func @transform_2(%arg0: i32) -> (i32, i32) {
    %c0_i32 = arith.constant 0 : i32
    %c0_i32_0 = arith.constant 0 : i32
    return %arg0, %c0_i32 : i32, i32
  }
  func.func @transform_3(%arg0: i32) -> (i32, i32) {
    %c0_i32 = arith.constant 0 : i32
    %c0_i32_0 = arith.constant 0 : i32
    return %arg0, %c0_i32 : i32, i32
  }
  func.func @transform_4(%arg0: i32) -> (i32, i32) {
    %c0_i32 = arith.constant 0 : i32
    %c0_i32_0 = arith.constant 0 : i32
    return %arg0, %c0_i32 : i32, i32
  }
  func.func @transform_5(%arg0: i32) -> (i32, i32) {
    %c0_i32 = arith.constant 0 : i32
    %c0_i32_0 = arith.constant 0 : i32
    return %arg0, %c0_i32 : i32, i32
  }
}

</mosaic_0001>

<llo_original>
// kernel: tpu_custom_call.1
$region0: #{tpu_custom_call.1}
  #allocation0 [shape = 'u32[]', space=smem, size = 0x4, offset = 0x4, fixed_abs, tag = 'smem constant byte address 0x4 - core index']
  #allocation1 [shape = 'u32[144,128]{1,0:T(1,128)}', space=vmem, size = 0x12000, scoped, tag = 'internal scratch']
  %s0 = inlined_call_operand.hbm [shape: f32[2,128,1024], index: 0, kind: input, shape index: {}]
  %s1 = inlined_call_operand.hbm [shape: f32[128,1024], index: 1, kind: input, shape index: {}]
  %s2 = inlined_call_operand.hbm [shape: f32[128,1024], index: 2, kind: input, shape index: {}]
  %s3 = inlined_call_operand.hbm [shape: f32[128,1024], index: 3, kind: input, shape index: {}]
  %s4 = inlined_call_operand.hbm [shape: f32[128,1024], index: 4, kind: output, shape index: {0}]
  %s5 = inlined_call_operand.hbm [shape: f32[128,1024], index: 5, kind: output, shape index: {1}]
  %6 = xla_tuple %s4, %s5
  %s7 = sld [smem:[#allocation0]]
  $region50: #{tpu_custom_call.1} parent=0
    _
  %s9 = ssub.s32 1, %s7
  %s10 = scalar_select 0, %s9, %s7
  $region1: #{tpu_custom_call.1} parent=0
    #allocation2 [shape = 'u8[1048576]{0}', space=vmem, size = 0x100000, scoped, tag = 'input window, operand 0, single buffered']
    #allocation3 [shape = 's32[1]{0}', space=sflag, size = 0x4, scoped, tag = 'scoped memory for tpu_custom_call.1']
    #allocation4 [shape = 's32[1]{0}', space=sflag, size = 0x4, scoped, tag = 'scoped memory for tpu_custom_call.1']
    #allocation5 [shape = 'u8[524288]{0}', space=vmem, size = 0x80000, scoped, tag = 'input window, operand 1, single buffered']
    #allocation6 [shape = 's32[1]{0}', space=sflag, size = 0x4, scoped, tag = 'scoped memory for tpu_custom_call.1']
    #allocation7 [shape = 'u8[524288]{0}', space=vmem, size = 0x80000, scoped, tag = 'input window, operand 2, single buffered']
    #allocation8 [shape = 'u8[524288]{0}', space=vmem, size = 0x80000, scoped, tag = 'input window, operand 3, single buffered']
    #allocation9 [shape = 's32[1]{0}', space=sflag, size = 0x4, scoped, tag = 'scoped memory for tpu_custom_call.1']
    #allocation10 [shape = 'u8[524288]{0}', space=vmem, size = 0x80000, scoped, tag = 'output window, operand 0, single buffered']
    #allocation11 [shape = 'u8[524288]{0}', space=vmem, size = 0x80000, scoped, tag = 'output window, operand 1, single buffered']
    #allocation12 [shape = 's32[1]{0}', space=sflag, size = 0x4, scoped, tag = 'scoped memory for tpu_custom_call.1']
    %11 = vsyncpa [#allocation3], 0
    %12 = vsyncpa [#allocation6], 0
    %13 = vsyncpa [#allocation9], 0
    %14 = vsyncpa [#allocation4], 0
    %15 = vsyncpa [#allocation12], 0
    // Predicated region
    $region2: #{tpu_custom_call.1} parent=1 // pred_check
      _
    $region3: #{tpu_custom_call.1} parent=1 // pred_check_branch
      %17 = sbr.rel (0) target = $region5
    $region4: #{tpu_custom_call.1} parent=1 // pred_region
      %s19 = ssub.s32 32768, 32768
      %20 = vsyncadd [#allocation3], %s19
      %s21 = sshll.u32 [#allocation2], 4
      %s22 = int_to_ptr.vmem [resolvable:$true] %s21
      %27 = dma.hbm_to_vmem [thread:$0]  %s0, 32768, %s22, [#allocation3], 1024, 1024, 64
    $region5: #{tpu_custom_call.1} parent=1 // pred_fallthru
      _
    // Predicated region
    $region6: #{tpu_custom_call.1} parent=1 // pred_check
      _
    $region7: #{tpu_custom_call.1} parent=1 // pred_check_branch
      %29 = sbr.rel (0) target = $region9
    $region8: #{tpu_custom_call.1} parent=1 // pred_region
      %s31 = ssub.s32 16384, 16384
      %32 = vsyncadd [#allocation6], %s31
      %s33 = sshll.u32 [#allocation5], 4
      %s34 = int_to_ptr.vmem [resolvable:$true] %s33
      %39 = dma.hbm_to_vmem [thread:$0]  %s1, 16384, %s34, [#allocation6], 1024, 1024, 64
    $region9: #{tpu_custom_call.1} parent=1 // pred_fallthru
      _
    // Predicated region
    $region10: #{tpu_custom_call.1} parent=1 // pred_check
      _
    $region11: #{tpu_custom_call.1} parent=1 // pred_check_branch
      %41 = sbr.rel (0) target = $region13
    $region12: #{tpu_custom_call.1} parent=1 // pred_region
      %s43 = ssub.s32 16384, 16384
      %44 = vsyncadd [#allocation6], %s43
      %s45 = sshll.u32 [#allocation7], 4
      %s46 = int_to_ptr.vmem [resolvable:$true] %s45
      %51 = dma.hbm_to_vmem [thread:$0]  %s2, 16384, %s46, [#allocation6], 1024, 1024, 64
    $region13: #{tpu_custom_call.1} parent=1 // pred_fallthru
      _
    // Predicated region
    $region14: #{tpu_custom_call.1} parent=1 // pred_check
      _
    $region15: #{tpu_custom_call.1} parent=1 // pred_check_branch
      %53 = sbr.rel (0) target = $region17
    $region16: #{tpu_custom_call.1} parent=1 // pred_region
      %s55 = ssub.s32 16384, 16384
      %56 = vsyncadd [#allocation9], %s55
      %s57 = sshll.u32 [#allocation8], 4
      %s58 = int_to_ptr.vmem [resolvable:$true] %s57
      %63 = dma.hbm_to_vmem [thread:$0]  %s3, 16384, %s58, [#allocation9], 1024, 1024, 64
    $region17: #{tpu_custom_call.1} parent=1 // pred_fallthru
      _
    // Predicated region
    $region18: #{tpu_custom_call.1} parent=1 // pred_check
      _
    $region19: #{tpu_custom_call.1} parent=1 // pred_check_branch
      %65 = sbr.rel (0) target = $region21
    $region20: #{tpu_custom_call.1} parent=1 // pred_region
      %66 = dma.done [#allocation3], 32768
    $region21: #{tpu_custom_call.1} parent=1 // pred_fallthru
      _
    // Predicated region
    $region22: #{tpu_custom_call.1} parent=1 // pred_check
      _
    $region23: #{tpu_custom_call.1} parent=1 // pred_check_branch
      %68 = sbr.rel (0) target = $region25
    $region24: #{tpu_custom_call.1} parent=1 // pred_region
      %69 = dma.done [#allocation6], 16384
    $region25: #{tpu_custom_call.1} parent=1 // pred_fallthru
      _
    // Predicated region
    $region26: #{tpu_custom_call.1} parent=1 // pred_check
      _
    $region27: #{tpu_custom_call.1} parent=1 // pred_check_branch
      %71 = sbr.rel (0) target = $region29
    $region28: #{tpu_custom_call.1} parent=1 // pred_region
      %72 = dma.done [#allocation6], 16384
    $region29: #{tpu_custom_call.1} parent=1 // pred_fallthru
      _
    // Predicated region
    $region30: #{tpu_custom_call.1} parent=1 // pred_check
      _
    $region31: #{tpu_custom_call.1} parent=1 // pred_check_branch
      %74 = sbr.rel (0) target = $region33
    $region32: #{tpu_custom_call.1} parent=1 // pred_region
      %75 = dma.done [#allocation9], 16384
    $region33: #{tpu_custom_call.1} parent=1 // pred_fallthru
      _
    %v76 = vld [vmem:[#allocation2] sm:$0xff]
    %v77 = vld [vmem:[#allocation2 + $0x8] sm:$0xff]
    %v78 = vld [vmem:[#allocation2 + $0x10] sm:$0xff]
    %v79 = vld [vmem:[#allocation2 + $0x18] sm:$0xff]
    %v80 = vld [vmem:[#allocation2 + $0x20] sm:$0xff]
    %v81 = vld [vmem:[#allocation2 + $0x28] sm:$0xff]
    %v82 = vld [vmem:[#allocation2 + $0x30] sm:$0xff]
    %v83 = vld [vmem:[#allocation2 + $0x38] sm:$0xff]
    %v84 = vld [vmem:[#allocation2 + $0x40] sm:$0xff]
    %v85 = vld [vmem:[#allocation2 + $0x48] sm:$0xff]
    %v86 = vld [vmem:[#allocation2 + $0x50] sm:$0xff]
    %v87 = vld [vmem:[#allocation2 + $0x58] sm:$0xff]
    %v88 = vld [vmem:[#allocation2 + $0x60] sm:$0xff]
    %v89 = vld [vmem:[#allocation2 + $0x68] sm:$0xff]
    %v90 = vld [vmem:[#allocation2 + $0x70] sm:$0xff]
    %v91 = vld [vmem:[#allocation2 + $0x78] sm:$0xff]
    %v92 = vld [vmem:[#allocation2 + $0x80] sm:$0xff]
    %v93 = vld [vmem:[#allocation2 + $0x88] sm:$0xff]
    %v94 = vld [vmem:[#allocation2 + $0x90] sm:$0xff]
    %v95 = vld [vmem:[#allocation2 + $0x98] sm:$0xff]
    %v96 = vld [vmem:[#allocation2 + $0xa0] sm:$0xff]
    %v97 = vld [vmem:[#allocation2 + $0xa8] sm:$0xff]
    %v98 = vld [vmem:[#allocation2 + $0xb0] sm:$0xff]
    %v99 = vld [vmem:[#allocation2 + $0xb8] sm:$0xff]
    %v100 = vld [vmem:[#allocation2 + $0xc0] sm:$0xff]
    %v101 = vld [vmem:[#allocation2 + $0xc8] sm:$0xff]
    %v102 = vld [vmem:[#allocation2 + $0xd0] sm:$0xff]
    %v103 = vld [vmem:[#allocation2 + $0xd8] sm:$0xff]
    %v104 = vld [vmem:[#allocation2 + $0xe0] sm:$0xff]
    %v105 = vld [vmem:[#allocation2 + $0xe8] sm:$0xff]
    %v106 = vld [vmem:[#allocation2 + $0xf0] sm:$0xff]
    %v107 = vld [vmem:[#allocation2 + $0xf8] sm:$0xff]
    %v108 = vld [vmem:[#allocation2 + $0x100] sm:$0xff]
    %v109 = vld [vmem:[#allocation2 + $0x108] sm:$0xff]
    %v110 = vld [vmem:[#allocation2 + $0x110] sm:$0xff]
    %v111 = vld [vmem:[#allocation2 + $0x118] sm:$0xff]
    %v112 = vld [vmem:[#allocation2 + $0x120] sm:$0xff]
    %v113 = vld [vmem:[#allocation2 + $0x128] sm:$0xff]
    %v114 = vld [vmem:[#allocation2 + $0x130] sm:$0xff]
    %v115 = vld [vmem:[#allocation2 + $0x138] sm:$0xff]
    %v116 = vld [vmem:[#allocation2 + $0x140] sm:$0xff]
    %v117 = vld [vmem:[#allocation2 + $0x148] sm:$0xff]
    %v118 = vld [vmem:[#allocation2 + $0x150] sm:$0xff]
    %v119 = vld [vmem:[#allocation2 + $0x158] sm:$0xff]
    %v120 = vld [vmem:[#allocation2 + $0x160] sm:$0xff]
    %v121 = vld [vmem:[#allocation2 + $0x168] sm:$0xff]
    %v122 = vld [vmem:[#allocation2 + $0x170] sm:$0xff]
    %v123 = vld [vmem:[#allocation2 + $0x178] sm:$0xff]
    %v124 = vld [vmem:[#allocation2 + $0x180] sm:$0xff]
    %v125 = vld [vmem:[#allocation2 + $0x188] sm:$0xff]
    %v126 = vld [vmem:[#allocation2 + $0x190] sm:$0xff]
    %v127 = vld [vmem:[#allocation2 + $0x198] sm:$0xff]
    %v128 = vld [vmem:[#allocation2 + $0x1a0] sm:$0xff]
    %v129 = vld [vmem:[#allocation2 + $0x1a8] sm:$0xff]
    %v130 = vld [vmem:[#allocation2 + $0x1b0] sm:$0xff]
    %v131 = vld [vmem:[#allocation2 + $0x1b8] sm:$0xff]
    %v132 = vld [vmem:[#allocation2 + $0x1c0] sm:$0xff]
    %v133 = vld [vmem:[#allocation2 + $0x1c8] sm:$0xff]
    %v134 = vld [vmem:[#allocation2 + $0x1d0] sm:$0xff]
    %v135 = vld [vmem:[#allocation2 + $0x1d8] sm:$0xff]
    %v136 = vld [vmem:[#allocation2 + $0x1e0] sm:$0xff]
    %v137 = vld [vmem:[#allocation2 + $0x1e8] sm:$0xff]
    %v138 = vld [vmem:[#allocation2 + $0x1f0] sm:$0xff]
    %v139 = vld [vmem:[#allocation2 + $0x1f8] sm:$0xff]
    %v140 = vld [vmem:[#allocation2 + $0x200] sm:$0xff]
    %v141 = vld [vmem:[#allocation2 + $0x208] sm:$0xff]
    %v142 = vld [vmem:[#allocation2 + $0x210] sm:$0xff]
    %v143 = vld [vmem:[#allocation2 + $0x218] sm:$0xff]
    %v144 = vld [vmem:[#allocation2 + $0x220] sm:$0xff]
    %v145 = vld [vmem:[#allocation2 + $0x228] sm:$0xff]
    %v146 = vld [vmem:[#allocation2 + $0x230] sm:$0xff]
    %v147 = vld [vmem:[#allocation2 + $0x238] sm:$0xff]
    %v148 = vld [vmem:[#allocation2 + $0x240] sm:$0xff]
    %v149 = vld [vmem:[#allocation2 + $0x248] sm:$0xff]
    %v150 = vld [vmem:[#allocation2 + $0x250] sm:$0xff]
    %v151 = vld [vmem:[#allocation2 + $0x258] sm:$0xff]
    %v152 = vld [vmem:[#allocation2 + $0x260] sm:$0xff]
    %v153 = vld [vmem:[#allocation2 + $0x268] sm:$0xff]
    %v154 = vld [vmem:[#allocation2 + $0x270] sm:$0xff]
    %v155 = vld [vmem:[#allocation2 + $0x278] sm:$0xff]
    %v156 = vld [vmem:[#allocation2 + $0x280] sm:$0xff]
    %v157 = vld [vmem:[#allocation2 + $0x288] sm:$0xff]
    %v158 = vld [vmem:[#allocation2 + $0x290] sm:$0xff]
    %v159 = vld [vmem:[#allocation2 + $0x298] sm:$0xff]
    %v160 = vld [vmem:[#allocation2 + $0x2a0] sm:$0xff]
    %v161 = vld [vmem:[#allocation2 + $0x2a8] sm:$0xff]
    %v162 = vld [vmem:[#allocation2 + $0x2b0] sm:$0xff]
    %v163 = vld [vmem:[#allocation2 + $0x2b8] sm:$0xff]
    %v164 = vld [vmem:[#allocation2 + $0x2c0] sm:$0xff]
    %v165 = vld [vmem:[#allocation2 + $0x2c8] sm:$0xff]
    %v166 = vld [vmem:[#allocation2 + $0x2d0] sm:$0xff]
    %v167 = vld [vmem:[#allocation2 + $0x2d8] sm:$0xff]
    %v168 = vld [vmem:[#allocation2 + $0x2e0] sm:$0xff]
    %v169 = vld [vmem:[#allocation2 + $0x2e8] sm:$0xff]
    %v170 = vld [vmem:[#allocation2 + $0x2f0] sm:$0xff]
    %v171 = vld [vmem:[#allocation2 + $0x2f8] sm:$0xff]
    %v172 = vld [vmem:[#allocation2 + $0x300] sm:$0xff]
    %v173 = vld [vmem:[#allocation2 + $0x308] sm:$0xff]
    %v174 = vld [vmem:[#allocation2 + $0x310] sm:$0xff]
    %v175 = vld [vmem:[#allocation2 + $0x318] sm:$0xff]
    %v176 = vld [vmem:[#allocation2 + $0x320] sm:$0xff]
    %v177 = vld [vmem:[#allocation2 + $0x328] sm:$0xff]
    %v178 = vld [vmem:[#allocation2 + $0x330] sm:$0xff]
    %v179 = vld [vmem:[#allocation2 + $0x338] sm:$0xff]
    %v180 = vld [vmem:[#allocation2 + $0x340] sm:$0xff]
    %v181 = vld [vmem:[#allocation2 + $0x348] sm:$0xff]
    %v182 = vld [vmem:[#allocation2 + $0x350] sm:$0xff]
    %v183 = vld [vmem:[#allocation2 + $0x358] sm:$0xff]
    %v184 = vld [vmem:[#allocation2 + $0x360] sm:$0xff]
    %v185 = vld [vmem:[#allocation2 + $0x368] sm:$0xff]
    %v186 = vld [vmem:[#allocation2 + $0x370] sm:$0xff]
    %v187 = vld [vmem:[#allocation2 + $0x378] sm:$0xff]
    %v188 = vld [vmem:[#allocation2 + $0x380] sm:$0xff]
    %v189 = vld [vmem:[#allocation2 + $0x388] sm:$0xff]
    %v190 = vld [vmem:[#allocation2 + $0x390] sm:$0xff]
    %v191 = vld [vmem:[#allocation2 + $0x398] sm:$0xff]
    %v192 = vld [vmem:[#allocation2 + $0x3a0] sm:$0xff]
    %v193 = vld [vmem:[#allocation2 + $0x3a8] sm:$0xff]
    %v194 = vld [vmem:[#allocation2 + $0x3b0] sm:$0xff]
    %v195 = vld [vmem:[#allocation2 + $0x3b8] sm:$0xff]
    %v196 = vld [vmem:[#allocation2 + $0x3c0] sm:$0xff]
    %v197 = vld [vmem:[#allocation2 + $0x3c8] sm:$0xff]
    %v198 = vld [vmem:[#allocation2 + $0x3d0] sm:$0xff]
    %v199 = vld [vmem:[#allocation2 + $0x3d8] sm:$0xff]
    %v200 = vld [vmem:[#allocation2 + $0x3e0] sm:$0xff]
    %v201 = vld [vmem:[#allocation2 + $0x3e8] sm:$0xff]
    %v202 = vld [vmem:[#allocation2 + $0x3f0] sm:$0xff]
    %v203 = vld [vmem:[#allocation2 + $0x3f8] sm:$0xff]
    %s204 = scalar_lea.vmem [#allocation2], 1024
    %v205 = vld [vmem:[%s204] sm:$0xff]
    %v206 = vld [vmem:[%s204 + $0x8] sm:$0xff]
    %v207 = vld [vmem:[%s204 + $0x10] sm:$0xff]
    %v208 = vld [vmem:[%s204 + $0x18] sm:$0xff]
    %v209 = vld [vmem:[%s204 + $0x20] sm:$0xff]
    %v210 = vld [vmem:[%s204 + $0x28] sm:$0xff]
    %v211 = vld [vmem:[%s204 + $0x30] sm:$0xff]
    %v212 = vld [vmem:[%s204 + $0x38] sm:$0xff]
    %v213 = vld [vmem:[%s204 + $0x40] sm:$0xff]
    %v214 = vld [vmem:[%s204 + $0x48] sm:$0xff]
    %v215 = vld [vmem:[%s204 + $0x50] sm:$0xff]
    %v216 = vld [vmem:[%s204 + $0x58] sm:$0xff]
    %v217 = vld [vmem:[%s204 + $0x60] sm:$0xff]
    %v218 = vld [vmem:[%s204 + $0x68] sm:$0xff]
    %v219 = vld [vmem:[%s204 + $0x70] sm:$0xff]
    %v220 = vld [vmem:[%s204 + $0x78] sm:$0xff]
    %v221 = vld [vmem:[%s204 + $0x80] sm:$0xff]
    %v222 = vld [vmem:[%s204 + $0x88] sm:$0xff]
    %v223 = vld [vmem:[%s204 + $0x90] sm:$0xff]
    %v224 = vld [vmem:[%s204 + $0x98] sm:$0xff]
    %v225 = vld [vmem:[%s204 + $0xa0] sm:$0xff]
    %v226 = vld [vmem:[%s204 + $0xa8] sm:$0xff]
    %v227 = vld [vmem:[%s204 + $0xb0] sm:$0xff]
    %v228 = vld [vmem:[%s204 + $0xb8] sm:$0xff]
    %v229 = vld [vmem:[%s204 + $0xc0] sm:$0xff]
    %v230 = vld [vmem:[%s204 + $0xc8] sm:$0xff]
    %v231 = vld [vmem:[%s204 + $0xd0] sm:$0xff]
    %v232 = vld [vmem:[%s204 + $0xd8] sm:$0xff]
    %v233 = vld [vmem:[%s204 + $0xe0] sm:$0xff]
    %v234 = vld [vmem:[%s204 + $0xe8] sm:$0xff]
    %v235 = vld [vmem:[%s204 + $0xf0] sm:$0xff]
    %v236 = vld [vmem:[%s204 + $0xf8] sm:$0xff]
    %v237 = vld [vmem:[%s204 + $0x100] sm:$0xff]
    %v238 = vld [vmem:[%s204 + $0x108] sm:$0xff]
    %v239 = vld [vmem:[%s204 + $0x110] sm:$0xff]
    %v240 = vld [vmem:[%s204 + $0x118] sm:$0xff]
    %v241 = vld [vmem:[%s204 + $0x120] sm:$0xff]
    %v242 = vld [vmem:[%s204 + $0x128] sm:$0xff]
    %v243 = vld [vmem:[%s204 + $0x130] sm:$0xff]
    %v244 = vld [vmem:[%s204 + $0x138] sm:$0xff]
    %v245 = vld [vmem:[%s204 + $0x140] sm:$0xff]
    %v246 = vld [vmem:[%s204 + $0x148] sm:$0xff]
    %v247 = vld [vmem:[%s204 + $0x150] sm:$0xff]
    %v248 = vld [vmem:[%s204 + $0x158] sm:$0xff]
    %v249 = vld [vmem:[%s204 + $0x160] sm:$0xff]
    %v250 = vld [vmem:[%s204 + $0x168] sm:$0xff]
    %v251 = vld [vmem:[%s204 + $0x170] sm:$0xff]
    %v252 = vld [vmem:[%s204 + $0x178] sm:$0xff]
    %v253 = vld [vmem:[%s204 + $0x180] sm:$0xff]
    %v254 = vld [vmem:[%s204 + $0x188] sm:$0xff]
    %v255 = vld [vmem:[%s204 + $0x190] sm:$0xff]
    %v256 = vld [vmem:[%s204 + $0x198] sm:$0xff]
    %v257 = vld [vmem:[%s204 + $0x1a0] sm:$0xff]
    %v258 = vld [vmem:[%s204 + $0x1a8] sm:$0xff]
    %v259 = vld [vmem:[%s204 + $0x1b0] sm:$0xff]
    %v260 = vld [vmem:[%s204 + $0x1b8] sm:$0xff]
    %v261 = vld [vmem:[%s204 + $0x1c0] sm:$0xff]
    %v262 = vld [vmem:[%s204 + $0x1c8] sm:$0xff]
    %v263 = vld [vmem:[%s204 + $0x1d0] sm:$0xff]
    %v264 = vld [vmem:[%s204 + $0x1d8] sm:$0xff]
    %v265 = vld [vmem:[%s204 + $0x1e0] sm:$0xff]
    %v266 = vld [vmem:[%s204 + $0x1e8] sm:$0xff]
    %v267 = vld [vmem:[%s204 + $0x1f0] sm:$0xff]
    %v268 = vld [vmem:[%s204 + $0x1f8] sm:$0xff]
    %v269 = vld [vmem:[%s204 + $0x200] sm:$0xff]
    %v270 = vld [vmem:[%s204 + $0x208] sm:$0xff]
    %v271 = vld [vmem:[%s204 + $0x210] sm:$0xff]
    %v272 = vld [vmem:[%s204 + $0x218] sm:$0xff]
    %v273 = vld [vmem:[%s204 + $0x220] sm:$0xff]
    %v274 = vld [vmem:[%s204 + $0x228] sm:$0xff]
    %v275 = vld [vmem:[%s204 + $0x230] sm:$0xff]
    %v276 = vld [vmem:[%s204 + $0x238] sm:$0xff]
    %v277 = vld [vmem:[%s204 + $0x240] sm:$0xff]
    %v278 = vld [vmem:[%s204 + $0x248] sm:$0xff]
    %v279 = vld [vmem:[%s204 + $0x250] sm:$0xff]
    %v280 = vld [vmem:[%s204 + $0x258] sm:$0xff]
    %v281 = vld [vmem:[%s204 + $0x260] sm:$0xff]
    %v282 = vld [vmem:[%s204 + $0x268] sm:$0xff]
    %v283 = vld [vmem:[%s204 + $0x270] sm:$0xff]
    %v284 = vld [vmem:[%s204 + $0x278] sm:$0xff]
    %v285 = vld [vmem:[%s204 + $0x280] sm:$0xff]
    %v286 = vld [vmem:[%s204 + $0x288] sm:$0xff]
    %v287 = vld [vmem:[%s204 + $0x290] sm:$0xff]
    %v288 = vld [vmem:[%s204 + $0x298] sm:$0xff]
    %v289 = vld [vmem:[%s204 + $0x2a0] sm:$0xff]
    %v290 = vld [vmem:[%s204 + $0x2a8] sm:$0xff]
    %v291 = vld [vmem:[%s204 + $0x2b0] sm:$0xff]
    %v292 = vld [vmem:[%s204 + $0x2b8] sm:$0xff]
    %v293 = vld [vmem:[%s204 + $0x2c0] sm:$0xff]
    %v294 = vld [vmem:[%s204 + $0x2c8] sm:$0xff]
    %v295 = vld [vmem:[%s204 + $0x2d0] sm:$0xff]
    %v296 = vld [vmem:[%s204 + $0x2d8] sm:$0xff]
    %v297 = vld [vmem:[%s204 + $0x2e0] sm:$0xff]
    %v298 = vld [vmem:[%s204 + $0x2e8] sm:$0xff]
    %v299 = vld [vmem:[%s204 + $0x2f0] sm:$0xff]
    %v300 = vld [vmem:[%s204 + $0x2f8] sm:$0xff]
    %v301 = vld [vmem:[%s204 + $0x300] sm:$0xff]
    %v302 = vld [vmem:[%s204 + $0x308] sm:$0xff]
    %v303 = vld [vmem:[%s204 + $0x310] sm:$0xff]
    %v304 = vld [vmem:[%s204 + $0x318] sm:$0xff]
    %v305 = vld [vmem:[%s204 + $0x320] sm:$0xff]
    %v306 = vld [vmem:[%s204 + $0x328] sm:$0xff]
    %v307 = vld [vmem:[%s204 + $0x330] sm:$0xff]
    %v308 = vld [vmem:[%s204 + $0x338] sm:$0xff]
    %v309 = vld [vmem:[%s204 + $0x340] sm:$0xff]
    %v310 = vld [vmem:[%s204 + $0x348] sm:$0xff]
    %v311 = vld [vmem:[%s204 + $0x350] sm:$0xff]
    %v312 = vld [vmem:[%s204 + $0x358] sm:$0xff]
    %v313 = vld [vmem:[%s204 + $0x360] sm:$0xff]
    %v314 = vld [vmem:[%s204 + $0x368] sm:$0xff]
    %v315 = vld [vmem:[%s204 + $0x370] sm:$0xff]
    %v316 = vld [vmem:[%s204 + $0x378] sm:$0xff]
    %v317 = vld [vmem:[%s204 + $0x380] sm:$0xff]
    %v318 = vld [vmem:[%s204 + $0x388] sm:$0xff]
    %v319 = vld [vmem:[%s204 + $0x390] sm:$0xff]
    %v320 = vld [vmem:[%s204 + $0x398] sm:$0xff]
    %v321 = vld [vmem:[%s204 + $0x3a0] sm:$0xff]
    %v322 = vld [vmem:[%s204 + $0x3a8] sm:$0xff]
    %v323 = vld [vmem:[%s204 + $0x3b0] sm:$0xff]
    %v324 = vld [vmem:[%s204 + $0x3b8] sm:$0xff]
    %v325 = vld [vmem:[%s204 + $0x3c0] sm:$0xff]
    %v326 = vld [vmem:[%s204 + $0x3c8] sm:$0xff]
    %v327 = vld [vmem:[%s204 + $0x3d0] sm:$0xff]
    %v328 = vld [vmem:[%s204 + $0x3d8] sm:$0xff]
    %v329 = vld [vmem:[%s204 + $0x3e0] sm:$0xff]
    %v330 = vld [vmem:[%s204 + $0x3e8] sm:$0xff]
    %v331 = vld [vmem:[%s204 + $0x3f0] sm:$0xff]
    %v332 = vld [vmem:[%s204 + $0x3f8] sm:$0xff]
    %v333 = vld [vmem:[#allocation5] sm:$0xff]
    %v334 = vld [vmem:[#allocation5 + $0x8] sm:$0xff]
    %v335 = vld [vmem:[#allocation5 + $0x10] sm:$0xff]
    %v336 = vld [vmem:[#allocation5 + $0x18] sm:$0xff]
    %v337 = vld [vmem:[#allocation5 + $0x20] sm:$0xff]
    %v338 = vld [vmem:[#allocation5 + $0x28] sm:$0xff]
    %v339 = vld [vmem:[#allocation5 + $0x30] sm:$0xff]
    %v340 = vld [vmem:[#allocation5 + $0x38] sm:$0xff]
    %v341 = vld [vmem:[#allocation5 + $0x40] sm:$0xff]
    %v342 = vld [vmem:[#allocation5 + $0x48] sm:$0xff]
    %v343 = vld [vmem:[#allocation5 + $0x50] sm:$0xff]
    %v344 = vld [vmem:[#allocation5 + $0x58] sm:$0xff]
    %v345 = vld [vmem:[#allocation5 + $0x60] sm:$0xff]
    %v346 = vld [vmem:[#allocation5 + $0x68] sm:$0xff]
    %v347 = vld [vmem:[#allocation5 + $0x70] sm:$0xff]
    %v348 = vld [vmem:[#allocation5 + $0x78] sm:$0xff]
    %v349 = vld [vmem:[#allocation5 + $0x80] sm:$0xff]
    %v350 = vld [vmem:[#allocation5 + $0x88] sm:$0xff]
    %v351 = vld [vmem:[#allocation5 + $0x90] sm:$0xff]
    %v352 = vld [vmem:[#allocation5 + $0x98] sm:$0xff]
    %v353 = vld [vmem:[#allocation5 + $0xa0] sm:$0xff]
    %v354 = vld [vmem:[#allocation5 + $0xa8] sm:$0xff]
    %v355 = vld [vmem:[#allocation5 + $0xb0] sm:$0xff]
    %v356 = vld [vmem:[#allocation5 + $0xb8] sm:$0xff]
    %v357 = vld [vmem:[#allocation5 + $0xc0] sm:$0xff]
    %v358 = vld [vmem:[#allocation5 + $0xc8] sm:$0xff]
    %v359 = vld [vmem:[#allocation5 + $0xd0] sm:$0xff]
    %v360 = vld [vmem:[#allocation5 + $0xd8] sm:$0xff]
    %v361 = vld [vmem:[#allocation5 + $0xe0] sm:$0xff]
    %v362 = vld [vmem:[#allocation5 + $0xe8] sm:$0xff]
    %v363 = vld [vmem:[#allocation5 + $0xf0] sm:$0xff]
    %v364 = vld [vmem:[#allocation5 + $0xf8] sm:$0xff]
    %v365 = vld [vmem:[#allocation5 + $0x100] sm:$0xff]
    %v366 = vld [vmem:[#allocation5 + $0x108] sm:$0xff]
    %v367 = vld [vmem:[#allocation5 + $0x110] sm:$0xff]
    %v368 = vld [vmem:[#allocation5 + $0x118] sm:$0xff]
    %v369 = vld [vmem:[#allocation5 + $0x120] sm:$0xff]
    %v370 = vld [vmem:[#allocation5 + $0x128] sm:$0xff]
    %v371 = vld [vmem:[#allocation5 + $0x130] sm:$0xff]
    %v372 = vld [vmem:[#allocation5 + $0x138] sm:$0xff]
    %v373 = vld [vmem:[#allocation5 + $0x140] sm:$0xff]
    %v374 = vld [vmem:[#allocation5 + $0x148] sm:$0xff]
    %v375 = vld [vmem:[#allocation5 + $0x150] sm:$0xff]
    %v376 = vld [vmem:[#allocation5 + $0x158] sm:$0xff]
    %v377 = vld [vmem:[#allocation5 + $0x160] sm:$0xff]
    %v378 = vld [vmem:[#allocation5 + $0x168] sm:$0xff]
    %v379 = vld [vmem:[#allocation5 + $0x170] sm:$0xff]
    %v380 = vld [vmem:[#allocation5 + $0x178] sm:$0xff]
    %v381 = vld [vmem:[#allocation5 + $0x180] sm:$0xff]
    %v382 = vld [vmem:[#allocation5 + $0x188] sm:$0xff]
    %v383 = vld [vmem:[#allocation5 + $0x190] sm:$0xff]
    %v384 = vld [vmem:[#allocation5 + $0x198] sm:$0xff]
    %v385 = vld [vmem:[#allocation5 + $0x1a0] sm:$0xff]
    %v386 = vld [vmem:[#allocation5 + $0x1a8] sm:$0xff]
    %v387 = vld [vmem:[#allocation5 + $0x1b0] sm:$0xff]
    %v388 = vld [vmem:[#allocation5 + $0x1b8] sm:$0xff]
    %v389 = vld [vmem:[#allocation5 + $0x1c0] sm:$0xff]
    %v390 = vld [vmem:[#allocation5 + $0x1c8] sm:$0xff]
    %v391 = vld [vmem:[#allocation5 + $0x1d0] sm:$0xff]
    %v392 = vld [vmem:[#allocation5 + $0x1d8] sm:$0xff]
    %v393 = vld [vmem:[#allocation5 + $0x1e0] sm:$0xff]
    %v394 = vld [vmem:[#allocation5 + $0x1e8] sm:$0xff]
    %v395 = vld [vmem:[#allocation5 + $0x1f0] sm:$0xff]
    %v396 = vld [vmem:[#allocation5 + $0x1f8] sm:$0xff]
    %v397 = vld [vmem:[#allocation5 + $0x200] sm:$0xff]
    %v398 = vld [vmem:[#allocation5 + $0x208] sm:$0xff]
    %v399 = vld [vmem:[#allocation5 + $0x210] sm:$0xff]
    %v400 = vld [vmem:[#allocation5 + $0x218] sm:$0xff]
    %v401 = vld [vmem:[#allocation5 + $0x220] sm:$0xff]
    %v402 = vld [vmem:[#allocation5 + $0x228] sm:$0xff]
    %v403 = vld [vmem:[#allocation5 + $0x230] sm:$0xff]
    %v404 = vld [vmem:[#allocation5 + $0x238] sm:$0xff]
    %v405 = vld [vmem:[#allocation5 + $0x240] sm:$0xff]
    %v406 = vld [vmem:[#allocation5 + $0x248] sm:$0xff]
    %v407 = vld [vmem:[#allocation5 + $0x250] sm:$0xff]
    %v408 = vld [vmem:[#allocation5 + $0x258] sm:$0xff]
    %v409 = vld [vmem:[#allocation5 + $0x260] sm:$0xff]
    %v410 = vld [vmem:[#allocation5 + $0x268] sm:$0xff]
    %v411 = vld [vmem:[#allocation5 + $0x270] sm:$0xff]
    %v412 = vld [vmem:[#allocation5 + $0x278] sm:$0xff]
    %v413 = vld [vmem:[#allocation5 + $0x280] sm:$0xff]
    %v414 = vld [vmem:[#allocation5 + $0x288] sm:$0xff]
    %v415 = vld [vmem:[#allocation5 + $0x290] sm:$0xff]
    %v416 = vld [vmem:[#allocation5 + $0x298] sm:$0xff]
    %v417 = vld [vmem:[#allocation5 + $0x2a0] sm:$0xff]
    %v418 = vld [vmem:[#allocation5 + $0x2a8] sm:$0xff]
    %v419 = vld [vmem:[#allocation5 + $0x2b0] sm:$0xff]
    %v420 = vld [vmem:[#allocation5 + $0x2b8] sm:$0xff]
    %v421 = vld [vmem:[#allocation5 + $0x2c0] sm:$0xff]
    %v422 = vld [vmem:[#allocation5 + $0x2c8] sm:$0xff]
    %v423 = vld [vmem:[#allocation5 + $0x2d0] sm:$0xff]
    %v424 = vld [vmem:[#allocation5 + $0x2d8] sm:$0xff]
    %v425 = vld [vmem:[#allocation5 + $0x2e0] sm:$0xff]
    %v426 = vld [vmem:[#allocation5 + $0x2e8] sm:$0xff]
    %v427 = vld [vmem:[#allocation5 + $0x2f0] sm:$0xff]
    %v428 = vld [vmem:[#allocation5 + $0x2f8] sm:$0xff]
    %v429 = vld [vmem:[#allocation5 + $0x300] sm:$0xff]
    %v430 = vld [vmem:[#allocation5 + $0x308] sm:$0xff]
    %v431 = vld [vmem:[#allocation5 + $0x310] sm:$0xff]
    %v432 = vld [vmem:[#allocation5 + $0x318] sm:$0xff]
    %v433 = vld [vmem:[#allocation5 + $0x320] sm:$0xff]
    %v434 = vld [vmem:[#allocation5 + $0x328] sm:$0xff]
    %v435 = vld [vmem:[#allocation5 + $0x330] sm:$0xff]
    %v436 = vld [vmem:[#allocation5 + $0x338] sm:$0xff]
    %v437 = vld [vmem:[#allocation5 + $0x340] sm:$0xff]
    %v438 = vld [vmem:[#allocation5 + $0x348] sm:$0xff]
    %v439 = vld [vmem:[#allocation5 + $0x350] sm:$0xff]
    %v440 = vld [vmem:[#allocation5 + $0x358] sm:$0xff]
    %v441 = vld [vmem:[#allocation5 + $0x360] sm:$0xff]
    %v442 = vld [vmem:[#allocation5 + $0x368] sm:$0xff]
    %v443 = vld [vmem:[#allocation5 + $0x370] sm:$0xff]
    %v444 = vld [vmem:[#allocation5 + $0x378] sm:$0xff]
    %v445 = vld [vmem:[#allocation5 + $0x380] sm:$0xff]
    %v446 = vld [vmem:[#allocation5 + $0x388] sm:$0xff]
    %v447 = vld [vmem:[#allocation5 + $0x390] sm:$0xff]
    %v448 = vld [vmem:[#allocation5 + $0x398] sm:$0xff]
    %v449 = vld [vmem:[#allocation5 + $0x3a0] sm:$0xff]
    %v450 = vld [vmem:[#allocation5 + $0x3a8] sm:$0xff]
    %v451 = vld [vmem:[#allocation5 + $0x3b0] sm:$0xff]
    %v452 = vld [vmem:[#allocation5 + $0x3b8] sm:$0xff]
    %v453 = vld [vmem:[#allocation5 + $0x3c0] sm:$0xff]
    %v454 = vld [vmem:[#allocation5 + $0x3c8] sm:$0xff]
    %v455 = vld [vmem:[#allocation5 + $0x3d0] sm:$0xff]
    %v456 = vld [vmem:[#allocation5 + $0x3d8] sm:$0xff]
    %v457 = vld [vmem:[#allocation5 + $0x3e0] sm:$0xff]
    %v458 = vld [vmem:[#allocation5 + $0x3e8] sm:$0xff]
    %v459 = vld [vmem:[#allocation5 + $0x3f0] sm:$0xff]
    %v460 = vld [vmem:[#allocation5 + $0x3f8] sm:$0xff]
    %v461 = vld [vmem:[#allocation7] sm:$0xff]
    %v462 = vld [vmem:[#allocation7 + $0x8] sm:$0xff]
    %v463 = vld [vmem:[#allocation7 + $0x10] sm:$0xff]
    %v464 = vld [vmem:[#allocation7 + $0x18] sm:$0xff]
    %v465 = vld [vmem:[#allocation7 + $0x20] sm:$0xff]
    %v466 = vld [vmem:[#allocation7 + $0x28] sm:$0xff]
    %v467 = vld [vmem:[#allocation7 + $0x30] sm:$0xff]
    %v468 = vld [vmem:[#allocation7 + $0x38] sm:$0xff]
    %v469 = vld [vmem:[#allocation7 + $0x40] sm:$0xff]
    %v470 = vld [vmem:[#allocation7 + $0x48] sm:$0xff]
    %v471 = vld [vmem:[#allocation7 + $0x50] sm:$0xff]
    %v472 = vld [vmem:[#allocation7 + $0x58] sm:$0xff]
    %v473 = vld [vmem:[#allocation7 + $0x60] sm:$0xff]
    %v474 = vld [vmem:[#allocation7 + $0x68] sm:$0xff]
    %v475 = vld [vmem:[#allocation7 + $0x70] sm:$0xff]
    %v476 = vld [vmem:[#allocation7 + $0x78] sm:$0xff]
    %v477 = vld [vmem:[#allocation7 + $0x80] sm:$0xff]
    %v478 = vld [vmem:[#allocation7 + $0x88] sm:$0xff]
    %v479 = vld [vmem:[#allocation7 + $0x90] sm:$0xff]
    %v480 = vld [vmem:[#allocation7 + $0x98] sm:$0xff]
    %v481 = vld [vmem:[#allocation7 + $0xa0] sm:$0xff]
    %v482 = vld [vmem:[#allocation7 + $0xa8] sm:$0xff]
    %v483 = vld [vmem:[#allocation7 + $0xb0] sm:$0xff]
    %v484 = vld [vmem:[#allocation7 + $0xb8] sm:$0xff]
    %v485 = vld [vmem:[#allocation7 + $0xc0] sm:$0xff]
    %v486 = vld [vmem:[#allocation7 + $0xc8] sm:$0xff]
    %v487 = vld [vmem:[#allocation7 + $0xd0] sm:$0xff]
    %v488 = vld [vmem:[#allocation7 + $0xd8] sm:$0xff]
    %v489 = vld [vmem:[#allocation7 + $0xe0] sm:$0xff]
    %v490 = vld [vmem:[#allocation7 + $0xe8] sm:$0xff]
    %v491 = vld [vmem:[#allocation7 + $0xf0] sm:$0xff]
    %v492 = vld [vmem:[#allocation7 + $0xf8] sm:$0xff]
    %v493 = vld [vmem:[#allocation7 + $0x100] sm:$0xff]
    %v494 = vld [vmem:[#allocation7 + $0x108] sm:$0xff]
    %v495 = vld [vmem:[#allocation7 + $0x110] sm:$0xff]
    %v496 = vld [vmem:[#allocation7 + $0x118] sm:$0xff]
    %v497 = vld [vmem:[#allocation7 + $0x120] sm:$0xff]
    %v498 = vld [vmem:[#allocation7 + $0x128] sm:$0xff]
    %v499 = vld [vmem:[#allocation7 + $0x130] sm:$0xff]
    %v500 = vld [vmem:[#allocation7 + $0x138] sm:$0xff]
    %v501 = vld [vmem:[#allocation7 + $0x140] sm:$0xff]
    %v502 = vld [vmem:[#allocation7 + $0x148] sm:$0xff]
    %v503 = vld [vmem:[#allocation7 + $0x150] sm:$0xff]
    %v504 = vld [vmem:[#allocation7 + $0x158] sm:$0xff]
    %v505 = vld [vmem:[#allocation7 + $0x160] sm:$0xff]
    %v506 = vld [vmem:[#allocation7 + $0x168] sm:$0xff]
    %v507 = vld [vmem:[#allocation7 + $0x170] sm:$0xff]
    %v508 = vld [vmem:[#allocation7 + $0x178] sm:$0xff]
    %v509 = vld [vmem:[#allocation7 + $0x180] sm:$0xff]
    %v510 = vld [vmem:[#allocation7 + $0x188] sm:$0xff]
    %v511 = vld [vmem:[#allocation7 + $0x190] sm:$0xff]
    %v512 = vld [vmem:[#allocation7 + $0x198] sm:$0xff]
    %v513 = vld [vmem:[#allocation7 + $0x1a0] sm:$0xff]
    %v514 = vld [vmem:[#allocation7 + $0x1a8] sm:$0xff]
    %v515 = vld [vmem:[#allocation7 + $0x1b0] sm:$0xff]
    %v516 = vld [vmem:[#allocation7 + $0x1b8] sm:$0xff]
    %v517 = vld [vmem:[#allocation7 + $0x1c0] sm:$0xff]
    %v518 = vld [vmem:[#allocation7 + $0x1c8] sm:$0xff]
    %v519 = vld [vmem:[#allocation7 + $0x1d0] sm:$0xff]
    %v520 = vld [vmem:[#allocation7 + $0x1d8] sm:$0xff]
    %v521 = vld [vmem:[#allocation7 + $0x1e0] sm:$0xff]
    %v522 = vld [vmem:[#allocation7 + $0x1e8] sm:$0xff]
    %v523 = vld [vmem:[#allocation7 + $0x1f0] sm:$0xff]
    %v524 = vld [vmem:[#allocation7 + $0x1f8] sm:$0xff]
    %v525 = vld [vmem:[#allocation7 + $0x200] sm:$0xff]
    %v526 = vld [vmem:[#allocation7 + $0x208] sm:$0xff]
    %v527 = vld [vmem:[#allocation7 + $0x210] sm:$0xff]
    %v528 = vld [vmem:[#allocation7 + $0x218] sm:$0xff]
    %v529 = vld [vmem:[#allocation7 + $0x220] sm:$0xff]
    %v530 = vld [vmem:[#allocation7 + $0x228] sm:$0xff]
    %v531 = vld [vmem:[#allocation7 + $0x230] sm:$0xff]
    %v532 = vld [vmem:[#allocation7 + $0x238] sm:$0xff]
    %v533 = vld [vmem:[#allocation7 + $0x240] sm:$0xff]
    %v534 = vld [vmem:[#allocation7 + $0x248] sm:$0xff]
    %v535 = vld [vmem:[#allocation7 + $0x250] sm:$0xff]
    %v536 = vld [vmem:[#allocation7 + $0x258] sm:$0xff]
    %v537 = vld [vmem:[#allocation7 + $0x260] sm:$0xff]
    %v538 = vld [vmem:[#allocation7 + $0x268] sm:$0xff]
    %v539 = vld [vmem:[#allocation7 + $0x270] sm:$0xff]
    %v540 = vld [vmem:[#allocation7 + $0x278] sm:$0xff]
    %v541 = vld [vmem:[#allocation7 + $0x280] sm:$0xff]
    %v542 = vld [vmem:[#allocation7 + $0x288] sm:$0xff]
    %v543 = vld [vmem:[#allocation7 + $0x290] sm:$0xff]
    %v544 = vld [vmem:[#allocation7 + $0x298] sm:$0xff]
    %v545 = vld [vmem:[#allocation7 + $0x2a0] sm:$0xff]
    %v546 = vld [vmem:[#allocation7 + $0x2a8] sm:$0xff]
    %v547 = vld [vmem:[#allocation7 + $0x2b0] sm:$0xff]
    %v548 = vld [vmem:[#allocation7 + $0x2b8] sm:$0xff]
    %v549 = vld [vmem:[#allocation7 + $0x2c0] sm:$0xff]
    %v550 = vld [vmem:[#allocation7 + $0x2c8] sm:$0xff]
    %v551 = vld [vmem:[#allocation7 + $0x2d0] sm:$0xff]
    %v552 = vld [vmem:[#allocation7 + $0x2d8] sm:$0xff]
    %v553 = vld [vmem:[#allocation7 + $0x2e0] sm:$0xff]
    %v554 = vld [vmem:[#allocation7 + $0x2e8] sm:$0xff]
    %v555 = vld [vmem:[#allocation7 + $0x2f0] sm:$0xff]
    %v556 = vld [vmem:[#allocation7 + $0x2f8] sm:$0xff]
    %v557 = vld [vmem:[#allocation7 + $0x300] sm:$0xff]
    %v558 = vld [vmem:[#allocation7 + $0x308] sm:$0xff]
    %v559 = vld [vmem:[#allocation7 + $0x310] sm:$0xff]
    %v560 = vld [vmem:[#allocation7 + $0x318] sm:$0xff]
    %v561 = vld [vmem:[#allocation7 + $0x320] sm:$0xff]
    %v562 = vld [vmem:[#allocation7 + $0x328] sm:$0xff]
    %v563 = vld [vmem:[#allocation7 + $0x330] sm:$0xff]
    %v564 = vld [vmem:[#allocation7 + $0x338] sm:$0xff]
    %v565 = vld [vmem:[#allocation7 + $0x340] sm:$0xff]
    %v566 = vld [vmem:[#allocation7 + $0x348] sm:$0xff]
    %v567 = vld [vmem:[#allocation7 + $0x350] sm:$0xff]
    %v568 = vld [vmem:[#allocation7 + $0x358] sm:$0xff]
    %v569 = vld [vmem:[#allocation7 + $0x360] sm:$0xff]
    %v570 = vld [vmem:[#allocation7 + $0x368] sm:$0xff]
    %v571 = vld [vmem:[#allocation7 + $0x370] sm:$0xff]
    %v572 = vld [vmem:[#allocation7 + $0x378] sm:$0xff]
    %v573 = vld [vmem:[#allocation7 + $0x380] sm:$0xff]
    %v574 = vld [vmem:[#allocation7 + $0x388] sm:$0xff]
    %v575 = vld [vmem:[#allocation7 + $0x390] sm:$0xff]
    %v576 = vld [vmem:[#allocation7 + $0x398] sm:$0xff]
    %v577 = vld [vmem:[#allocation7 + $0x3a0] sm:$0xff]
    %v578 = vld [vmem:[#allocation7 + $0x3a8] sm:$0xff]
    %v579 = vld [vmem:[#allocation7 + $0x3b0] sm:$0xff]
    %v580 = vld [vmem:[#allocation7 + $0x3b8] sm:$0xff]
    %v581 = vld [vmem:[#allocation7 + $0x3c0] sm:$0xff]
    %v582 = vld [vmem:[#allocation7 + $0x3c8] sm:$0xff]
    %v583 = vld [vmem:[#allocation7 + $0x3d0] sm:$0xff]
    %v584 = vld [vmem:[#allocation7 + $0x3d8] sm:$0xff]
    %v585 = vld [vmem:[#allocation7 + $0x3e0] sm:$0xff]
    %v586 = vld [vmem:[#allocation7 + $0x3e8] sm:$0xff]
    %v587 = vld [vmem:[#allocation7 + $0x3f0] sm:$0xff]
    %v588 = vld [vmem:[#allocation7 + $0x3f8] sm:$0xff]
    %v589 = vld [vmem:[#allocation8] sm:$0xff]
    %v590 = vld [vmem:[#allocation8 + $0x8] sm:$0xff]
    %v591 = vld [vmem:[#allocation8 + $0x10] sm:$0xff]
    %v592 = vld [vmem:[#allocation8 + $0x18] sm:$0xff]
    %v593 = vld [vmem:[#allocation8 + $0x20] sm:$0xff]
    %v594 = vld [vmem:[#allocation8 + $0x28] sm:$0xff]
    %v595 = vld [vmem:[#allocation8 + $0x30] sm:$0xff]
    %v596 = vld [vmem:[#allocation8 + $0x38] sm:$0xff]
    %v597 = vld [vmem:[#allocation8 + $0x40] sm:$0xff]
    %v598 = vld [vmem:[#allocation8 + $0x48] sm:$0xff]
    %v599 = vld [vmem:[#allocation8 + $0x50] sm:$0xff]
    %v600 = vld [vmem:[#allocation8 + $0x58] sm:$0xff]
    %v601 = vld [vmem:[#allocation8 + $0x60] sm:$0xff]
    %v602 = vld [vmem:[#allocation8 + $0x68] sm:$0xff]
    %v603 = vld [vmem:[#allocation8 + $0x70] sm:$0xff]
    %v604 = vld [vmem:[#allocation8 + $0x78] sm:$0xff]
    %v605 = vld [vmem:[#allocation8 + $0x80] sm:$0xff]
    %v606 = vld [vmem:[#allocation8 + $0x88] sm:$0xff]
    %v607 = vld [vmem:[#allocation8 + $0x90] sm:$0xff]
    %v608 = vld [vmem:[#allocation8 + $0x98] sm:$0xff]
    %v609 = vld [vmem:[#allocation8 + $0xa0] sm:$0xff]
    %v610 = vld [vmem:[#allocation8 + $0xa8] sm:$0xff]
    %v611 = vld [vmem:[#allocation8 + $0xb0] sm:$0xff]
    %v612 = vld [vmem:[#allocation8 + $0xb8] sm:$0xff]
    %v613 = vld [vmem:[#allocation8 + $0xc0] sm:$0xff]
    %v614 = vld [vmem:[#allocation8 + $0xc8] sm:$0xff]
    %v615 = vld [vmem:[#allocation8 + $0xd0] sm:$0xff]
    %v616 = vld [vmem:[#allocation8 + $0xd8] sm:$0xff]
    %v617 = vld [vmem:[#allocation8 + $0xe0] sm:$0xff]
    %v618 = vld [vmem:[#allocation8 + $0xe8] sm:$0xff]
    %v619 = vld [vmem:[#allocation8 + $0xf0] sm:$0xff]
    %v620 = vld [vmem:[#allocation8 + $0xf8] sm:$0xff]
    %v621 = vld [vmem:[#allocation8 + $0x100] sm:$0xff]
    %v622 = vld [vmem:[#allocation8 + $0x108] sm:$0xff]
    %v623 = vld [vmem:[#allocation8 + $0x110] sm:$0xff]
    %v624 = vld [vmem:[#allocation8 + $0x118] sm:$0xff]
    %v625 = vld [vmem:[#allocation8 + $0x120] sm:$0xff]
    %v626 = vld [vmem:[#allocation8 + $0x128] sm:$0xff]
    %v627 = vld [vmem:[#allocation8 + $0x130] sm:$0xff]
    %v628 = vld [vmem:[#allocation8 + $0x138] sm:$0xff]
    %v629 = vld [vmem:[#allocation8 + $0x140] sm:$0xff]
    %v630 = vld [vmem:[#allocation8 + $0x148] sm:$0xff]
    %v631 = vld [vmem:[#allocation8 + $0x150] sm:$0xff]
    %v632 = vld [vmem:[#allocation8 + $0x158] sm:$0xff]
    %v633 = vld [vmem:[#allocation8 + $0x160] sm:$0xff]
    %v634 = vld [vmem:[#allocation8 + $0x168] sm:$0xff]
    %v635 = vld [vmem:[#allocation8 + $0x170] sm:$0xff]
    %v636 = vld [vmem:[#allocation8 + $0x178] sm:$0xff]
    %v637 = vld [vmem:[#allocation8 + $0x180] sm:$0xff]
    %v638 = vld [vmem:[#allocation8 + $0x188] sm:$0xff]
    %v639 = vld [vmem:[#allocation8 + $0x190] sm:$0xff]
    %v640 = vld [vmem:[#allocation8 + $0x198] sm:$0xff]
    %v641 = vld [vmem:[#allocation8 + $0x1a0] sm:$0xff]
    %v642 = vld [vmem:[#allocation8 + $0x1a8] sm:$0xff]
    %v643 = vld [vmem:[#allocation8 + $0x1b0] sm:$0xff]
    %v644 = vld [vmem:[#allocation8 + $0x1b8] sm:$0xff]
    %v645 = vld [vmem:[#allocation8 + $0x1c0] sm:$0xff]
    %v646 = vld [vmem:[#allocation8 + $0x1c8] sm:$0xff]
    %v647 = vld [vmem:[#allocation8 + $0x1d0] sm:$0xff]
    %v648 = vld [vmem:[#allocation8 + $0x1d8] sm:$0xff]
    %v649 = vld [vmem:[#allocation8 + $0x1e0] sm:$0xff]
    %v650 = vld [vmem:[#allocation8 + $0x1e8] sm:$0xff]
    %v651 = vld [vmem:[#allocation8 + $0x1f0] sm:$0xff]
    %v652 = vld [vmem:[#allocation8 + $0x1f8] sm:$0xff]
    %v653 = vld [vmem:[#allocation8 + $0x200] sm:$0xff]
    %v654 = vld [vmem:[#allocation8 + $0x208] sm:$0xff]
    %v655 = vld [vmem:[#allocation8 + $0x210] sm:$0xff]
    %v656 = vld [vmem:[#allocation8 + $0x218] sm:$0xff]
    %v657 = vld [vmem:[#allocation8 + $0x220] sm:$0xff]
    %v658 = vld [vmem:[#allocation8 + $0x228] sm:$0xff]
    %v659 = vld [vmem:[#allocation8 + $0x230] sm:$0xff]
    %v660 = vld [vmem:[#allocation8 + $0x238] sm:$0xff]
    %v661 = vld [vmem:[#allocation8 + $0x240] sm:$0xff]
    %v662 = vld [vmem:[#allocation8 + $0x248] sm:$0xff]
    %v663 = vld [vmem:[#allocation8 + $0x250] sm:$0xff]
    %v664 = vld [vmem:[#allocation8 + $0x258] sm:$0xff]
    %v665 = vld [vmem:[#allocation8 + $0x260] sm:$0xff]
    %v666 = vld [vmem:[#allocation8 + $0x268] sm:$0xff]
    %v667 = vld [vmem:[#allocation8 + $0x270] sm:$0xff]
    %v668 = vld [vmem:[#allocation8 + $0x278] sm:$0xff]
    %v669 = vld [vmem:[#allocation8 + $0x280] sm:$0xff]
    %v670 = vld [vmem:[#allocation8 + $0x288] sm:$0xff]
    %v671 = vld [vmem:[#allocation8 + $0x290] sm:$0xff]
    %v672 = vld [vmem:[#allocation8 + $0x298] sm:$0xff]
    %v673 = vld [vmem:[#allocation8 + $0x2a0] sm:$0xff]
    %v674 = vld [vmem:[#allocation8 + $0x2a8] sm:$0xff]
    %v675 = vld [vmem:[#allocation8 + $0x2b0] sm:$0xff]
    %v676 = vld [vmem:[#allocation8 + $0x2b8] sm:$0xff]
    %v677 = vld [vmem:[#allocation8 + $0x2c0] sm:$0xff]
    %v678 = vld [vmem:[#allocation8 + $0x2c8] sm:$0xff]
    %v679 = vld [vmem:[#allocation8 + $0x2d0] sm:$0xff]
    %v680 = vld [vmem:[#allocation8 + $0x2d8] sm:$0xff]
    %v681 = vld [vmem:[#allocation8 + $0x2e0] sm:$0xff]
    %v682 = vld [vmem:[#allocation8 + $0x2e8] sm:$0xff]
    %v683 = vld [vmem:[#allocation8 + $0x2f0] sm:$0xff]
    %v684 = vld [vmem:[#allocation8 + $0x2f8] sm:$0xff]
    %v685 = vld [vmem:[#allocation8 + $0x300] sm:$0xff]
    %v686 = vld [vmem:[#allocation8 + $0x308] sm:$0xff]
    %v687 = vld [vmem:[#allocation8 + $0x310] sm:$0xff]
    %v688 = vld [vmem:[#allocation8 + $0x318] sm:$0xff]
    %v689 = vld [vmem:[#allocation8 + $0x320] sm:$0xff]
    %v690 = vld [vmem:[#allocation8 + $0x328] sm:$0xff]
    %v691 = vld [vmem:[#allocation8 + $0x330] sm:$0xff]
    %v692 = vld [vmem:[#allocation8 + $0x338] sm:$0xff]
    %v693 = vld [vmem:[#allocation8 + $0x340] sm:$0xff]
    %v694 = vld [vmem:[#allocation8 + $0x348] sm:$0xff]
    %v695 = vld [vmem:[#allocation8 + $0x350] sm:$0xff]
    %v696 = vld [vmem:[#allocation8 + $0x358] sm:$0xff]
    %v697 = vld [vmem:[#allocation8 + $0x360] sm:$0xff]
    %v698 = vld [vmem:[#allocation8 + $0x368] sm:$0xff]
    %v699 = vld [vmem:[#allocation8 + $0x370] sm:$0xff]
    %v700 = vld [vmem:[#allocation8 + $0x378] sm:$0xff]
    %v701 = vld [vmem:[#allocation8 + $0x380] sm:$0xff]
    %v702 = vld [vmem:[#allocation8 + $0x388] sm:$0xff]
    %v703 = vld [vmem:[#allocation8 + $0x390] sm:$0xff]
    %v704 = vld [vmem:[#allocation8 + $0x398] sm:$0xff]
    %v705 = vld [vmem:[#allocation8 + $0x3a0] sm:$0xff]
    %v706 = vld [vmem:[#allocation8 + $0x3a8] sm:$0xff]
    %v707 = vld [vmem:[#allocation8 + $0x3b0] sm:$0xff]
    %v708 = vld [vmem:[#allocation8 + $0x3b8] sm:$0xff]
    %v709 = vld [vmem:[#allocation8 + $0x3c0] sm:$0xff]
    %v710 = vld [vmem:[#allocation8 + $0x3c8] sm:$0xff]
    %v711 = vld [vmem:[#allocation8 + $0x3d0] sm:$0xff]
    %v712 = vld [vmem:[#allocation8 + $0x3d8] sm:$0xff]
    %v713 = vld [vmem:[#allocation8 + $0x3e0] sm:$0xff]
    %v714 = vld [vmem:[#allocation8 + $0x3e8] sm:$0xff]
    %v715 = vld [vmem:[#allocation8 + $0x3f0] sm:$0xff]
    %v716 = vld [vmem:[#allocation8 + $0x3f8] sm:$0xff]
    %v717 = vrcp.pop %v76
    %v718 = vrcp.pop %v77
    %v719 = vrcp.pop %v78
    %v720 = vrcp.pop %v79
    %v721 = vrcp.pop %v80
    %v722 = vrcp.pop %v81
    %v723 = vrcp.pop %v82
    %v724 = vrcp.pop %v83
    %v725 = vrcp.pop %v84
    %v726 = vrcp.pop %v85
    %v727 = vrcp.pop %v86
    %v728 = vrcp.pop %v87
    %v729 = vrcp.pop %v88
    %v730 = vrcp.pop %v89
    %v731 = vrcp.pop %v90
    %v732 = vrcp.pop %v91
    %v733 = vrcp.pop %v92
    %v734 = vrcp.pop %v93
    %v735 = vrcp.pop %v94
    %v736 = vrcp.pop %v95
    %v737 = vrcp.pop %v96
    %v738 = vrcp.pop %v97
    %v739 = vrcp.pop %v98
    %v740 = vrcp.pop %v99
    %v741 = vrcp.pop %v100
    %v742 = vrcp.pop %v101
    %v743 = vrcp.pop %v102
    %v744 = vrcp.pop %v103
    %v745 = vrcp.pop %v104
    %v746 = vrcp.pop %v105
    %v747 = vrcp.pop %v106
    %v748 = vrcp.pop %v107
    %v749 = vrcp.pop %v108
    %v750 = vrcp.pop %v109
    %v751 = vrcp.pop %v110
    %v752 = vrcp.pop %v111
    %v753 = vrcp.pop %v112
    %v754 = vrcp.pop %v113
    %v755 = vrcp.pop %v114
    %v756 = vrcp.pop %v115
    %v757 = vrcp.pop %v116
    %v758 = vrcp.pop %v117
    %v759 = vrcp.pop %v118
    %v760 = vrcp.pop %v119
    %v761 = vrcp.pop %v120
    %v762 = vrcp.pop %v121
    %v763 = vrcp.pop %v122
    %v764 = vrcp.pop %v123
    %v765 = vrcp.pop %v124
    %v766 = vrcp.pop %v125
    %v767 = vrcp.pop %v126
    %v768 = vrcp.pop %v127
    %v769 = vrcp.pop %v128
    %v770 = vrcp.pop %v129
    %v771 = vrcp.pop %v130
    %v772 = vrcp.pop %v131
    %v773 = vrcp.pop %v132
    %v774 = vrcp.pop %v133
    %v775 = vrcp.pop %v134
    %v776 = vrcp.pop %v135
    %v777 = vrcp.pop %v136
    %v778 = vrcp.pop %v137
    %v779 = vrcp.pop %v138
    %v780 = vrcp.pop %v139
    %v781 = vrcp.pop %v140
    %v782 = vrcp.pop %v141
    %v783 = vrcp.pop %v142
    %v784 = vrcp.pop %v143
    %v785 = vrcp.pop %v144
    %v786 = vrcp.pop %v145
    %v787 = vrcp.pop %v146
    %v788 = vrcp.pop %v147
    %v789 = vrcp.pop %v148
    %v790 = vrcp.pop %v149
    %v791 = vrcp.pop %v150
    %v792 = vrcp.pop %v151
    %v793 = vrcp.pop %v152
    %v794 = vrcp.pop %v153
    %v795 = vrcp.pop %v154
    %v796 = vrcp.pop %v155
    %v797 = vrcp.pop %v156
    %v798 = vrcp.pop %v157
    %v799 = vrcp.pop %v158
    %v800 = vrcp.pop %v159
    %v801 = vrcp.pop %v160
    %v802 = vrcp.pop %v161
    %v803 = vrcp.pop %v162
    %v804 = vrcp.pop %v163
    %v805 = vrcp.pop %v164
    %v806 = vrcp.pop %v165
    %v807 = vrcp.pop %v166
    %v808 = vrcp.pop %v167
    %v809 = vrcp.pop %v168
    %v810 = vrcp.pop %v169
    %v811 = vrcp.pop %v170
    %v812 = vrcp.pop %v171
    %v813 = vrcp.pop %v172
    %v814 = vrcp.pop %v173
    %v815 = vrcp.pop %v174
    %v816 = vrcp.pop %v175
    %v817 = vrcp.pop %v176
    %v818 = vrcp.pop %v177
    %v819 = vrcp.pop %v178
    %v820 = vrcp.pop %v179
    %v821 = vrcp.pop %v180
    %v822 = vrcp.pop %v181
    %v823 = vrcp.pop %v182
    %v824 = vrcp.pop %v183
    %v825 = vrcp.pop %v184
    %v826 = vrcp.pop %v185
    %v827 = vrcp.pop %v186
    %v828 = vrcp.pop %v187
    %v829 = vrcp.pop %v188
    %v830 = vrcp.pop %v189
    %v831 = vrcp.pop %v190
    %v832 = vrcp.pop %v191
    %v833 = vrcp.pop %v192
    %v834 = vrcp.pop %v193
    %v835 = vrcp.pop %v194
    %v836 = vrcp.pop %v195
    %v837 = vrcp.pop %v196
    %v838 = vrcp.pop %v197
    %v839 = vrcp.pop %v198
    %v840 = vrcp.pop %v199
    %v841 = vrcp.pop %v200
    %v842 = vrcp.pop %v201
    %v843 = vrcp.pop %v202
    %v844 = vrcp.pop %v203
    %v845 = vmul.f32 %v76, %v717
    %v846 = vmul.f32 %v77, %v718
    %v847 = vmul.f32 %v78, %v719
    %v848 = vmul.f32 %v79, %v720
    %v849 = vmul.f32 %v80, %v721
    %v850 = vmul.f32 %v81, %v722
    %v851 = vmul.f32 %v82, %v723
    %v852 = vmul.f32 %v83, %v724
    %v853 = vmul.f32 %v84, %v725
    %v854 = vmul.f32 %v85, %v726
    %v855 = vmul.f32 %v86, %v727
    %v856 = vmul.f32 %v87, %v728
    %v857 = vmul.f32 %v88, %v729
    %v858 = vmul.f32 %v89, %v730
    %v859 = vmul.f32 %v90, %v731
    %v860 = vmul.f32 %v91, %v732
    %v861 = vmul.f32 %v92, %v733
    %v862 = vmul.f32 %v93, %v734
    %v863 = vmul.f32 %v94, %v735
    %v864 = vmul.f32 %v95, %v736
    %v865 = vmul.f32 %v96, %v737
    %v866 = vmul.f32 %v97, %v738
    %v867 = vmul.f32 %v98, %v739
    %v868 = vmul.f32 %v99, %v740
    %v869 = vmul.f32 %v100, %v741
    %v870 = vmul.f32 %v101, %v742
    %v871 = vmul.f32 %v102, %v743
    %v872 = vmul.f32 %v103, %v744
    %v873 = vmul.f32 %v104, %v745
    %v874 = vmul.f32 %v105, %v746
    %v875 = vmul.f32 %v106, %v747
    %v876 = vmul.f32 %v107, %v748
    %v877 = vmul.f32 %v108, %v749
    %v878 = vmul.f32 %v109, %v750
    %v879 = vmul.f32 %v110, %v751
    %v880 = vmul.f32 %v111, %v752
    %v881 = vmul.f32 %v112, %v753
    %v882 = vmul.f32 %v113, %v754
    %v883 = vmul.f32 %v114, %v755
    %v884 = vmul.f32 %v115, %v756
    %v885 = vmul.f32 %v116, %v757
    %v886 = vmul.f32 %v117, %v758
    %v887 = vmul.f32 %v118, %v759
    %v888 = vmul.f32 %v119, %v760
    %v889 = vmul.f32 %v120, %v761
    %v890 = vmul.f32 %v121, %v762
    %v891 = vmul.f32 %v122, %v763
    %v892 = vmul.f32 %v123, %v764
    %v893 = vmul.f32 %v124, %v765
    %v894 = vmul.f32 %v125, %v766
    %v895 = vmul.f32 %v126, %v767
    %v896 = vmul.f32 %v127, %v768
    %v897 = vmul.f32 %v128, %v769
    %v898 = vmul.f32 %v129, %v770
    %v899 = vmul.f32 %v130, %v771
    %v900 = vmul.f32 %v131, %v772
    %v901 = vmul.f32 %v132, %v773
    %v902 = vmul.f32 %v133, %v774
    %v903 = vmul.f32 %v134, %v775
    %v904 = vmul.f32 %v135, %v776
    %v905 = vmul.f32 %v136, %v777
    %v906 = vmul.f32 %v137, %v778
    %v907 = vmul.f32 %v138, %v779
    %v908 = vmul.f32 %v139, %v780
    %v909 = vmul.f32 %v140, %v781
    %v910 = vmul.f32 %v141, %v782
    %v911 = vmul.f32 %v142, %v783
    %v912 = vmul.f32 %v143, %v784
    %v913 = vmul.f32 %v144, %v785
    %v914 = vmul.f32 %v145, %v786
    %v915 = vmul.f32 %v146, %v787
    %v916 = vmul.f32 %v147, %v788
    %v917 = vmul.f32 %v148, %v789
    %v918 = vmul.f32 %v149, %v790
    %v919 = vmul.f32 %v150, %v791
    %v920 = vmul.f32 %v151, %v792
    %v921 = vmul.f32 %v152, %v793
    %v922 = vmul.f32 %v153, %v794
    %v923 = vmul.f32 %v154, %v795
    %v924 = vmul.f32 %v155, %v796
    %v925 = vmul.f32 %v156, %v797
    %v926 = vmul.f32 %v157, %v798
    %v927 = vmul.f32 %v158, %v799
    %v928 = vmul.f32 %v159, %v800
    %v929 = vmul.f32 %v160, %v801
    %v930 = vmul.f32 %v161, %v802
    %v931 = vmul.f32 %v162, %v803
    %v932 = vmul.f32 %v163, %v804
    %v933 = vmul.f32 %v164, %v805
    %v934 = vmul.f32 %v165, %v806
    %v935 = vmul.f32 %v166, %v807
    %v936 = vmul.f32 %v167, %v808
    %v937 = vmul.f32 %v168, %v809
    %v938 = vmul.f32 %v169, %v810
    %v939 = vmul.f32 %v170, %v811
    %v940 = vmul.f32 %v171, %v812
    %v941 = vmul.f32 %v172, %v813
    %v942 = vmul.f32 %v173, %v814
    %v943 = vmul.f32 %v174, %v815
    %v944 = vmul.f32 %v175, %v816
    %v945 = vmul.f32 %v176, %v817
    %v946 = vmul.f32 %v177, %v818
    %v947 = vmul.f32 %v178, %v819
    %v948 = vmul.f32 %v179, %v820
    %v949 = vmul.f32 %v180, %v821
    %v950 = vmul.f32 %v181, %v822
    %v951 = vmul.f32 %v182, %v823
    %v952 = vmul.f32 %v183, %v824
    %v953 = vmul.f32 %v184, %v825
    %v954 = vmul.f32 %v185, %v826
    %v955 = vmul.f32 %v186, %v827
    %v956 = vmul.f32 %v187, %v828
    %v957 = vmul.f32 %v188, %v829
    %v958 = vmul.f32 %v189, %v830
    %v959 = vmul.f32 %v190, %v831
    %v960 = vmul.f32 %v191, %v832
    %v961 = vmul.f32 %v192, %v833
    %v962 = vmul.f32 %v193, %v834
    %v963 = vmul.f32 %v194, %v835
    %v964 = vmul.f32 %v195, %v836
    %v965 = vmul.f32 %v196, %v837
    %v966 = vmul.f32 %v197, %v838
    %v967 = vmul.f32 %v198, %v839
    %v968 = vmul.f32 %v199, %v840
    %v969 = vmul.f32 %v200, %v841
    %v970 = vmul.f32 %v201, %v842
    %v971 = vmul.f32 %v202, %v843
    %v972 = vmul.f32 %v203, %v844
    %v973 = vsub.f32 2.0, %v845
    %v974 = vsub.f32 2.0, %v846
    %v975 = vsub.f32 2.0, %v847
    %v976 = vsub.f32 2.0, %v848
    %v977 = vsub.f32 2.0, %v849
    %v978 = vsub.f32 2.0, %v850
    %v979 = vsub.f32 2.0, %v851
    %v980 = vsub.f32 2.0, %v852
    %v981 = vsub.f32 2.0, %v853
    %v982 = vsub.f32 2.0, %v854
    %v983 = vsub.f32 2.0, %v855
    %v984 = vsub.f32 2.0, %v856
    %v985 = vsub.f32 2.0, %v857
    %v986 = vsub.f32 2.0, %v858
    %v987 = vsub.f32 2.0, %v859
    %v988 = vsub.f32 2.0, %v860
    %v989 = vsub.f32 2.0, %v861
    %v990 = vsub.f32 2.0, %v862
    %v991 = vsub.f32 2.0, %v863
    %v992 = vsub.f32 2.0, %v864
    %v993 = vsub.f32 2.0, %v865
    %v994 = vsub.f32 2.0, %v866
    %v995 = vsub.f32 2.0, %v867
    %v996 = vsub.f32 2.0, %v868
    %v997 = vsub.f32 2.0, %v869
    %v998 = vsub.f32 2.0, %v870
    %v999 = vsub.f32 2.0, %v871
    %v1000 = vsub.f32 2.0, %v872
    %v1001 = vsub.f32 2.0, %v873
    %v1002 = vsub.f32 2.0, %v874
    %v1003 = vsub.f32 2.0, %v875
    %v1004 = vsub.f32 2.0, %v876
    %v1005 = vsub.f32 2.0, %v877
    %v1006 = vsub.f32 2.0, %v878
    %v1007 = vsub.f32 2.0, %v879
    %v1008 = vsub.f32 2.0, %v880
    %v1009 = vsub.f32 2.0, %v881
    %v1010 = vsub.f32 2.0, %v882
    %v1011 = vsub.f32 2.0, %v883
    %v1012 = vsub.f32 2.0, %v884
    %v1013 = vsub.f32 2.0, %v885
    %v1014 = vsub.f32 2.0, %v886
    %v1015 = vsub.f32 2.0, %v887
    %v1016 = vsub.f32 2.0, %v888
    %v1017 = vsub.f32 2.0, %v889
    %v1018 = vsub.f32 2.0, %v890
    %v1019 = vsub.f32 2.0, %v891
    %v1020 = vsub.f32 2.0, %v892
    %v1021 = vsub.f32 2.0, %v893
    %v1022 = vsub.f32 2.0, %v894
    %v1023 = vsub.f32 2.0, %v895
    %v1024 = vsub.f32 2.0, %v896
    %v1025 = vsub.f32 2.0, %v897
    %v1026 = vsub.f32 2.0, %v898
    %v1027 = vsub.f32 2.0, %v899
    %v1028 = vsub.f32 2.0, %v900
    %v1029 = vsub.f32 2.0, %v901
    %v1030 = vsub.f32 2.0, %v902
    %v1031 = vsub.f32 2.0, %v903
    %v1032 = vsub.f32 2.0, %v904
    %v1033 = vsub.f32 2.0, %v905
    %v1034 = vsub.f32 2.0, %v906
    %v1035 = vsub.f32 2.0, %v907
    %v1036 = vsub.f32 2.0, %v908
    %v1037 = vsub.f32 2.0, %v909
    %v1038 = vsub.f32 2.0, %v910
    %v1039 = vsub.f32 2.0, %v911
    %v1040 = vsub.f32 2.0, %v912
    %v1041 = vsub.f32 2.0, %v913
    %v1042 = vsub.f32 2.0, %v914
    %v1043 = vsub.f32 2.0, %v915
    %v1044 = vsub.f32 2.0, %v916
    %v1045 = vsub.f32 2.0, %v917
    %v1046 = vsub.f32 2.0, %v918
    %v1047 = vsub.f32 2.0, %v919
    %v1048 = vsub.f32 2.0, %v920
    %v1049 = vsub.f32 2.0, %v921
    %v1050 = vsub.f32 2.0, %v922
    %v1051 = vsub.f32 2.0, %v923
    %v1052 = vsub.f32 2.0, %v924
    %v1053 = vsub.f32 2.0, %v925
    %v1054 = vsub.f32 2.0, %v926
    %v1055 = vsub.f32 2.0, %v927
    %v1056 = vsub.f32 2.0, %v928
    %v1057 = vsub.f32 2.0, %v929
    %v1058 = vsub.f32 2.0, %v930
    %v1059 = vsub.f32 2.0, %v931
    %v1060 = vsub.f32 2.0, %v932
    %v1061 = vsub.f32 2.0, %v933
    %v1062 = vsub.f32 2.0, %v934
    %v1063 = vsub.f32 2.0, %v935
    %v1064 = vsub.f32 2.0, %v936
    %v1065 = vsub.f32 2.0, %v937
    %v1066 = vsub.f32 2.0, %v938
    %v1067 = vsub.f32 2.0, %v939
    %v1068 = vsub.f32 2.0, %v940
    %v1069 = vsub.f32 2.0, %v941
    %v1070 = vsub.f32 2.0, %v942
    %v1071 = vsub.f32 2.0, %v943
    %v1072 = vsub.f32 2.0, %v944
    %v1073 = vsub.f32 2.0, %v945
    %v1074 = vsub.f32 2.0, %v946
    %v1075 = vsub.f32 2.0, %v947
    %v1076 = vsub.f32 2.0, %v948
    %v1077 = vsub.f32 2.0, %v949
    %v1078 = vsub.f32 2.0, %v950
    %v1079 = vsub.f32 2.0, %v951
    %v1080 = vsub.f32 2.0, %v952
    %v1081 = vsub.f32 2.0, %v953
    %v1082 = vsub.f32 2.0, %v954
    %v1083 = vsub.f32 2.0, %v955
    %v1084 = vsub.f32 2.0, %v956
    %v1085 = vsub.f32 2.0, %v957
    %v1086 = vsub.f32 2.0, %v958
    %v1087 = vsub.f32 2.0, %v959
    %v1088 = vsub.f32 2.0, %v960
    %v1089 = vsub.f32 2.0, %v961
    %v1090 = vsub.f32 2.0, %v962
    %v1091 = vsub.f32 2.0, %v963
    %v1092 = vsub.f32 2.0, %v964
    %v1093 = vsub.f32 2.0, %v965
    %v1094 = vsub.f32 2.0, %v966
    %v1095 = vsub.f32 2.0, %v967
    %v1096 = vsub.f32 2.0, %v968
    %v1097 = vsub.f32 2.0, %v969
    %v1098 = vsub.f32 2.0, %v970
    %v1099 = vsub.f32 2.0, %v971
    %v1100 = vsub.f32 2.0, %v972
    %v1101 = vmul.f32 %v717, %v973
    %v1102 = vmul.f32 %v718, %v974
    %v1103 = vmul.f32 %v719, %v975
    %v1104 = vmul.f32 %v720, %v976
    %v1105 = vmul.f32 %v721, %v977
    %v1106 = vmul.f32 %v722, %v978
    %v1107 = vmul.f32 %v723, %v979
    %v1108 = vmul.f32 %v724, %v980
    %v1109 = vmul.f32 %v725, %v981
    %v1110 = vmul.f32 %v726, %v982
    %v1111 = vmul.f32 %v727, %v983
    %v1112 = vmul.f32 %v728, %v984
    %v1113 = vmul.f32 %v729, %v985
    %v1114 = vmul.f32 %v730, %v986
    %v1115 = vmul.f32 %v731, %v987
    %v1116 = vmul.f32 %v732, %v988
    %v1117 = vmul.f32 %v733, %v989
    %v1118 = vmul.f32 %v734, %v990
    %v1119 = vmul.f32 %v735, %v991
    %v1120 = vmul.f32 %v736, %v992
    %v1121 = vmul.f32 %v737, %v993
    %v1122 = vmul.f32 %v738, %v994
    %v1123 = vmul.f32 %v739, %v995
    %v1124 = vmul.f32 %v740, %v996
    %v1125 = vmul.f32 %v741, %v997
    %v1126 = vmul.f32 %v742, %v998
    %v1127 = vmul.f32 %v743, %v999
    %v1128 = vmul.f32 %v744, %v1000
    %v1129 = vmul.f32 %v745, %v1001
    %v1130 = vmul.f32 %v746, %v1002
    %v1131 = vmul.f32 %v747, %v1003
    %v1132 = vmul.f32 %v748, %v1004
    %v1133 = vmul.f32 %v749, %v1005
    %v1134 = vmul.f32 %v750, %v1006
    %v1135 = vmul.f32 %v751, %v1007
    %v1136 = vmul.f32 %v752, %v1008
    %v1137 = vmul.f32 %v753, %v1009
    %v1138 = vmul.f32 %v754, %v1010
    %v1139 = vmul.f32 %v755, %v1011
    %v1140 = vmul.f32 %v756, %v1012
    %v1141 = vmul.f32 %v757, %v1013
    %v1142 = vmul.f32 %v758, %v1014
    %v1143 = vmul.f32 %v759, %v1015
    %v1144 = vmul.f32 %v760, %v1016
    %v1145 = vmul.f32 %v761, %v1017
    %v1146 = vmul.f32 %v762, %v1018
    %v1147 = vmul.f32 %v763, %v1019
    %v1148 = vmul.f32 %v764, %v1020
    %v1149 = vmul.f32 %v765, %v1021
    %v1150 = vmul.f32 %v766, %v1022
    %v1151 = vmul.f32 %v767, %v1023
    %v1152 = vmul.f32 %v768, %v1024
    %v1153 = vmul.f32 %v769, %v1025
    %v1154 = vmul.f32 %v770, %v1026
    %v1155 = vmul.f32 %v771, %v1027
    %v1156 = vmul.f32 %v772, %v1028
    %v1157 = vmul.f32 %v773, %v1029
    %v1158 = vmul.f32 %v774, %v1030
    %v1159 = vmul.f32 %v775, %v1031
    %v1160 = vmul.f32 %v776, %v1032
    %v1161 = vmul.f32 %v777, %v1033
    %v1162 = vmul.f32 %v778, %v1034
    %v1163 = vmul.f32 %v779, %v1035
    %v1164 = vmul.f32 %v780, %v1036
    %v1165 = vmul.f32 %v781, %v1037
    %v1166 = vmul.f32 %v782, %v1038
    %v1167 = vmul.f32 %v783, %v1039
    %v1168 = vmul.f32 %v784, %v1040
    %v1169 = vmul.f32 %v785, %v1041
    %v1170 = vmul.f32 %v786, %v1042
    %v1171 = vmul.f32 %v787, %v1043
    %v1172 = vmul.f32 %v788, %v1044
    %v1173 = vmul.f32 %v789, %v1045
    %v1174 = vmul.f32 %v790, %v1046
    %v1175 = vmul.f32 %v791, %v1047
    %v1176 = vmul.f32 %v792, %v1048
    %v1177 = vmul.f32 %v793, %v1049
    %v1178 = vmul.f32 %v794, %v1050
    %v1179 = vmul.f32 %v795, %v1051
    %v1180 = vmul.f32 %v796, %v1052
    %v1181 = vmul.f32 %v797, %v1053
    %v1182 = vmul.f32 %v798, %v1054
    %v1183 = vmul.f32 %v799, %v1055
    %v1184 = vmul.f32 %v800, %v1056
    %v1185 = vmul.f32 %v801, %v1057
    %v1186 = vmul.f32 %v802, %v1058
    %v1187 = vmul.f32 %v803, %v1059
    %v1188 = vmul.f32 %v804, %v1060
    %v1189 = vmul.f32 %v805, %v1061
    %v1190 = vmul.f32 %v806, %v1062
    %v1191 = vmul.f32 %v807, %v1063
    %v1192 = vmul.f32 %v808, %v1064
    %v1193 = vmul.f32 %v809, %v1065
    %v1194 = vmul.f32 %v810, %v1066
    %v1195 = vmul.f32 %v811, %v1067
    %v1196 = vmul.f32 %v812, %v1068
    %v1197 = vmul.f32 %v813, %v1069
    %v1198 = vmul.f32 %v814, %v1070
    %v1199 = vmul.f32 %v815, %v1071
    %v1200 = vmul.f32 %v816, %v1072
    %v1201 = vmul.f32 %v817, %v1073
    %v1202 = vmul.f32 %v818, %v1074
    %v1203 = vmul.f32 %v819, %v1075
    %v1204 = vmul.f32 %v820, %v1076
    %v1205 = vmul.f32 %v821, %v1077
    %v1206 = vmul.f32 %v822, %v1078
    %v1207 = vmul.f32 %v823, %v1079
    %v1208 = vmul.f32 %v824, %v1080
    %v1209 = vmul.f32 %v825, %v1081
    %v1210 = vmul.f32 %v826, %v1082
    %v1211 = vmul.f32 %v827, %v1083
    %v1212 = vmul.f32 %v828, %v1084
    %v1213 = vmul.f32 %v829, %v1085
    %v1214 = vmul.f32 %v830, %v1086
    %v1215 = vmul.f32 %v831, %v1087
    %v1216 = vmul.f32 %v832, %v1088
    %v1217 = vmul.f32 %v833, %v1089
    %v1218 = vmul.f32 %v834, %v1090
    %v1219 = vmul.f32 %v835, %v1091
    %v1220 = vmul.f32 %v836, %v1092
    %v1221 = vmul.f32 %v837, %v1093
    %v1222 = vmul.f32 %v838, %v1094
    %v1223 = vmul.f32 %v839, %v1095
    %v1224 = vmul.f32 %v840, %v1096
    %v1225 = vmul.f32 %v841, %v1097
    %v1226 = vmul.f32 %v842, %v1098
    %v1227 = vmul.f32 %v843, %v1099
    %v1228 = vmul.f32 %v844, %v1100
    %v1229 = vrcp.pop %v205
    %v1230 = vrcp.pop %v206
    %v1231 = vrcp.pop %v207
    %v1232 = vrcp.pop %v208
    %v1233 = vrcp.pop %v209
    %v1234 = vrcp.pop %v210
    %v1235 = vrcp.pop %v211
    %v1236 = vrcp.pop %v212
    %v1237 = vrcp.pop %v213
    %v1238 = vrcp.pop %v214
    %v1239 = vrcp.pop %v215
    %v1240 = vrcp.pop %v216
    %v1241 = vrcp.pop %v217
    %v1242 = vrcp.pop %v218
    %v1243 = vrcp.pop %v219
    %v1244 = vrcp.pop %v220
    %v1245 = vrcp.pop %v221
    %v1246 = vrcp.pop %v222
    %v1247 = vrcp.pop %v223
    %v1248 = vrcp.pop %v224
    %v1249 = vrcp.pop %v225
    %v1250 = vrcp.pop %v226
    %v1251 = vrcp.pop %v227
    %v1252 = vrcp.pop %v228
    %v1253 = vrcp.pop %v229
    %v1254 = vrcp.pop %v230
    %v1255 = vrcp.pop %v231
    %v1256 = vrcp.pop %v232
    %v1257 = vrcp.pop %v233
    %v1258 = vrcp.pop %v234
    %v1259 = vrcp.pop %v235
    %v1260 = vrcp.pop %v236
    %v1261 = vrcp.pop %v237
    %v1262 = vrcp.pop %v238
    %v1263 = vrcp.pop %v239
    %v1264 = vrcp.pop %v240
    %v1265 = vrcp.pop %v241
    %v1266 = vrcp.pop %v242
    %v1267 = vrcp.pop %v243
    %v1268 = vrcp.pop %v244
    %v1269 = vrcp.pop %v245
    %v1270 = vrcp.pop %v246
    %v1271 = vrcp.pop %v247
    %v1272 = vrcp.pop %v248
    %v1273 = vrcp.pop %v249
    %v1274 = vrcp.pop %v250
    %v1275 = vrcp.pop %v251
    %v1276 = vrcp.pop %v252
    %v1277 = vrcp.pop %v253
    %v1278 = vrcp.pop %v254
    %v1279 = vrcp.pop %v255
    %v1280 = vrcp.pop %v256
    %v1281 = vrcp.pop %v257
    %v1282 = vrcp.pop %v258
    %v1283 = vrcp.pop %v259
    %v1284 = vrcp.pop %v260
    %v1285 = vrcp.pop %v261
    %v1286 = vrcp.pop %v262
    %v1287 = vrcp.pop %v263
    %v1288 = vrcp.pop %v264
    %v1289 = vrcp.pop %v265
    %v1290 = vrcp.pop %v266
    %v1291 = vrcp.pop %v267
    %v1292 = vrcp.pop %v268
    %v1293 = vrcp.pop %v269
    %v1294 = vrcp.pop %v270
    %v1295 = vrcp.pop %v271
    %v1296 = vrcp.pop %v272
    %v1297 = vrcp.pop %v273
    %v1298 = vrcp.pop %v274
    %v1299 = vrcp.pop %v275
    %v1300 = vrcp.pop %v276
    %v1301 = vrcp.pop %v277
    %v1302 = vrcp.pop %v278
    %v1303 = vrcp.pop %v279
    %v1304 = vrcp.pop %v280
    %v1305 = vrcp.pop %v281
    %v1306 = vrcp.pop %v282
    %v1307 = vrcp.pop %v283
    %v1308 = vrcp.pop %v284
    %v1309 = vrcp.pop %v285
    %v1310 = vrcp.pop %v286
    %v1311 = vrcp.pop %v287
    %v1312 = vrcp.pop %v288
    %v1313 = vrcp.pop %v289
    %v1314 = vrcp.pop %v290
    %v1315 = vrcp.pop %v291
    %v1316 = vrcp.pop %v292
    %v1317 = vrcp.pop %v293
    %v1318 = vrcp.pop %v294
    %v1319 = vrcp.pop %v295
    %v1320 = vrcp.pop %v296
    %v1321 = vrcp.pop %v297
    %v1322 = vrcp.pop %v298
    %v1323 = vrcp.pop %v299
    %v1324 = vrcp.pop %v300
    %v1325 = vrcp.pop %v301
    %v1326 = vrcp.pop %v302
    %v1327 = vrcp.pop %v303
    %v1328 = vrcp.pop %v304
    %v1329 = vrcp.pop %v305
    %v1330 = vrcp.pop %v306
    %v1331 = vrcp.pop %v307
    %v1332 = vrcp.pop %v308
    %v1333 = vrcp.pop %v309
    %v1334 = vrcp.pop %v310
    %v1335 = vrcp.pop %v311
    %v1336 = vrcp.pop %v312
    %v1337 = vrcp.pop %v313
    %v1338 = vrcp.pop %v314
    %v1339 = vrcp.pop %v315
    %v1340 = vrcp.pop %v316
    %v1341 = vrcp.pop %v317
    %v1342 = vrcp.pop %v318
    %v1343 = vrcp.pop %v319
    %v1344 = vrcp.pop %v320
    %v1345 = vrcp.pop %v321
    %v1346 = vrcp.pop %v322
    %v1347 = vrcp.pop %v323
    %v1348 = vrcp.pop %v324
    %v1349 = vrcp.pop %v325
    %v1350 = vrcp.pop %v326
    %v1351 = vrcp.pop %v327
    %v1352 = vrcp.pop %v328
    %v1353 = vrcp.pop %v329
    %v1354 = vrcp.pop %v330
    %v1355 = vrcp.pop %v331
    %v1356 = vrcp.pop %v332
    %v1357 = vmul.f32 %v205, %v1229
    %v1358 = vmul.f32 %v206, %v1230
    %v1359 = vmul.f32 %v207, %v1231
    %v1360 = vmul.f32 %v208, %v1232
    %v1361 = vmul.f32 %v209, %v1233
    %v1362 = vmul.f32 %v210, %v1234
    %v1363 = vmul.f32 %v211, %v1235
    %v1364 = vmul.f32 %v212, %v1236
    %v1365 = vmul.f32 %v213, %v1237
    %v1366 = vmul.f32 %v214, %v1238
    %v1367 = vmul.f32 %v215, %v1239
    %v1368 = vmul.f32 %v216, %v1240
    %v1369 = vmul.f32 %v217, %v1241
    %v1370 = vmul.f32 %v218, %v1242
    %v1371 = vmul.f32 %v219, %v1243
    %v1372 = vmul.f32 %v220, %v1244
    %v1373 = vmul.f32 %v221, %v1245
    %v1374 = vmul.f32 %v222, %v1246
    %v1375 = vmul.f32 %v223, %v1247
    %v1376 = vmul.f32 %v224, %v1248
    %v1377 = vmul.f32 %v225, %v1249
    %v1378 = vmul.f32 %v226, %v1250
    %v1379 = vmul.f32 %v227, %v1251
    %v1380 = vmul.f32 %v228, %v1252
    %v1381 = vmul.f32 %v229, %v1253
    %v1382 = vmul.f32 %v230, %v1254
    %v1383 = vmul.f32 %v231, %v1255
    %v1384 = vmul.f32 %v232, %v1256
    %v1385 = vmul.f32 %v233, %v1257
    %v1386 = vmul.f32 %v234, %v1258
    %v1387 = vmul.f32 %v235, %v1259
    %v1388 = vmul.f32 %v236, %v1260
    %v1389 = vmul.f32 %v237, %v1261
    %v1390 = vmul.f32 %v238, %v1262
    %v1391 = vmul.f32 %v239, %v1263
    %v1392 = vmul.f32 %v240, %v1264
    %v1393 = vmul.f32 %v241, %v1265
    %v1394 = vmul.f32 %v242, %v1266
    %v1395 = vmul.f32 %v243, %v1267
    %v1396 = vmul.f32 %v244, %v1268
    %v1397 = vmul.f32 %v245, %v1269
    %v1398 = vmul.f32 %v246, %v1270
    %v1399 = vmul.f32 %v247, %v1271
    %v1400 = vmul.f32 %v248, %v1272
    %v1401 = vmul.f32 %v249, %v1273
    %v1402 = vmul.f32 %v250, %v1274
    %v1403 = vmul.f32 %v251, %v1275
    %v1404 = vmul.f32 %v252, %v1276
    %v1405 = vmul.f32 %v253, %v1277
    %v1406 = vmul.f32 %v254, %v1278
    %v1407 = vmul.f32 %v255, %v1279
    %v1408 = vmul.f32 %v256, %v1280
    %v1409 = vmul.f32 %v257, %v1281
    %v1410 = vmul.f32 %v258, %v1282
    %v1411 = vmul.f32 %v259, %v1283
    %v1412 = vmul.f32 %v260, %v1284
    %v1413 = vmul.f32 %v261, %v1285
    %v1414 = vmul.f32 %v262, %v1286
    %v1415 = vmul.f32 %v263, %v1287
    %v1416 = vmul.f32 %v264, %v1288
    %v1417 = vmul.f32 %v265, %v1289
    %v1418 = vmul.f32 %v266, %v1290
    %v1419 = vmul.f32 %v267, %v1291
    %v1420 = vmul.f32 %v268, %v1292
    %v1421 = vmul.f32 %v269, %v1293
    %v1422 = vmul.f32 %v270, %v1294
    %v1423 = vmul.f32 %v271, %v1295
    %v1424 = vmul.f32 %v272, %v1296
    %v1425 = vmul.f32 %v273, %v1297
    %v1426 = vmul.f32 %v274, %v1298
    %v1427 = vmul.f32 %v275, %v1299
    %v1428 = vmul.f32 %v276, %v1300
    %v1429 = vmul.f32 %v277, %v1301
    %v1430 = vmul.f32 %v278, %v1302
    %v1431 = vmul.f32 %v279, %v1303
    %v1432 = vmul.f32 %v280, %v1304
    %v1433 = vmul.f32 %v281, %v1305
    %v1434 = vmul.f32 %v282, %v1306
    %v1435 = vmul.f32 %v283, %v1307
    %v1436 = vmul.f32 %v284, %v1308
    %v1437 = vmul.f32 %v285, %v1309
    %v1438 = vmul.f32 %v286, %v1310
    %v1439 = vmul.f32 %v287, %v1311
    %v1440 = vmul.f32 %v288, %v1312
    %v1441 = vmul.f32 %v289, %v1313
    %v1442 = vmul.f32 %v290, %v1314
    %v1443 = vmul.f32 %v291, %v1315
    %v1444 = vmul.f32 %v292, %v1316
    %v1445 = vmul.f32 %v293, %v1317
    %v1446 = vmul.f32 %v294, %v1318
    %v1447 = vmul.f32 %v295, %v1319
    %v1448 = vmul.f32 %v296, %v1320
    %v1449 = vmul.f32 %v297, %v1321
    %v1450 = vmul.f32 %v298, %v1322
    %v1451 = vmul.f32 %v299, %v1323
    %v1452 = vmul.f32 %v300, %v1324
    %v1453 = vmul.f32 %v301, %v1325
    %v1454 = vmul.f32 %v302, %v1326
    %v1455 = vmul.f32 %v303, %v1327
    %v1456 = vmul.f32 %v304, %v1328
    %v1457 = vmul.f32 %v305, %v1329
    %v1458 = vmul.f32 %v306, %v1330
    %v1459 = vmul.f32 %v307, %v1331
    %v1460 = vmul.f32 %v308, %v1332
    %v1461 = vmul.f32 %v309, %v1333
    %v1462 = vmul.f32 %v310, %v1334
    %v1463 = vmul.f32 %v311, %v1335
    %v1464 = vmul.f32 %v312, %v1336
    %v1465 = vmul.f32 %v313, %v1337
    %v1466 = vmul.f32 %v314, %v1338
    %v1467 = vmul.f32 %v315, %v1339
    %v1468 = vmul.f32 %v316, %v1340
    %v1469 = vmul.f32 %v317, %v1341
    %v1470 = vmul.f32 %v318, %v1342
    %v1471 = vmul.f32 %v319, %v1343
    %v1472 = vmul.f32 %v320, %v1344
    %v1473 = vmul.f32 %v321, %v1345
    %v1474 = vmul.f32 %v322, %v1346
    %v1475 = vmul.f32 %v323, %v1347
    %v1476 = vmul.f32 %v324, %v1348
    %v1477 = vmul.f32 %v325, %v1349
    %v1478 = vmul.f32 %v326, %v1350
    %v1479 = vmul.f32 %v327, %v1351
    %v1480 = vmul.f32 %v328, %v1352
    %v1481 = vmul.f32 %v329, %v1353
    %v1482 = vmul.f32 %v330, %v1354
    %v1483 = vmul.f32 %v331, %v1355
    %v1484 = vmul.f32 %v332, %v1356
    %v1485 = vsub.f32 2.0, %v1357
    %v1486 = vsub.f32 2.0, %v1358
    %v1487 = vsub.f32 2.0, %v1359
    %v1488 = vsub.f32 2.0, %v1360
    %v1489 = vsub.f32 2.0, %v1361
    %v1490 = vsub.f32 2.0, %v1362
    %v1491 = vsub.f32 2.0, %v1363
    %v1492 = vsub.f32 2.0, %v1364
    %v1493 = vsub.f32 2.0, %v1365
    %v1494 = vsub.f32 2.0, %v1366
    %v1495 = vsub.f32 2.0, %v1367
    %v1496 = vsub.f32 2.0, %v1368
    %v1497 = vsub.f32 2.0, %v1369
    %v1498 = vsub.f32 2.0, %v1370
    %v1499 = vsub.f32 2.0, %v1371
    %v1500 = vsub.f32 2.0, %v1372
    %v1501 = vsub.f32 2.0, %v1373
    %v1502 = vsub.f32 2.0, %v1374
    %v1503 = vsub.f32 2.0, %v1375
    %v1504 = vsub.f32 2.0, %v1376
    %v1505 = vsub.f32 2.0, %v1377
    %v1506 = vsub.f32 2.0, %v1378
    %v1507 = vsub.f32 2.0, %v1379
    %v1508 = vsub.f32 2.0, %v1380
    %v1509 = vsub.f32 2.0, %v1381
    %v1510 = vsub.f32 2.0, %v1382
    %v1511 = vsub.f32 2.0, %v1383
    %v1512 = vsub.f32 2.0, %v1384
    %v1513 = vsub.f32 2.0, %v1385
    %v1514 = vsub.f32 2.0, %v1386
    %v1515 = vsub.f32 2.0, %v1387
    %v1516 = vsub.f32 2.0, %v1388
    %v1517 = vsub.f32 2.0, %v1389
    %v1518 = vsub.f32 2.0, %v1390
    %v1519 = vsub.f32 2.0, %v1391
    %v1520 = vsub.f32 2.0, %v1392
    %v1521 = vsub.f32 2.0, %v1393
    %v1522 = vsub.f32 2.0, %v1394
    %v1523 = vsub.f32 2.0, %v1395
    %v1524 = vsub.f32 2.0, %v1396
    %v1525 = vsub.f32 2.0, %v1397
    %v1526 = vsub.f32 2.0, %v1398
    %v1527 = vsub.f32 2.0, %v1399
    %v1528 = vsub.f32 2.0, %v1400
    %v1529 = vsub.f32 2.0, %v1401
    %v1530 = vsub.f32 2.0, %v1402
    %v1531 = vsub.f32 2.0, %v1403
    %v1532 = vsub.f32 2.0, %v1404
    %v1533 = vsub.f32 2.0, %v1405
    %v1534 = vsub.f32 2.0, %v1406
    %v1535 = vsub.f32 2.0, %v1407
    %v1536 = vsub.f32 2.0, %v1408
    %v1537 = vsub.f32 2.0, %v1409
    %v1538 = vsub.f32 2.0, %v1410
    %v1539 = vsub.f32 2.0, %v1411
    %v1540 = vsub.f32 2.0, %v1412
    %v1541 = vsub.f32 2.0, %v1413
    %v1542 = vsub.f32 2.0, %v1414
    %v1543 = vsub.f32 2.0, %v1415
    %v1544 = vsub.f32 2.0, %v1416
    %v1545 = vsub.f32 2.0, %v1417
    %v1546 = vsub.f32 2.0, %v1418
    %v1547 = vsub.f32 2.0, %v1419
    %v1548 = vsub.f32 2.0, %v1420
    %v1549 = vsub.f32 2.0, %v1421
    %v1550 = vsub.f32 2.0, %v1422
    %v1551 = vsub.f32 2.0, %v1423
    %v1552 = vsub.f32 2.0, %v1424
    %v1553 = vsub.f32 2.0, %v1425
    %v1554 = vsub.f32 2.0, %v1426
    %v1555 = vsub.f32 2.0, %v1427
    %v1556 = vsub.f32 2.0, %v1428
    %v1557 = vsub.f32 2.0, %v1429
    %v1558 = vsub.f32 2.0, %v1430
    %v1559 = vsub.f32 2.0, %v1431
    %v1560 = vsub.f32 2.0, %v1432
    %v1561 = vsub.f32 2.0, %v1433
    %v1562 = vsub.f32 2.0, %v1434
    %v1563 = vsub.f32 2.0, %v1435
    %v1564 = vsub.f32 2.0, %v1436
    %v1565 = vsub.f32 2.0, %v1437
    %v1566 = vsub.f32 2.0, %v1438
    %v1567 = vsub.f32 2.0, %v1439
    %v1568 = vsub.f32 2.0, %v1440
    %v1569 = vsub.f32 2.0, %v1441
    %v1570 = vsub.f32 2.0, %v1442
    %v1571 = vsub.f32 2.0, %v1443
    %v1572 = vsub.f32 2.0, %v1444
    %v1573 = vsub.f32 2.0, %v1445
    %v1574 = vsub.f32 2.0, %v1446
    %v1575 = vsub.f32 2.0, %v1447
    %v1576 = vsub.f32 2.0, %v1448
    %v1577 = vsub.f32 2.0, %v1449
    %v1578 = vsub.f32 2.0, %v1450
    %v1579 = vsub.f32 2.0, %v1451
    %v1580 = vsub.f32 2.0, %v1452
    %v1581 = vsub.f32 2.0, %v1453
    %v1582 = vsub.f32 2.0, %v1454
    %v1583 = vsub.f32 2.0, %v1455
    %v1584 = vsub.f32 2.0, %v1456
    %v1585 = vsub.f32 2.0, %v1457
    %v1586 = vsub.f32 2.0, %v1458
    %v1587 = vsub.f32 2.0, %v1459
    %v1588 = vsub.f32 2.0, %v1460
    %v1589 = vsub.f32 2.0, %v1461
    %v1590 = vsub.f32 2.0, %v1462
    %v1591 = vsub.f32 2.0, %v1463
    %v1592 = vsub.f32 2.0, %v1464
    %v1593 = vsub.f32 2.0, %v1465
    %v1594 = vsub.f32 2.0, %v1466
    %v1595 = vsub.f32 2.0, %v1467
    %v1596 = vsub.f32 2.0, %v1468
    %v1597 = vsub.f32 2.0, %v1469
    %v1598 = vsub.f32 2.0, %v1470
    %v1599 = vsub.f32 2.0, %v1471
    %v1600 = vsub.f32 2.0, %v1472
    %v1601 = vsub.f32 2.0, %v1473
    %v1602 = vsub.f32 2.0, %v1474
    %v1603 = vsub.f32 2.0, %v1475
    %v1604 = vsub.f32 2.0, %v1476
    %v1605 = vsub.f32 2.0, %v1477
    %v1606 = vsub.f32 2.0, %v1478
    %v1607 = vsub.f32 2.0, %v1479
    %v1608 = vsub.f32 2.0, %v1480
    %v1609 = vsub.f32 2.0, %v1481
    %v1610 = vsub.f32 2.0, %v1482
    %v1611 = vsub.f32 2.0, %v1483
    %v1612 = vsub.f32 2.0, %v1484
    %v1613 = vmul.f32 %v1229, %v1485
    %v1614 = vmul.f32 %v1230, %v1486
    %v1615 = vmul.f32 %v1231, %v1487
    %v1616 = vmul.f32 %v1232, %v1488
    %v1617 = vmul.f32 %v1233, %v1489
    %v1618 = vmul.f32 %v1234, %v1490
    %v1619 = vmul.f32 %v1235, %v1491
    %v1620 = vmul.f32 %v1236, %v1492
    %v1621 = vmul.f32 %v1237, %v1493
    %v1622 = vmul.f32 %v1238, %v1494
    %v1623 = vmul.f32 %v1239, %v1495
    %v1624 = vmul.f32 %v1240, %v1496
    %v1625 = vmul.f32 %v1241, %v1497
    %v1626 = vmul.f32 %v1242, %v1498
    %v1627 = vmul.f32 %v1243, %v1499
    %v1628 = vmul.f32 %v1244, %v1500
    %v1629 = vmul.f32 %v1245, %v1501
    %v1630 = vmul.f32 %v1246, %v1502
    %v1631 = vmul.f32 %v1247, %v1503
    %v1632 = vmul.f32 %v1248, %v1504
    %v1633 = vmul.f32 %v1249, %v1505
    %v1634 = vmul.f32 %v1250, %v1506
    %v1635 = vmul.f32 %v1251, %v1507
    %v1636 = vmul.f32 %v1252, %v1508
    %v1637 = vmul.f32 %v1253, %v1509
    %v1638 = vmul.f32 %v1254, %v1510
    %v1639 = vmul.f32 %v1255, %v1511
    %v1640 = vmul.f32 %v1256, %v1512
    %v1641 = vmul.f32 %v1257, %v1513
    %v1642 = vmul.f32 %v1258, %v1514
    %v1643 = vmul.f32 %v1259, %v1515
    %v1644 = vmul.f32 %v1260, %v1516
    %v1645 = vmul.f32 %v1261, %v1517
    %v1646 = vmul.f32 %v1262, %v1518
    %v1647 = vmul.f32 %v1263, %v1519
    %v1648 = vmul.f32 %v1264, %v1520
    %v1649 = vmul.f32 %v1265, %v1521
    %v1650 = vmul.f32 %v1266, %v1522
    %v1651 = vmul.f32 %v1267, %v1523
    %v1652 = vmul.f32 %v1268, %v1524
    %v1653 = vmul.f32 %v1269, %v1525
    %v1654 = vmul.f32 %v1270, %v1526
    %v1655 = vmul.f32 %v1271, %v1527
    %v1656 = vmul.f32 %v1272, %v1528
    %v1657 = vmul.f32 %v1273, %v1529
    %v1658 = vmul.f32 %v1274, %v1530
    %v1659 = vmul.f32 %v1275, %v1531
    %v1660 = vmul.f32 %v1276, %v1532
    %v1661 = vmul.f32 %v1277, %v1533
    %v1662 = vmul.f32 %v1278, %v1534
    %v1663 = vmul.f32 %v1279, %v1535
    %v1664 = vmul.f32 %v1280, %v1536
    %v1665 = vmul.f32 %v1281, %v1537
    %v1666 = vmul.f32 %v1282, %v1538
    %v1667 = vmul.f32 %v1283, %v1539
    %v1668 = vmul.f32 %v1284, %v1540
    %v1669 = vmul.f32 %v1285, %v1541
    %v1670 = vmul.f32 %v1286, %v1542
    %v1671 = vmul.f32 %v1287, %v1543
    %v1672 = vmul.f32 %v1288, %v1544
    %v1673 = vmul.f32 %v1289, %v1545
    %v1674 = vmul.f32 %v1290, %v1546
    %v1675 = vmul.f32 %v1291, %v1547
    %v1676 = vmul.f32 %v1292, %v1548
    %v1677 = vmul.f32 %v1293, %v1549
    %v1678 = vmul.f32 %v1294, %v1550
    %v1679 = vmul.f32 %v1295, %v1551
    %v1680 = vmul.f32 %v1296, %v1552
    %v1681 = vmul.f32 %v1297, %v1553
    %v1682 = vmul.f32 %v1298, %v1554
    %v1683 = vmul.f32 %v1299, %v1555
    %v1684 = vmul.f32 %v1300, %v1556
    %v1685 = vmul.f32 %v1301, %v1557
    %v1686 = vmul.f32 %v1302, %v1558
    %v1687 = vmul.f32 %v1303, %v1559
    %v1688 = vmul.f32 %v1304, %v1560
    %v1689 = vmul.f32 %v1305, %v1561
    %v1690 = vmul.f32 %v1306, %v1562
    %v1691 = vmul.f32 %v1307, %v1563
    %v1692 = vmul.f32 %v1308, %v1564
    %v1693 = vmul.f32 %v1309, %v1565
    %v1694 = vmul.f32 %v1310, %v1566
    %v1695 = vmul.f32 %v1311, %v1567
    %v1696 = vmul.f32 %v1312, %v1568
    %v1697 = vmul.f32 %v1313, %v1569
    %v1698 = vmul.f32 %v1314, %v1570
    %v1699 = vmul.f32 %v1315, %v1571
    %v1700 = vmul.f32 %v1316, %v1572
    %v1701 = vmul.f32 %v1317, %v1573
    %v1702 = vmul.f32 %v1318, %v1574
    %v1703 = vmul.f32 %v1319, %v1575
    %v1704 = vmul.f32 %v1320, %v1576
    %v1705 = vmul.f32 %v1321, %v1577
    %v1706 = vmul.f32 %v1322, %v1578
    %v1707 = vmul.f32 %v1323, %v1579
    %v1708 = vmul.f32 %v1324, %v1580
    %v1709 = vmul.f32 %v1325, %v1581
    %v1710 = vmul.f32 %v1326, %v1582
    %v1711 = vmul.f32 %v1327, %v1583
    %v1712 = vmul.f32 %v1328, %v1584
    %v1713 = vmul.f32 %v1329, %v1585
    %v1714 = vmul.f32 %v1330, %v1586
    %v1715 = vmul.f32 %v1331, %v1587
    %v1716 = vmul.f32 %v1332, %v1588
    %v1717 = vmul.f32 %v1333, %v1589
    %v1718 = vmul.f32 %v1334, %v1590
    %v1719 = vmul.f32 %v1335, %v1591
    %v1720 = vmul.f32 %v1336, %v1592
    %v1721 = vmul.f32 %v1337, %v1593
    %v1722 = vmul.f32 %v1338, %v1594
    %v1723 = vmul.f32 %v1339, %v1595
    %v1724 = vmul.f32 %v1340, %v1596
    %v1725 = vmul.f32 %v1341, %v1597
    %v1726 = vmul.f32 %v1342, %v1598
    %v1727 = vmul.f32 %v1343, %v1599
    %v1728 = vmul.f32 %v1344, %v1600
    %v1729 = vmul.f32 %v1345, %v1601
    %v1730 = vmul.f32 %v1346, %v1602
    %v1731 = vmul.f32 %v1347, %v1603
    %v1732 = vmul.f32 %v1348, %v1604
    %v1733 = vmul.f32 %v1349, %v1605
    %v1734 = vmul.f32 %v1350, %v1606
    %v1735 = vmul.f32 %v1351, %v1607
    %v1736 = vmul.f32 %v1352, %v1608
    %v1737 = vmul.f32 %v1353, %v1609
    %v1738 = vmul.f32 %v1354, %v1610
    %v1739 = vmul.f32 %v1355, %v1611
    %v1740 = vmul.f32 %v1356, %v1612
    %v1741 = vmul.f32 %v76, %v76
    %v1742 = vmul.f32 %v77, %v77
    %v1743 = vmul.f32 %v78, %v78
    %v1744 = vmul.f32 %v79, %v79
    %v1745 = vmul.f32 %v80, %v80
    %v1746 = vmul.f32 %v81, %v81
    %v1747 = vmul.f32 %v82, %v82
    %v1748 = vmul.f32 %v83, %v83
    %v1749 = vmul.f32 %v84, %v84
    %v1750 = vmul.f32 %v85, %v85
    %v1751 = vmul.f32 %v86, %v86
    %v1752 = vmul.f32 %v87, %v87
    %v1753 = vmul.f32 %v88, %v88
    %v1754 = vmul.f32 %v89, %v89
    %v1755 = vmul.f32 %v90, %v90
    %v1756 = vmul.f32 %v91, %v91
    %v1757 = vmul.f32 %v92, %v92
    %v1758 = vmul.f32 %v93, %v93
    %v1759 = vmul.f32 %v94, %v94
    %v1760 = vmul.f32 %v95, %v95
    %v1761 = vmul.f32 %v96, %v96
    %v1762 = vmul.f32 %v97, %v97
    %v1763 = vmul.f32 %v98, %v98
    %v1764 = vmul.f32 %v99, %v99
    %v1765 = vmul.f32 %v100, %v100
    %v1766 = vmul.f32 %v101, %v101
    %v1767 = vmul.f32 %v102, %v102
    %v1768 = vmul.f32 %v103, %v103
    %v1769 = vmul.f32 %v104, %v104
    %v1770 = vmul.f32 %v105, %v105
    %v1771 = vmul.f32 %v106, %v106
    %v1772 = vmul.f32 %v107, %v107
    %v1773 = vmul.f32 %v108, %v108
    %v1774 = vmul.f32 %v109, %v109
    %v1775 = vmul.f32 %v110, %v110
    %v1776 = vmul.f32 %v111, %v111
    %v1777 = vmul.f32 %v112, %v112
    %v1778 = vmul.f32 %v113, %v113
    %v1779 = vmul.f32 %v114, %v114
    %v1780 = vmul.f32 %v115, %v115
    %v1781 = vmul.f32 %v116, %v116
    %v1782 = vmul.f32 %v117, %v117
    %v1783 = vmul.f32 %v118, %v118
    %v1784 = vmul.f32 %v119, %v119
    %v1785 = vmul.f32 %v120, %v120
    %v1786 = vmul.f32 %v121, %v121
    %v1787 = vmul.f32 %v122, %v122
    %v1788 = vmul.f32 %v123, %v123
    %v1789 = vmul.f32 %v124, %v124
    %v1790 = vmul.f32 %v125, %v125
    %v1791 = vmul.f32 %v126, %v126
    %v1792 = vmul.f32 %v127, %v127
    %v1793 = vmul.f32 %v128, %v128
    %v1794 = vmul.f32 %v129, %v129
    %v1795 = vmul.f32 %v130, %v130
    %v1796 = vmul.f32 %v131, %v131
    %v1797 = vmul.f32 %v132, %v132
    %v1798 = vmul.f32 %v133, %v133
    %v1799 = vmul.f32 %v134, %v134
    %v1800 = vmul.f32 %v135, %v135
    %v1801 = vmul.f32 %v136, %v136
    %v1802 = vmul.f32 %v137, %v137
    %v1803 = vmul.f32 %v138, %v138
    %v1804 = vmul.f32 %v139, %v139
    %v1805 = vmul.f32 %v140, %v140
    %v1806 = vmul.f32 %v141, %v141
    %v1807 = vmul.f32 %v142, %v142
    %v1808 = vmul.f32 %v143, %v143
    %v1809 = vmul.f32 %v144, %v144
    %v1810 = vmul.f32 %v145, %v145
    %v1811 = vmul.f32 %v146, %v146
    %v1812 = vmul.f32 %v147, %v147
    %v1813 = vmul.f32 %v148, %v148
    %v1814 = vmul.f32 %v149, %v149
    %v1815 = vmul.f32 %v150, %v150
    %v1816 = vmul.f32 %v151, %v151
    %v1817 = vmul.f32 %v152, %v152
    %v1818 = vmul.f32 %v153, %v153
    %v1819 = vmul.f32 %v154, %v154
    %v1820 = vmul.f32 %v155, %v155
    %v1821 = vmul.f32 %v156, %v156
    %v1822 = vmul.f32 %v157, %v157
    %v1823 = vmul.f32 %v158, %v158
    %v1824 = vmul.f32 %v159, %v159
    %v1825 = vmul.f32 %v160, %v160
    %v1826 = vmul.f32 %v161, %v161
    %v1827 = vmul.f32 %v162, %v162
    %v1828 = vmul.f32 %v163, %v163
    %v1829 = vmul.f32 %v164, %v164
    %v1830 = vmul.f32 %v165, %v165
    %v1831 = vmul.f32 %v166, %v166
    %v1832 = vmul.f32 %v167, %v167
    %v1833 = vmul.f32 %v168, %v168
    %v1834 = vmul.f32 %v169, %v169
    %v1835 = vmul.f32 %v170, %v170
    %v1836 = vmul.f32 %v171, %v171
    %v1837 = vmul.f32 %v172, %v172
    %v1838 = vmul.f32 %v173, %v173
    %v1839 = vmul.f32 %v174, %v174
    %v1840 = vmul.f32 %v175, %v175
    %v1841 = vmul.f32 %v176, %v176
    %v1842 = vmul.f32 %v177, %v177
    %v1843 = vmul.f32 %v178, %v178
    %v1844 = vmul.f32 %v179, %v179
    %v1845 = vmul.f32 %v180, %v180
    %v1846 = vmul.f32 %v181, %v181
    %v1847 = vmul.f32 %v182, %v182
    %v1848 = vmul.f32 %v183, %v183
    %v1849 = vmul.f32 %v184, %v184
    %v1850 = vmul.f32 %v185, %v185
    %v1851 = vmul.f32 %v186, %v186
    %v1852 = vmul.f32 %v187, %v187
    %v1853 = vmul.f32 %v188, %v188
    %v1854 = vmul.f32 %v189, %v189
    %v1855 = vmul.f32 %v190, %v190
    %v1856 = vmul.f32 %v191, %v191
    %v1857 = vmul.f32 %v192, %v192
    %v1858 = vmul.f32 %v193, %v193
    %v1859 = vmul.f32 %v194, %v194
    %v1860 = vmul.f32 %v195, %v195
    %v1861 = vmul.f32 %v196, %v196
    %v1862 = vmul.f32 %v197, %v197
    %v1863 = vmul.f32 %v198, %v198
    %v1864 = vmul.f32 %v199, %v199
    %v1865 = vmul.f32 %v200, %v200
    %v1866 = vmul.f32 %v201, %v201
    %v1867 = vmul.f32 %v202, %v202
    %v1868 = vmul.f32 %v203, %v203
    %v1869 = vmul.f32 %v205, %v205
    %v1870 = vmul.f32 %v206, %v206
    %v1871 = vmul.f32 %v207, %v207
    %v1872 = vmul.f32 %v208, %v208
    %v1873 = vmul.f32 %v209, %v209
    %v1874 = vmul.f32 %v210, %v210
    %v1875 = vmul.f32 %v211, %v211
    %v1876 = vmul.f32 %v212, %v212
    %v1877 = vmul.f32 %v213, %v213
    %v1878 = vmul.f32 %v214, %v214
    %v1879 = vmul.f32 %v215, %v215
    %v1880 = vmul.f32 %v216, %v216
    %v1881 = vmul.f32 %v217, %v217
    %v1882 = vmul.f32 %v218, %v218
    %v1883 = vmul.f32 %v219, %v219
    %v1884 = vmul.f32 %v220, %v220
    %v1885 = vmul.f32 %v221, %v221
    %v1886 = vmul.f32 %v222, %v222
    %v1887 = vmul.f32 %v223, %v223
    %v1888 = vmul.f32 %v224, %v224
    %v1889 = vmul.f32 %v225, %v225
    %v1890 = vmul.f32 %v226, %v226
    %v1891 = vmul.f32 %v227, %v227
    %v1892 = vmul.f32 %v228, %v228
    %v1893 = vmul.f32 %v229, %v229
    %v1894 = vmul.f32 %v230, %v230
    %v1895 = vmul.f32 %v231, %v231
    %v1896 = vmul.f32 %v232, %v232
    %v1897 = vmul.f32 %v233, %v233
    %v1898 = vmul.f32 %v234, %v234
    %v1899 = vmul.f32 %v235, %v235
    %v1900 = vmul.f32 %v236, %v236
    %v1901 = vmul.f32 %v237, %v237
    %v1902 = vmul.f32 %v238, %v238
    %v1903 = vmul.f32 %v239, %v239
    %v1904 = vmul.f32 %v240, %v240
    %v1905 = vmul.f32 %v241, %v241
    %v1906 = vmul.f32 %v242, %v242
    %v1907 = vmul.f32 %v243, %v243
    %v1908 = vmul.f32 %v244, %v244
    %v1909 = vmul.f32 %v245, %v245
    %v1910 = vmul.f32 %v246, %v246
    %v1911 = vmul.f32 %v247, %v247
    %v1912 = vmul.f32 %v248, %v248
    %v1913 = vmul.f32 %v249, %v249
    %v1914 = vmul.f32 %v250, %v250
    %v1915 = vmul.f32 %v251, %v251
    %v1916 = vmul.f32 %v252, %v252
    %v1917 = vmul.f32 %v253, %v253
    %v1918 = vmul.f32 %v254, %v254
    %v1919 = vmul.f32 %v255, %v255
    %v1920 = vmul.f32 %v256, %v256
    %v1921 = vmul.f32 %v257, %v257
    %v1922 = vmul.f32 %v258, %v258
    %v1923 = vmul.f32 %v259, %v259
    %v1924 = vmul.f32 %v260, %v260
    %v1925 = vmul.f32 %v261, %v261
    %v1926 = vmul.f32 %v262, %v262
    %v1927 = vmul.f32 %v263, %v263
    %v1928 = vmul.f32 %v264, %v264
    %v1929 = vmul.f32 %v265, %v265
    %v1930 = vmul.f32 %v266, %v266
    %v1931 = vmul.f32 %v267, %v267
    %v1932 = vmul.f32 %v268, %v268
    %v1933 = vmul.f32 %v269, %v269
    %v1934 = vmul.f32 %v270, %v270
    %v1935 = vmul.f32 %v271, %v271
    %v1936 = vmul.f32 %v272, %v272
    %v1937 = vmul.f32 %v273, %v273
    %v1938 = vmul.f32 %v274, %v274
    %v1939 = vmul.f32 %v275, %v275
    %v1940 = vmul.f32 %v276, %v276
    %v1941 = vmul.f32 %v277, %v277
    %v1942 = vmul.f32 %v278, %v278
    %v1943 = vmul.f32 %v279, %v279
    %v1944 = vmul.f32 %v280, %v280
    %v1945 = vmul.f32 %v281, %v281
    %v1946 = vmul.f32 %v282, %v282
    %v1947 = vmul.f32 %v283, %v283
    %v1948 = vmul.f32 %v284, %v284
    %v1949 = vmul.f32 %v285, %v285
    %v1950 = vmul.f32 %v286, %v286
    %v1951 = vmul.f32 %v287, %v287
    %v1952 = vmul.f32 %v288, %v288
    %v1953 = vmul.f32 %v289, %v289
    %v1954 = vmul.f32 %v290, %v290
    %v1955 = vmul.f32 %v291, %v291
    %v1956 = vmul.f32 %v292, %v292
    %v1957 = vmul.f32 %v293, %v293
    %v1958 = vmul.f32 %v294, %v294
    %v1959 = vmul.f32 %v295, %v295
    %v1960 = vmul.f32 %v296, %v296
    %v1961 = vmul.f32 %v297, %v297
    %v1962 = vmul.f32 %v298, %v298
    %v1963 = vmul.f32 %v299, %v299
    %v1964 = vmul.f32 %v300, %v300
    %v1965 = vmul.f32 %v301, %v301
    %v1966 = vmul.f32 %v302, %v302
    %v1967 = vmul.f32 %v303, %v303
    %v1968 = vmul.f32 %v304, %v304
    %v1969 = vmul.f32 %v305, %v305
    %v1970 = vmul.f32 %v306, %v306
    %v1971 = vmul.f32 %v307, %v307
    %v1972 = vmul.f32 %v308, %v308
    %v1973 = vmul.f32 %v309, %v309
    %v1974 = vmul.f32 %v310, %v310
    %v1975 = vmul.f32 %v311, %v311
    %v1976 = vmul.f32 %v312, %v312
    %v1977 = vmul.f32 %v313, %v313
    %v1978 = vmul.f32 %v314, %v314
    %v1979 = vmul.f32 %v315, %v315
    %v1980 = vmul.f32 %v316, %v316
    %v1981 = vmul.f32 %v317, %v317
    %v1982 = vmul.f32 %v318, %v318
    %v1983 = vmul.f32 %v319, %v319
    %v1984 = vmul.f32 %v320, %v320
    %v1985 = vmul.f32 %v321, %v321
    %v1986 = vmul.f32 %v322, %v322
    %v1987 = vmul.f32 %v323, %v323
    %v1988 = vmul.f32 %v324, %v324
    %v1989 = vmul.f32 %v325, %v325
    %v1990 = vmul.f32 %v326, %v326
    %v1991 = vmul.f32 %v327, %v327
    %v1992 = vmul.f32 %v328, %v328
    %v1993 = vmul.f32 %v329, %v329
    %v1994 = vmul.f32 %v330, %v330
    %v1995 = vmul.f32 %v331, %v331
    %v1996 = vmul.f32 %v332, %v332
    %v1997 = vadd.f32 %v1741, %v1869
    %v1998 = vadd.f32 %v1742, %v1870
    %v1999 = vadd.f32 %v1743, %v1871
    %v2000 = vadd.f32 %v1744, %v1872
    %v2001 = vadd.f32 %v1745, %v1873
    %v2002 = vadd.f32 %v1746, %v1874
    %v2003 = vadd.f32 %v1747, %v1875
    %v2004 = vadd.f32 %v1748, %v1876
    %v2005 = vadd.f32 %v1749, %v1877
    %v2006 = vadd.f32 %v1750, %v1878
    %v2007 = vadd.f32 %v1751, %v1879
    %v2008 = vadd.f32 %v1752, %v1880
    %v2009 = vadd.f32 %v1753, %v1881
    %v2010 = vadd.f32 %v1754, %v1882
    %v2011 = vadd.f32 %v1755, %v1883
    %v2012 = vadd.f32 %v1756, %v1884
    %v2013 = vadd.f32 %v1757, %v1885
    %v2014 = vadd.f32 %v1758, %v1886
    %v2015 = vadd.f32 %v1759, %v1887
    %v2016 = vadd.f32 %v1760, %v1888
    %v2017 = vadd.f32 %v1761, %v1889
    %v2018 = vadd.f32 %v1762, %v1890
    %v2019 = vadd.f32 %v1763, %v1891
    %v2020 = vadd.f32 %v1764, %v1892
    %v2021 = vadd.f32 %v1765, %v1893
    %v2022 = vadd.f32 %v1766, %v1894
    %v2023 = vadd.f32 %v1767, %v1895
    %v2024 = vadd.f32 %v1768, %v1896
    %v2025 = vadd.f32 %v1769, %v1897
    %v2026 = vadd.f32 %v1770, %v1898
    %v2027 = vadd.f32 %v1771, %v1899
    %v2028 = vadd.f32 %v1772, %v1900
    %v2029 = vadd.f32 %v1773, %v1901
    %v2030 = vadd.f32 %v1774, %v1902
    %v2031 = vadd.f32 %v1775, %v1903
    %v2032 = vadd.f32 %v1776, %v1904
    %v2033 = vadd.f32 %v1777, %v1905
    %v2034 = vadd.f32 %v1778, %v1906
    %v2035 = vadd.f32 %v1779, %v1907
    %v2036 = vadd.f32 %v1780, %v1908
    %v2037 = vadd.f32 %v1781, %v1909
    %v2038 = vadd.f32 %v1782, %v1910
    %v2039 = vadd.f32 %v1783, %v1911
    %v2040 = vadd.f32 %v1784, %v1912
    %v2041 = vadd.f32 %v1785, %v1913
    %v2042 = vadd.f32 %v1786, %v1914
    %v2043 = vadd.f32 %v1787, %v1915
    %v2044 = vadd.f32 %v1788, %v1916
    %v2045 = vadd.f32 %v1789, %v1917
    %v2046 = vadd.f32 %v1790, %v1918
    %v2047 = vadd.f32 %v1791, %v1919
    %v2048 = vadd.f32 %v1792, %v1920
    %v2049 = vadd.f32 %v1793, %v1921
    %v2050 = vadd.f32 %v1794, %v1922
    %v2051 = vadd.f32 %v1795, %v1923
    %v2052 = vadd.f32 %v1796, %v1924
    %v2053 = vadd.f32 %v1797, %v1925
    %v2054 = vadd.f32 %v1798, %v1926
    %v2055 = vadd.f32 %v1799, %v1927
    %v2056 = vadd.f32 %v1800, %v1928
    %v2057 = vadd.f32 %v1801, %v1929
    %v2058 = vadd.f32 %v1802, %v1930
    %v2059 = vadd.f32 %v1803, %v1931
    %v2060 = vadd.f32 %v1804, %v1932
    %v2061 = vadd.f32 %v1805, %v1933
    %v2062 = vadd.f32 %v1806, %v1934
    %v2063 = vadd.f32 %v1807, %v1935
    %v2064 = vadd.f32 %v1808, %v1936
    %v2065 = vadd.f32 %v1809, %v1937
    %v2066 = vadd.f32 %v1810, %v1938
    %v2067 = vadd.f32 %v1811, %v1939
    %v2068 = vadd.f32 %v1812, %v1940
    %v2069 = vadd.f32 %v1813, %v1941
    %v2070 = vadd.f32 %v1814, %v1942
    %v2071 = vadd.f32 %v1815, %v1943
    %v2072 = vadd.f32 %v1816, %v1944
    %v2073 = vadd.f32 %v1817, %v1945
    %v2074 = vadd.f32 %v1818, %v1946
    %v2075 = vadd.f32 %v1819, %v1947
    %v2076 = vadd.f32 %v1820, %v1948
    %v2077 = vadd.f32 %v1821, %v1949
    %v2078 = vadd.f32 %v1822, %v1950
    %v2079 = vadd.f32 %v1823, %v1951
    %v2080 = vadd.f32 %v1824, %v1952
    %v2081 = vadd.f32 %v1825, %v1953
    %v2082 = vadd.f32 %v1826, %v1954
    %v2083 = vadd.f32 %v1827, %v1955
    %v2084 = vadd.f32 %v1828, %v1956
    %v2085 = vadd.f32 %v1829, %v1957
    %v2086 = vadd.f32 %v1830, %v1958
    %v2087 = vadd.f32 %v1831, %v1959
    %v2088 = vadd.f32 %v1832, %v1960
    %v2089 = vadd.f32 %v1833, %v1961
    %v2090 = vadd.f32 %v1834, %v1962
    %v2091 = vadd.f32 %v1835, %v1963
    %v2092 = vadd.f32 %v1836, %v1964
    %v2093 = vadd.f32 %v1837, %v1965
    %v2094 = vadd.f32 %v1838, %v1966
    %v2095 = vadd.f32 %v1839, %v1967
    %v2096 = vadd.f32 %v1840, %v1968
    %v2097 = vadd.f32 %v1841, %v1969
    %v2098 = vadd.f32 %v1842, %v1970
    %v2099 = vadd.f32 %v1843, %v1971
    %v2100 = vadd.f32 %v1844, %v1972
    %v2101 = vadd.f32 %v1845, %v1973
    %v2102 = vadd.f32 %v1846, %v1974
    %v2103 = vadd.f32 %v1847, %v1975
    %v2104 = vadd.f32 %v1848, %v1976
    %v2105 = vadd.f32 %v1849, %v1977
    %v2106 = vadd.f32 %v1850, %v1978
    %v2107 = vadd.f32 %v1851, %v1979
    %v2108 = vadd.f32 %v1852, %v1980
    %v2109 = vadd.f32 %v1853, %v1981
    %v2110 = vadd.f32 %v1854, %v1982
    %v2111 = vadd.f32 %v1855, %v1983
    %v2112 = vadd.f32 %v1856, %v1984
    %v2113 = vadd.f32 %v1857, %v1985
    %v2114 = vadd.f32 %v1858, %v1986
    %v2115 = vadd.f32 %v1859, %v1987
    %v2116 = vadd.f32 %v1860, %v1988
    %v2117 = vadd.f32 %v1861, %v1989
    %v2118 = vadd.f32 %v1862, %v1990
    %v2119 = vadd.f32 %v1863, %v1991
    %v2120 = vadd.f32 %v1864, %v1992
    %v2121 = vadd.f32 %v1865, %v1993
    %v2122 = vadd.f32 %v1866, %v1994
    %v2123 = vadd.f32 %v1867, %v1995
    %v2124 = vadd.f32 %v1868, %v1996
    %v2125 = vmul.f32 %v333, %v1997
    %v2126 = vmul.f32 %v334, %v1998
    %v2127 = vmul.f32 %v335, %v1999
    %v2128 = vmul.f32 %v336, %v2000
    %v2129 = vmul.f32 %v337, %v2001
    %v2130 = vmul.f32 %v338, %v2002
    %v2131 = vmul.f32 %v339, %v2003
    %v2132 = vmul.f32 %v340, %v2004
    %v2133 = vmul.f32 %v341, %v2005
    %v2134 = vmul.f32 %v342, %v2006
    %v2135 = vmul.f32 %v343, %v2007
    %v2136 = vmul.f32 %v344, %v2008
    %v2137 = vmul.f32 %v345, %v2009
    %v2138 = vmul.f32 %v346, %v2010
    %v2139 = vmul.f32 %v347, %v2011
    %v2140 = vmul.f32 %v348, %v2012
    %v2141 = vmul.f32 %v349, %v2013
    %v2142 = vmul.f32 %v350, %v2014
    %v2143 = vmul.f32 %v351, %v2015
    %v2144 = vmul.f32 %v352, %v2016
    %v2145 = vmul.f32 %v353, %v2017
    %v2146 = vmul.f32 %v354, %v2018
    %v2147 = vmul.f32 %v355, %v2019
    %v2148 = vmul.f32 %v356, %v2020
    %v2149 = vmul.f32 %v357, %v2021
    %v2150 = vmul.f32 %v358, %v2022
    %v2151 = vmul.f32 %v359, %v2023
    %v2152 = vmul.f32 %v360, %v2024
    %v2153 = vmul.f32 %v361, %v2025
    %v2154 = vmul.f32 %v362, %v2026
    %v2155 = vmul.f32 %v363, %v2027
    %v2156 = vmul.f32 %v364, %v2028
    %v2157 = vmul.f32 %v365, %v2029
    %v2158 = vmul.f32 %v366, %v2030
    %v2159 = vmul.f32 %v367, %v2031
    %v2160 = vmul.f32 %v368, %v2032
    %v2161 = vmul.f32 %v369, %v2033
    %v2162 = vmul.f32 %v370, %v2034
    %v2163 = vmul.f32 %v371, %v2035
    %v2164 = vmul.f32 %v372, %v2036
    %v2165 = vmul.f32 %v373, %v2037
    %v2166 = vmul.f32 %v374, %v2038
    %v2167 = vmul.f32 %v375, %v2039
    %v2168 = vmul.f32 %v376, %v2040
    %v2169 = vmul.f32 %v377, %v2041
    %v2170 = vmul.f32 %v378, %v2042
    %v2171 = vmul.f32 %v379, %v2043
    %v2172 = vmul.f32 %v380, %v2044
    %v2173 = vmul.f32 %v381, %v2045
    %v2174 = vmul.f32 %v382, %v2046
    %v2175 = vmul.f32 %v383, %v2047
    %v2176 = vmul.f32 %v384, %v2048
    %v2177 = vmul.f32 %v385, %v2049
    %v2178 = vmul.f32 %v386, %v2050
    %v2179 = vmul.f32 %v387, %v2051
    %v2180 = vmul.f32 %v388, %v2052
    %v2181 = vmul.f32 %v389, %v2053
    %v2182 = vmul.f32 %v390, %v2054
    %v2183 = vmul.f32 %v391, %v2055
    %v2184 = vmul.f32 %v392, %v2056
    %v2185 = vmul.f32 %v393, %v2057
    %v2186 = vmul.f32 %v394, %v2058
    %v2187 = vmul.f32 %v395, %v2059
    %v2188 = vmul.f32 %v396, %v2060
    %v2189 = vmul.f32 %v397, %v2061
    %v2190 = vmul.f32 %v398, %v2062
    %v2191 = vmul.f32 %v399, %v2063
    %v2192 = vmul.f32 %v400, %v2064
    %v2193 = vmul.f32 %v401, %v2065
    %v2194 = vmul.f32 %v402, %v2066
    %v2195 = vmul.f32 %v403, %v2067
    %v2196 = vmul.f32 %v404, %v2068
    %v2197 = vmul.f32 %v405, %v2069
    %v2198 = vmul.f32 %v406, %v2070
    %v2199 = vmul.f32 %v407, %v2071
    %v2200 = vmul.f32 %v408, %v2072
    %v2201 = vmul.f32 %v409, %v2073
    %v2202 = vmul.f32 %v410, %v2074
    %v2203 = vmul.f32 %v411, %v2075
    %v2204 = vmul.f32 %v412, %v2076
    %v2205 = vmul.f32 %v413, %v2077
    %v2206 = vmul.f32 %v414, %v2078
    %v2207 = vmul.f32 %v415, %v2079
    %v2208 = vmul.f32 %v416, %v2080
    %v2209 = vmul.f32 %v417, %v2081
    %v2210 = vmul.f32 %v418, %v2082
    %v2211 = vmul.f32 %v419, %v2083
    %v2212 = vmul.f32 %v420, %v2084
    %v2213 = vmul.f32 %v421, %v2085
    %v2214 = vmul.f32 %v422, %v2086
    %v2215 = vmul.f32 %v423, %v2087
    %v2216 = vmul.f32 %v424, %v2088
    %v2217 = vmul.f32 %v425, %v2089
    %v2218 = vmul.f32 %v426, %v2090
    %v2219 = vmul.f32 %v427, %v2091
    %v2220 = vmul.f32 %v428, %v2092
    %v2221 = vmul.f32 %v429, %v2093
    %v2222 = vmul.f32 %v430, %v2094
    %v2223 = vmul.f32 %v431, %v2095
    %v2224 = vmul.f32 %v432, %v2096
    %v2225 = vmul.f32 %v433, %v2097
    %v2226 = vmul.f32 %v434, %v2098
    %v2227 = vmul.f32 %v435, %v2099
    %v2228 = vmul.f32 %v436, %v2100
    %v2229 = vmul.f32 %v437, %v2101
    %v2230 = vmul.f32 %v438, %v2102
    %v2231 = vmul.f32 %v439, %v2103
    %v2232 = vmul.f32 %v440, %v2104
    %v2233 = vmul.f32 %v441, %v2105
    %v2234 = vmul.f32 %v442, %v2106
    %v2235 = vmul.f32 %v443, %v2107
    %v2236 = vmul.f32 %v444, %v2108
    %v2237 = vmul.f32 %v445, %v2109
    %v2238 = vmul.f32 %v446, %v2110
    %v2239 = vmul.f32 %v447, %v2111
    %v2240 = vmul.f32 %v448, %v2112
    %v2241 = vmul.f32 %v449, %v2113
    %v2242 = vmul.f32 %v450, %v2114
    %v2243 = vmul.f32 %v451, %v2115
    %v2244 = vmul.f32 %v452, %v2116
    %v2245 = vmul.f32 %v453, %v2117
    %v2246 = vmul.f32 %v454, %v2118
    %v2247 = vmul.f32 %v455, %v2119
    %v2248 = vmul.f32 %v456, %v2120
    %v2249 = vmul.f32 %v457, %v2121
    %v2250 = vmul.f32 %v458, %v2122
    %v2251 = vmul.f32 %v459, %v2123
    %v2252 = vmul.f32 %v460, %v2124
    %v2253 = vmul.f32 %v76, %v1613
    %v2254 = vmul.f32 %v77, %v1614
    %v2255 = vmul.f32 %v78, %v1615
    %v2256 = vmul.f32 %v79, %v1616
    %v2257 = vmul.f32 %v80, %v1617
    %v2258 = vmul.f32 %v81, %v1618
    %v2259 = vmul.f32 %v82, %v1619
    %v2260 = vmul.f32 %v83, %v1620
    %v2261 = vmul.f32 %v84, %v1621
    %v2262 = vmul.f32 %v85, %v1622
    %v2263 = vmul.f32 %v86, %v1623
    %v2264 = vmul.f32 %v87, %v1624
    %v2265 = vmul.f32 %v88, %v1625
    %v2266 = vmul.f32 %v89, %v1626
    %v2267 = vmul.f32 %v90, %v1627
    %v2268 = vmul.f32 %v91, %v1628
    %v2269 = vmul.f32 %v92, %v1629
    %v2270 = vmul.f32 %v93, %v1630
    %v2271 = vmul.f32 %v94, %v1631
    %v2272 = vmul.f32 %v95, %v1632
    %v2273 = vmul.f32 %v96, %v1633
    %v2274 = vmul.f32 %v97, %v1634
    %v2275 = vmul.f32 %v98, %v1635
    %v2276 = vmul.f32 %v99, %v1636
    %v2277 = vmul.f32 %v100, %v1637
    %v2278 = vmul.f32 %v101, %v1638
    %v2279 = vmul.f32 %v102, %v1639
    %v2280 = vmul.f32 %v103, %v1640
    %v2281 = vmul.f32 %v104, %v1641
    %v2282 = vmul.f32 %v105, %v1642
    %v2283 = vmul.f32 %v106, %v1643
    %v2284 = vmul.f32 %v107, %v1644
    %v2285 = vmul.f32 %v108, %v1645
    %v2286 = vmul.f32 %v109, %v1646
    %v2287 = vmul.f32 %v110, %v1647
    %v2288 = vmul.f32 %v111, %v1648
    %v2289 = vmul.f32 %v112, %v1649
    %v2290 = vmul.f32 %v113, %v1650
    %v2291 = vmul.f32 %v114, %v1651
    %v2292 = vmul.f32 %v115, %v1652
    %v2293 = vmul.f32 %v116, %v1653
    %v2294 = vmul.f32 %v117, %v1654
    %v2295 = vmul.f32 %v118, %v1655
    %v2296 = vmul.f32 %v119, %v1656
    %v2297 = vmul.f32 %v120, %v1657
    %v2298 = vmul.f32 %v121, %v1658
    %v2299 = vmul.f32 %v122, %v1659
    %v2300 = vmul.f32 %v123, %v1660
    %v2301 = vmul.f32 %v124, %v1661
    %v2302 = vmul.f32 %v125, %v1662
    %v2303 = vmul.f32 %v126, %v1663
    %v2304 = vmul.f32 %v127, %v1664
    %v2305 = vmul.f32 %v128, %v1665
    %v2306 = vmul.f32 %v129, %v1666
    %v2307 = vmul.f32 %v130, %v1667
    %v2308 = vmul.f32 %v131, %v1668
    %v2309 = vmul.f32 %v132, %v1669
    %v2310 = vmul.f32 %v133, %v1670
    %v2311 = vmul.f32 %v134, %v1671
    %v2312 = vmul.f32 %v135, %v1672
    %v2313 = vmul.f32 %v136, %v1673
    %v2314 = vmul.f32 %v137, %v1674
    %v2315 = vmul.f32 %v138, %v1675
    %v2316 = vmul.f32 %v139, %v1676
    %v2317 = vmul.f32 %v140, %v1677
    %v2318 = vmul.f32 %v141, %v1678
    %v2319 = vmul.f32 %v142, %v1679
    %v2320 = vmul.f32 %v143, %v1680
    %v2321 = vmul.f32 %v144, %v1681
    %v2322 = vmul.f32 %v145, %v1682
    %v2323 = vmul.f32 %v146, %v1683
    %v2324 = vmul.f32 %v147, %v1684
    %v2325 = vmul.f32 %v148, %v1685
    %v2326 = vmul.f32 %v149, %v1686
    %v2327 = vmul.f32 %v150, %v1687
    %v2328 = vmul.f32 %v151, %v1688
    %v2329 = vmul.f32 %v152, %v1689
    %v2330 = vmul.f32 %v153, %v1690
    %v2331 = vmul.f32 %v154, %v1691
    %v2332 = vmul.f32 %v155, %v1692
    %v2333 = vmul.f32 %v156, %v1693
    %v2334 = vmul.f32 %v157, %v1694
    %v2335 = vmul.f32 %v158, %v1695
    %v2336 = vmul.f32 %v159, %v1696
    %v2337 = vmul.f32 %v160, %v1697
    %v2338 = vmul.f32 %v161, %v1698
    %v2339 = vmul.f32 %v162, %v1699
    %v2340 = vmul.f32 %v163, %v1700
    %v2341 = vmul.f32 %v164, %v1701
    %v2342 = vmul.f32 %v165, %v1702
    %v2343 = vmul.f32 %v166, %v1703
    %v2344 = vmul.f32 %v167, %v1704
    %v2345 = vmul.f32 %v168, %v1705
    %v2346 = vmul.f32 %v169, %v1706
    %v2347 = vmul.f32 %v170, %v1707
    %v2348 = vmul.f32 %v171, %v1708
    %v2349 = vmul.f32 %v172, %v1709
    %v2350 = vmul.f32 %v173, %v1710
    %v2351 = vmul.f32 %v174, %v1711
    %v2352 = vmul.f32 %v175, %v1712
    %v2353 = vmul.f32 %v176, %v1713
    %v2354 = vmul.f32 %v177, %v1714
    %v2355 = vmul.f32 %v178, %v1715
    %v2356 = vmul.f32 %v179, %v1716
    %v2357 = vmul.f32 %v180, %v1717
    %v2358 = vmul.f32 %v181, %v1718
    %v2359 = vmul.f32 %v182, %v1719
    %v2360 = vmul.f32 %v183, %v1720
    %v2361 = vmul.f32 %v184, %v1721
    %v2362 = vmul.f32 %v185, %v1722
    %v2363 = vmul.f32 %v186, %v1723
    %v2364 = vmul.f32 %v187, %v1724
    %v2365 = vmul.f32 %v188, %v1725
    %v2366 = vmul.f32 %v189, %v1726
    %v2367 = vmul.f32 %v190, %v1727
    %v2368 = vmul.f32 %v191, %v1728
    %v2369 = vmul.f32 %v192, %v1729
    %v2370 = vmul.f32 %v193, %v1730
    %v2371 = vmul.f32 %v194, %v1731
    %v2372 = vmul.f32 %v195, %v1732
    %v2373 = vmul.f32 %v196, %v1733
    %v2374 = vmul.f32 %v197, %v1734
    %v2375 = vmul.f32 %v198, %v1735
    %v2376 = vmul.f32 %v199, %v1736
    %v2377 = vmul.f32 %v200, %v1737
    %v2378 = vmul.f32 %v201, %v1738
    %v2379 = vmul.f32 %v202, %v1739
    %v2380 = vmul.f32 %v203, %v1740
    %v2381 = vadd.f32 %v333, %v2253
    %v2382 = vadd.f32 %v334, %v2254
    %v2383 = vadd.f32 %v335, %v2255
    %v2384 = vadd.f32 %v336, %v2256
    %v2385 = vadd.f32 %v337, %v2257
    %v2386 = vadd.f32 %v338, %v2258
    %v2387 = vadd.f32 %v339, %v2259
    %v2388 = vadd.f32 %v340, %v2260
    %v2389 = vadd.f32 %v341, %v2261
    %v2390 = vadd.f32 %v342, %v2262
    %v2391 = vadd.f32 %v343, %v2263
    %v2392 = vadd.f32 %v344, %v2264
    %v2393 = vadd.f32 %v345, %v2265
    %v2394 = vadd.f32 %v346, %v2266
    %v2395 = vadd.f32 %v347, %v2267
    %v2396 = vadd.f32 %v348, %v2268
    %v2397 = vadd.f32 %v349, %v2269
    %v2398 = vadd.f32 %v350, %v2270
    %v2399 = vadd.f32 %v351, %v2271
    %v2400 = vadd.f32 %v352, %v2272
    %v2401 = vadd.f32 %v353, %v2273
    %v2402 = vadd.f32 %v354, %v2274
    %v2403 = vadd.f32 %v355, %v2275
    %v2404 = vadd.f32 %v356, %v2276
    %v2405 = vadd.f32 %v357, %v2277
    %v2406 = vadd.f32 %v358, %v2278
    %v2407 = vadd.f32 %v359, %v2279
    %v2408 = vadd.f32 %v360, %v2280
    %v2409 = vadd.f32 %v361, %v2281
    %v2410 = vadd.f32 %v362, %v2282
    %v2411 = vadd.f32 %v363, %v2283
    %v2412 = vadd.f32 %v364, %v2284
    %v2413 = vadd.f32 %v365, %v2285
    %v2414 = vadd.f32 %v366, %v2286
    %v2415 = vadd.f32 %v367, %v2287
    %v2416 = vadd.f32 %v368, %v2288
    %v2417 = vadd.f32 %v369, %v2289
    %v2418 = vadd.f32 %v370, %v2290
    %v2419 = vadd.f32 %v371, %v2291
    %v2420 = vadd.f32 %v372, %v2292
    %v2421 = vadd.f32 %v373, %v2293
    %v2422 = vadd.f32 %v374, %v2294
    %v2423 = vadd.f32 %v375, %v2295
    %v2424 = vadd.f32 %v376, %v2296
    %v2425 = vadd.f32 %v377, %v2297
    %v2426 = vadd.f32 %v378, %v2298
    %v2427 = vadd.f32 %v379, %v2299
    %v2428 = vadd.f32 %v380, %v2300
    %v2429 = vadd.f32 %v381, %v2301
    %v2430 = vadd.f32 %v382, %v2302
    %v2431 = vadd.f32 %v383, %v2303
    %v2432 = vadd.f32 %v384, %v2304
    %v2433 = vadd.f32 %v385, %v2305
    %v2434 = vadd.f32 %v386, %v2306
    %v2435 = vadd.f32 %v387, %v2307
    %v2436 = vadd.f32 %v388, %v2308
    %v2437 = vadd.f32 %v389, %v2309
    %v2438 = vadd.f32 %v390, %v2310
    %v2439 = vadd.f32 %v391, %v2311
    %v2440 = vadd.f32 %v392, %v2312
    %v2441 = vadd.f32 %v393, %v2313
    %v2442 = vadd.f32 %v394, %v2314
    %v2443 = vadd.f32 %v395, %v2315
    %v2444 = vadd.f32 %v396, %v2316
    %v2445 = vadd.f32 %v397, %v2317
    %v2446 = vadd.f32 %v398, %v2318
    %v2447 = vadd.f32 %v399, %v2319
    %v2448 = vadd.f32 %v400, %v2320
    %v2449 = vadd.f32 %v401, %v2321
    %v2450 = vadd.f32 %v402, %v2322
    %v2451 = vadd.f32 %v403, %v2323
    %v2452 = vadd.f32 %v404, %v2324
    %v2453 = vadd.f32 %v405, %v2325
    %v2454 = vadd.f32 %v406, %v2326
    %v2455 = vadd.f32 %v407, %v2327
    %v2456 = vadd.f32 %v408, %v2328
    %v2457 = vadd.f32 %v409, %v2329
    %v2458 = vadd.f32 %v410, %v2330
    %v2459 = vadd.f32 %v411, %v2331
    %v2460 = vadd.f32 %v412, %v2332
    %v2461 = vadd.f32 %v413, %v2333
    %v2462 = vadd.f32 %v414, %v2334
    %v2463 = vadd.f32 %v415, %v2335
    %v2464 = vadd.f32 %v416, %v2336
    %v2465 = vadd.f32 %v417, %v2337
    %v2466 = vadd.f32 %v418, %v2338
    %v2467 = vadd.f32 %v419, %v2339
    %v2468 = vadd.f32 %v420, %v2340
    %v2469 = vadd.f32 %v421, %v2341
    %v2470 = vadd.f32 %v422, %v2342
    %v2471 = vadd.f32 %v423, %v2343
    %v2472 = vadd.f32 %v424, %v2344
    %v2473 = vadd.f32 %v425, %v2345
    %v2474 = vadd.f32 %v426, %v2346
    %v2475 = vadd.f32 %v427, %v2347
    %v2476 = vadd.f32 %v428, %v2348
    %v2477 = vadd.f32 %v429, %v2349
    %v2478 = vadd.f32 %v430, %v2350
    %v2479 = vadd.f32 %v431, %v2351
    %v2480 = vadd.f32 %v432, %v2352
    %v2481 = vadd.f32 %v433, %v2353
    %v2482 = vadd.f32 %v434, %v2354
    %v2483 = vadd.f32 %v435, %v2355
    %v2484 = vadd.f32 %v436, %v2356
    %v2485 = vadd.f32 %v437, %v2357
    %v2486 = vadd.f32 %v438, %v2358
    %v2487 = vadd.f32 %v439, %v2359
    %v2488 = vadd.f32 %v440, %v2360
    %v2489 = vadd.f32 %v441, %v2361
    %v2490 = vadd.f32 %v442, %v2362
    %v2491 = vadd.f32 %v443, %v2363
    %v2492 = vadd.f32 %v444, %v2364
    %v2493 = vadd.f32 %v445, %v2365
    %v2494 = vadd.f32 %v446, %v2366
    %v2495 = vadd.f32 %v447, %v2367
    %v2496 = vadd.f32 %v448, %v2368
    %v2497 = vadd.f32 %v449, %v2369
    %v2498 = vadd.f32 %v450, %v2370
    %v2499 = vadd.f32 %v451, %v2371
    %v2500 = vadd.f32 %v452, %v2372
    %v2501 = vadd.f32 %v453, %v2373
    %v2502 = vadd.f32 %v454, %v2374
    %v2503 = vadd.f32 %v455, %v2375
    %v2504 = vadd.f32 %v456, %v2376
    %v2505 = vadd.f32 %v457, %v2377
    %v2506 = vadd.f32 %v458, %v2378
    %v2507 = vadd.f32 %v459, %v2379
    %v2508 = vadd.f32 %v460, %v2380
    %v2509 = vmul.f32 %v76, 3.0
    %v2510 = vmul.f32 %v77, 3.0
    %v2511 = vmul.f32 %v78, 3.0
    %v2512 = vmul.f32 %v79, 3.0
    %v2513 = vmul.f32 %v80, 3.0
    %v2514 = vmul.f32 %v81, 3.0
    %v2515 = vmul.f32 %v82, 3.0
    %v2516 = vmul.f32 %v83, 3.0
    %v2517 = vmul.f32 %v84, 3.0
    %v2518 = vmul.f32 %v85, 3.0
    %v2519 = vmul.f32 %v86, 3.0
    %v2520 = vmul.f32 %v87, 3.0
    %v2521 = vmul.f32 %v88, 3.0
    %v2522 = vmul.f32 %v89, 3.0
    %v2523 = vmul.f32 %v90, 3.0
    %v2524 = vmul.f32 %v91, 3.0
    %v2525 = vmul.f32 %v92, 3.0
    %v2526 = vmul.f32 %v93, 3.0
    %v2527 = vmul.f32 %v94, 3.0
    %v2528 = vmul.f32 %v95, 3.0
    %v2529 = vmul.f32 %v96, 3.0
    %v2530 = vmul.f32 %v97, 3.0
    %v2531 = vmul.f32 %v98, 3.0
    %v2532 = vmul.f32 %v99, 3.0
    %v2533 = vmul.f32 %v100, 3.0
    %v2534 = vmul.f32 %v101, 3.0
    %v2535 = vmul.f32 %v102, 3.0
    %v2536 = vmul.f32 %v103, 3.0
    %v2537 = vmul.f32 %v104, 3.0
    %v2538 = vmul.f32 %v105, 3.0
    %v2539 = vmul.f32 %v106, 3.0
    %v2540 = vmul.f32 %v107, 3.0
    %v2541 = vmul.f32 %v108, 3.0
    %v2542 = vmul.f32 %v109, 3.0
    %v2543 = vmul.f32 %v110, 3.0
    %v2544 = vmul.f32 %v111, 3.0
    %v2545 = vmul.f32 %v112, 3.0
    %v2546 = vmul.f32 %v113, 3.0
    %v2547 = vmul.f32 %v114, 3.0
    %v2548 = vmul.f32 %v115, 3.0
    %v2549 = vmul.f32 %v116, 3.0
    %v2550 = vmul.f32 %v117, 3.0
    %v2551 = vmul.f32 %v118, 3.0
    %v2552 = vmul.f32 %v119, 3.0
    %v2553 = vmul.f32 %v120, 3.0
    %v2554 = vmul.f32 %v121, 3.0
    %v2555 = vmul.f32 %v122, 3.0
    %v2556 = vmul.f32 %v123, 3.0
    %v2557 = vmul.f32 %v124, 3.0
    %v2558 = vmul.f32 %v125, 3.0
    %v2559 = vmul.f32 %v126, 3.0
    %v2560 = vmul.f32 %v127, 3.0
    %v2561 = vmul.f32 %v128, 3.0
    %v2562 = vmul.f32 %v129, 3.0
    %v2563 = vmul.f32 %v130, 3.0
    %v2564 = vmul.f32 %v131, 3.0
    %v2565 = vmul.f32 %v132, 3.0
    %v2566 = vmul.f32 %v133, 3.0
    %v2567 = vmul.f32 %v134, 3.0
    %v2568 = vmul.f32 %v135, 3.0
    %v2569 = vmul.f32 %v136, 3.0
    %v2570 = vmul.f32 %v137, 3.0
    %v2571 = vmul.f32 %v138, 3.0
    %v2572 = vmul.f32 %v139, 3.0
    %v2573 = vmul.f32 %v140, 3.0
    %v2574 = vmul.f32 %v141, 3.0
    %v2575 = vmul.f32 %v142, 3.0
    %v2576 = vmul.f32 %v143, 3.0
    %v2577 = vmul.f32 %v144, 3.0
    %v2578 = vmul.f32 %v145, 3.0
    %v2579 = vmul.f32 %v146, 3.0
    %v2580 = vmul.f32 %v147, 3.0
    %v2581 = vmul.f32 %v148, 3.0
    %v2582 = vmul.f32 %v149, 3.0
    %v2583 = vmul.f32 %v150, 3.0
    %v2584 = vmul.f32 %v151, 3.0
    %v2585 = vmul.f32 %v152, 3.0
    %v2586 = vmul.f32 %v153, 3.0
    %v2587 = vmul.f32 %v154, 3.0
    %v2588 = vmul.f32 %v155, 3.0
    %v2589 = vmul.f32 %v156, 3.0
    %v2590 = vmul.f32 %v157, 3.0
    %v2591 = vmul.f32 %v158, 3.0
    %v2592 = vmul.f32 %v159, 3.0
    %v2593 = vmul.f32 %v160, 3.0
    %v2594 = vmul.f32 %v161, 3.0
    %v2595 = vmul.f32 %v162, 3.0
    %v2596 = vmul.f32 %v163, 3.0
    %v2597 = vmul.f32 %v164, 3.0
    %v2598 = vmul.f32 %v165, 3.0
    %v2599 = vmul.f32 %v166, 3.0
    %v2600 = vmul.f32 %v167, 3.0
    %v2601 = vmul.f32 %v168, 3.0
    %v2602 = vmul.f32 %v169, 3.0
    %v2603 = vmul.f32 %v170, 3.0
    %v2604 = vmul.f32 %v171, 3.0
    %v2605 = vmul.f32 %v172, 3.0
    %v2606 = vmul.f32 %v173, 3.0
    %v2607 = vmul.f32 %v174, 3.0
    %v2608 = vmul.f32 %v175, 3.0
    %v2609 = vmul.f32 %v176, 3.0
    %v2610 = vmul.f32 %v177, 3.0
    %v2611 = vmul.f32 %v178, 3.0
    %v2612 = vmul.f32 %v179, 3.0
    %v2613 = vmul.f32 %v180, 3.0
    %v2614 = vmul.f32 %v181, 3.0
    %v2615 = vmul.f32 %v182, 3.0
    %v2616 = vmul.f32 %v183, 3.0
    %v2617 = vmul.f32 %v184, 3.0
    %v2618 = vmul.f32 %v185, 3.0
    %v2619 = vmul.f32 %v186, 3.0
    %v2620 = vmul.f32 %v187, 3.0
    %v2621 = vmul.f32 %v188, 3.0
    %v2622 = vmul.f32 %v189, 3.0
    %v2623 = vmul.f32 %v190, 3.0
    %v2624 = vmul.f32 %v191, 3.0
    %v2625 = vmul.f32 %v192, 3.0
    %v2626 = vmul.f32 %v193, 3.0
    %v2627 = vmul.f32 %v194, 3.0
    %v2628 = vmul.f32 %v195, 3.0
    %v2629 = vmul.f32 %v196, 3.0
    %v2630 = vmul.f32 %v197, 3.0
    %v2631 = vmul.f32 %v198, 3.0
    %v2632 = vmul.f32 %v199, 3.0
    %v2633 = vmul.f32 %v200, 3.0
    %v2634 = vmul.f32 %v201, 3.0
    %v2635 = vmul.f32 %v202, 3.0
    %v2636 = vmul.f32 %v203, 3.0
    %v2637 = vmul.f32 %v333, %v205
    %v2638 = vmul.f32 %v334, %v206
    %v2639 = vmul.f32 %v335, %v207
    %v2640 = vmul.f32 %v336, %v208
    %v2641 = vmul.f32 %v337, %v209
    %v2642 = vmul.f32 %v338, %v210
    %v2643 = vmul.f32 %v339, %v211
    %v2644 = vmul.f32 %v340, %v212
    %v2645 = vmul.f32 %v341, %v213
    %v2646 = vmul.f32 %v342, %v214
    %v2647 = vmul.f32 %v343, %v215
    %v2648 = vmul.f32 %v344, %v216
    %v2649 = vmul.f32 %v345, %v217
    %v2650 = vmul.f32 %v346, %v218
    %v2651 = vmul.f32 %v347, %v219
    %v2652 = vmul.f32 %v348, %v220
    %v2653 = vmul.f32 %v349, %v221
    %v2654 = vmul.f32 %v350, %v222
    %v2655 = vmul.f32 %v351, %v223
    %v2656 = vmul.f32 %v352, %v224
    %v2657 = vmul.f32 %v353, %v225
    %v2658 = vmul.f32 %v354, %v226
    %v2659 = vmul.f32 %v355, %v227
    %v2660 = vmul.f32 %v356, %v228
    %v2661 = vmul.f32 %v357, %v229
    %v2662 = vmul.f32 %v358, %v230
    %v2663 = vmul.f32 %v359, %v231
    %v2664 = vmul.f32 %v360, %v232
    %v2665 = vmul.f32 %v361, %v233
    %v2666 = vmul.f32 %v362, %v234
    %v2667 = vmul.f32 %v363, %v235
    %v2668 = vmul.f32 %v364, %v236
    %v2669 = vmul.f32 %v365, %v237
    %v2670 = vmul.f32 %v366, %v238
    %v2671 = vmul.f32 %v367, %v239
    %v2672 = vmul.f32 %v368, %v240
    %v2673 = vmul.f32 %v369, %v241
    %v2674 = vmul.f32 %v370, %v242
    %v2675 = vmul.f32 %v371, %v243
    %v2676 = vmul.f32 %v372, %v244
    %v2677 = vmul.f32 %v373, %v245
    %v2678 = vmul.f32 %v374, %v246
    %v2679 = vmul.f32 %v375, %v247
    %v2680 = vmul.f32 %v376, %v248
    %v2681 = vmul.f32 %v377, %v249
    %v2682 = vmul.f32 %v378, %v250
    %v2683 = vmul.f32 %v379, %v251
    %v2684 = vmul.f32 %v380, %v252
    %v2685 = vmul.f32 %v381, %v253
    %v2686 = vmul.f32 %v382, %v254
    %v2687 = vmul.f32 %v383, %v255
    %v2688 = vmul.f32 %v384, %v256
    %v2689 = vmul.f32 %v385, %v257
    %v2690 = vmul.f32 %v386, %v258
    %v2691 = vmul.f32 %v387, %v259
    %v2692 = vmul.f32 %v388, %v260
    %v2693 = vmul.f32 %v389, %v261
    %v2694 = vmul.f32 %v390, %v262
    %v2695 = vmul.f32 %v391, %v263
    %v2696 = vmul.f32 %v392, %v264
    %v2697 = vmul.f32 %v393, %v265
    %v2698 = vmul.f32 %v394, %v266
    %v2699 = vmul.f32 %v395, %v267
    %v2700 = vmul.f32 %v396, %v268
    %v2701 = vmul.f32 %v397, %v269
    %v2702 = vmul.f32 %v398, %v270
    %v2703 = vmul.f32 %v399, %v271
    %v2704 = vmul.f32 %v400, %v272
    %v2705 = vmul.f32 %v401, %v273
    %v2706 = vmul.f32 %v402, %v274
    %v2707 = vmul.f32 %v403, %v275
    %v2708 = vmul.f32 %v404, %v276
    %v2709 = vmul.f32 %v405, %v277
    %v2710 = vmul.f32 %v406, %v278
    %v2711 = vmul.f32 %v407, %v279
    %v2712 = vmul.f32 %v408, %v280
    %v2713 = vmul.f32 %v409, %v281
    %v2714 = vmul.f32 %v410, %v282
    %v2715 = vmul.f32 %v411, %v283
    %v2716 = vmul.f32 %v412, %v284
    %v2717 = vmul.f32 %v413, %v285
    %v2718 = vmul.f32 %v414, %v286
    %v2719 = vmul.f32 %v415, %v287
    %v2720 = vmul.f32 %v416, %v288
    %v2721 = vmul.f32 %v417, %v289
    %v2722 = vmul.f32 %v418, %v290
    %v2723 = vmul.f32 %v419, %v291
    %v2724 = vmul.f32 %v420, %v292
    %v2725 = vmul.f32 %v421, %v293
    %v2726 = vmul.f32 %v422, %v294
    %v2727 = vmul.f32 %v423, %v295
    %v2728 = vmul.f32 %v424, %v296
    %v2729 = vmul.f32 %v425, %v297
    %v2730 = vmul.f32 %v426, %v298
    %v2731 = vmul.f32 %v427, %v299
    %v2732 = vmul.f32 %v428, %v300
    %v2733 = vmul.f32 %v429, %v301
    %v2734 = vmul.f32 %v430, %v302
    %v2735 = vmul.f32 %v431, %v303
    %v2736 = vmul.f32 %v432, %v304
    %v2737 = vmul.f32 %v433, %v305
    %v2738 = vmul.f32 %v434, %v306
    %v2739 = vmul.f32 %v435, %v307
    %v2740 = vmul.f32 %v436, %v308
    %v2741 = vmul.f32 %v437, %v309
    %v2742 = vmul.f32 %v438, %v310
    %v2743 = vmul.f32 %v439, %v311
    %v2744 = vmul.f32 %v440, %v312
    %v2745 = vmul.f32 %v441, %v313
    %v2746 = vmul.f32 %v442, %v314
    %v2747 = vmul.f32 %v443, %v315
    %v2748 = vmul.f32 %v444, %v316
    %v2749 = vmul.f32 %v445, %v317
    %v2750 = vmul.f32 %v446, %v318
    %v2751 = vmul.f32 %v447, %v319
    %v2752 = vmul.f32 %v448, %v320
    %v2753 = vmul.f32 %v449, %v321
    %v2754 = vmul.f32 %v450, %v322
    %v2755 = vmul.f32 %v451, %v323
    %v2756 = vmul.f32 %v452, %v324
    %v2757 = vmul.f32 %v453, %v325
    %v2758 = vmul.f32 %v454, %v326
    %v2759 = vmul.f32 %v455, %v327
    %v2760 = vmul.f32 %v456, %v328
    %v2761 = vmul.f32 %v457, %v329
    %v2762 = vmul.f32 %v458, %v330
    %v2763 = vmul.f32 %v459, %v331
    %v2764 = vmul.f32 %v460, %v332
    %v2765 = vadd.f32 %v2509, %v2637
    %v2766 = vadd.f32 %v2510, %v2638
    %v2767 = vadd.f32 %v2511, %v2639
    %v2768 = vadd.f32 %v2512, %v2640
    %v2769 = vadd.f32 %v2513, %v2641
    %v2770 = vadd.f32 %v2514, %v2642
    %v2771 = vadd.f32 %v2515, %v2643
    %v2772 = vadd.f32 %v2516, %v2644
    %v2773 = vadd.f32 %v2517, %v2645
    %v2774 = vadd.f32 %v2518, %v2646
    %v2775 = vadd.f32 %v2519, %v2647
    %v2776 = vadd.f32 %v2520, %v2648
    %v2777 = vadd.f32 %v2521, %v2649
    %v2778 = vadd.f32 %v2522, %v2650
    %v2779 = vadd.f32 %v2523, %v2651
    %v2780 = vadd.f32 %v2524, %v2652
    %v2781 = vadd.f32 %v2525, %v2653
    %v2782 = vadd.f32 %v2526, %v2654
    %v2783 = vadd.f32 %v2527, %v2655
    %v2784 = vadd.f32 %v2528, %v2656
    %v2785 = vadd.f32 %v2529, %v2657
    %v2786 = vadd.f32 %v2530, %v2658
    %v2787 = vadd.f32 %v2531, %v2659
    %v2788 = vadd.f32 %v2532, %v2660
    %v2789 = vadd.f32 %v2533, %v2661
    %v2790 = vadd.f32 %v2534, %v2662
    %v2791 = vadd.f32 %v2535, %v2663
    %v2792 = vadd.f32 %v2536, %v2664
    %v2793 = vadd.f32 %v2537, %v2665
    %v2794 = vadd.f32 %v2538, %v2666
    %v2795 = vadd.f32 %v2539, %v2667
    %v2796 = vadd.f32 %v2540, %v2668
    %v2797 = vadd.f32 %v2541, %v2669
    %v2798 = vadd.f32 %v2542, %v2670
    %v2799 = vadd.f32 %v2543, %v2671
    %v2800 = vadd.f32 %v2544, %v2672
    %v2801 = vadd.f32 %v2545, %v2673
    %v2802 = vadd.f32 %v2546, %v2674
    %v2803 = vadd.f32 %v2547, %v2675
    %v2804 = vadd.f32 %v2548, %v2676
    %v2805 = vadd.f32 %v2549, %v2677
    %v2806 = vadd.f32 %v2550, %v2678
    %v2807 = vadd.f32 %v2551, %v2679
    %v2808 = vadd.f32 %v2552, %v2680
    %v2809 = vadd.f32 %v2553, %v2681
    %v2810 = vadd.f32 %v2554, %v2682
    %v2811 = vadd.f32 %v2555, %v2683
    %v2812 = vadd.f32 %v2556, %v2684
    %v2813 = vadd.f32 %v2557, %v2685
    %v2814 = vadd.f32 %v2558, %v2686
    %v2815 = vadd.f32 %v2559, %v2687
    %v2816 = vadd.f32 %v2560, %v2688
    %v2817 = vadd.f32 %v2561, %v2689
    %v2818 = vadd.f32 %v2562, %v2690
    %v2819 = vadd.f32 %v2563, %v2691
    %v2820 = vadd.f32 %v2564, %v2692
    %v2821 = vadd.f32 %v2565, %v2693
    %v2822 = vadd.f32 %v2566, %v2694
    %v2823 = vadd.f32 %v2567, %v2695
    %v2824 = vadd.f32 %v2568, %v2696
    %v2825 = vadd.f32 %v2569, %v2697
    %v2826 = vadd.f32 %v2570, %v2698
    %v2827 = vadd.f32 %v2571, %v2699
    %v2828 = vadd.f32 %v2572, %v2700
    %v2829 = vadd.f32 %v2573, %v2701
    %v2830 = vadd.f32 %v2574, %v2702
    %v2831 = vadd.f32 %v2575, %v2703
    %v2832 = vadd.f32 %v2576, %v2704
    %v2833 = vadd.f32 %v2577, %v2705
    %v2834 = vadd.f32 %v2578, %v2706
    %v2835 = vadd.f32 %v2579, %v2707
    %v2836 = vadd.f32 %v2580, %v2708
    %v2837 = vadd.f32 %v2581, %v2709
    %v2838 = vadd.f32 %v2582, %v2710
    %v2839 = vadd.f32 %v2583, %v2711
    %v2840 = vadd.f32 %v2584, %v2712
    %v2841 = vadd.f32 %v2585, %v2713
    %v2842 = vadd.f32 %v2586, %v2714
    %v2843 = vadd.f32 %v2587, %v2715
    %v2844 = vadd.f32 %v2588, %v2716
    %v2845 = vadd.f32 %v2589, %v2717
    %v2846 = vadd.f32 %v2590, %v2718
    %v2847 = vadd.f32 %v2591, %v2719
    %v2848 = vadd.f32 %v2592, %v2720
    %v2849 = vadd.f32 %v2593, %v2721
    %v2850 = vadd.f32 %v2594, %v2722
    %v2851 = vadd.f32 %v2595, %v2723
    %v2852 = vadd.f32 %v2596, %v2724
    %v2853 = vadd.f32 %v2597, %v2725
    %v2854 = vadd.f32 %v2598, %v2726
    %v2855 = vadd.f32 %v2599, %v2727
    %v2856 = vadd.f32 %v2600, %v2728
    %v2857 = vadd.f32 %v2601, %v2729
    %v2858 = vadd.f32 %v2602, %v2730
    %v2859 = vadd.f32 %v2603, %v2731
    %v2860 = vadd.f32 %v2604, %v2732
    %v2861 = vadd.f32 %v2605, %v2733
    %v2862 = vadd.f32 %v2606, %v2734
    %v2863 = vadd.f32 %v2607, %v2735
    %v2864 = vadd.f32 %v2608, %v2736
    %v2865 = vadd.f32 %v2609, %v2737
    %v2866 = vadd.f32 %v2610, %v2738
    %v2867 = vadd.f32 %v2611, %v2739
    %v2868 = vadd.f32 %v2612, %v2740
    %v2869 = vadd.f32 %v2613, %v2741
    %v2870 = vadd.f32 %v2614, %v2742
    %v2871 = vadd.f32 %v2615, %v2743
    %v2872 = vadd.f32 %v2616, %v2744
    %v2873 = vadd.f32 %v2617, %v2745
    %v2874 = vadd.f32 %v2618, %v2746
    %v2875 = vadd.f32 %v2619, %v2747
    %v2876 = vadd.f32 %v2620, %v2748
    %v2877 = vadd.f32 %v2621, %v2749
    %v2878 = vadd.f32 %v2622, %v2750
    %v2879 = vadd.f32 %v2623, %v2751
    %v2880 = vadd.f32 %v2624, %v2752
    %v2881 = vadd.f32 %v2625, %v2753
    %v2882 = vadd.f32 %v2626, %v2754
    %v2883 = vadd.f32 %v2627, %v2755
    %v2884 = vadd.f32 %v2628, %v2756
    %v2885 = vadd.f32 %v2629, %v2757
    %v2886 = vadd.f32 %v2630, %v2758
    %v2887 = vadd.f32 %v2631, %v2759
    %v2888 = vadd.f32 %v2632, %v2760
    %v2889 = vadd.f32 %v2633, %v2761
    %v2890 = vadd.f32 %v2634, %v2762
    %v2891 = vadd.f32 %v2635, %v2763
    %v2892 = vadd.f32 %v2636, %v2764
    %v2893 = vmul.f32 %v2381, %v2765
    %v2894 = vmul.f32 %v2382, %v2766
    %v2895 = vmul.f32 %v2383, %v2767
    %v2896 = vmul.f32 %v2384, %v2768
    %v2897 = vmul.f32 %v2385, %v2769
    %v2898 = vmul.f32 %v2386, %v2770
    %v2899 = vmul.f32 %v2387, %v2771
    %v2900 = vmul.f32 %v2388, %v2772
    %v2901 = vmul.f32 %v2389, %v2773
    %v2902 = vmul.f32 %v2390, %v2774
    %v2903 = vmul.f32 %v2391, %v2775
    %v2904 = vmul.f32 %v2392, %v2776
    %v2905 = vmul.f32 %v2393, %v2777
    %v2906 = vmul.f32 %v2394, %v2778
    %v2907 = vmul.f32 %v2395, %v2779
    %v2908 = vmul.f32 %v2396, %v2780
    %v2909 = vmul.f32 %v2397, %v2781
    %v2910 = vmul.f32 %v2398, %v2782
    %v2911 = vmul.f32 %v2399, %v2783
    %v2912 = vmul.f32 %v2400, %v2784
    %v2913 = vmul.f32 %v2401, %v2785
    %v2914 = vmul.f32 %v2402, %v2786
    %v2915 = vmul.f32 %v2403, %v2787
    %v2916 = vmul.f32 %v2404, %v2788
    %v2917 = vmul.f32 %v2405, %v2789
    %v2918 = vmul.f32 %v2406, %v2790
    %v2919 = vmul.f32 %v2407, %v2791
    %v2920 = vmul.f32 %v2408, %v2792
    %v2921 = vmul.f32 %v2409, %v2793
    %v2922 = vmul.f32 %v2410, %v2794
    %v2923 = vmul.f32 %v2411, %v2795
    %v2924 = vmul.f32 %v2412, %v2796
    %v2925 = vmul.f32 %v2413, %v2797
    %v2926 = vmul.f32 %v2414, %v2798
    %v2927 = vmul.f32 %v2415, %v2799
    %v2928 = vmul.f32 %v2416, %v2800
    %v2929 = vmul.f32 %v2417, %v2801
    %v2930 = vmul.f32 %v2418, %v2802
    %v2931 = vmul.f32 %v2419, %v2803
    %v2932 = vmul.f32 %v2420, %v2804
    %v2933 = vmul.f32 %v2421, %v2805
    %v2934 = vmul.f32 %v2422, %v2806
    %v2935 = vmul.f32 %v2423, %v2807
    %v2936 = vmul.f32 %v2424, %v2808
    %v2937 = vmul.f32 %v2425, %v2809
    %v2938 = vmul.f32 %v2426, %v2810
    %v2939 = vmul.f32 %v2427, %v2811
    %v2940 = vmul.f32 %v2428, %v2812
    %v2941 = vmul.f32 %v2429, %v2813
    %v2942 = vmul.f32 %v2430, %v2814
    %v2943 = vmul.f32 %v2431, %v2815
    %v2944 = vmul.f32 %v2432, %v2816
    %v2945 = vmul.f32 %v2433, %v2817
    %v2946 = vmul.f32 %v2434, %v2818
    %v2947 = vmul.f32 %v2435, %v2819
    %v2948 = vmul.f32 %v2436, %v2820
    %v2949 = vmul.f32 %v2437, %v2821
    %v2950 = vmul.f32 %v2438, %v2822
    %v2951 = vmul.f32 %v2439, %v2823
    %v2952 = vmul.f32 %v2440, %v2824
    %v2953 = vmul.f32 %v2441, %v2825
    %v2954 = vmul.f32 %v2442, %v2826
    %v2955 = vmul.f32 %v2443, %v2827
    %v2956 = vmul.f32 %v2444, %v2828
    %v2957 = vmul.f32 %v2445, %v2829
    %v2958 = vmul.f32 %v2446, %v2830
    %v2959 = vmul.f32 %v2447, %v2831
    %v2960 = vmul.f32 %v2448, %v2832
    %v2961 = vmul.f32 %v2449, %v2833
    %v2962 = vmul.f32 %v2450, %v2834
    %v2963 = vmul.f32 %v2451, %v2835
    %v2964 = vmul.f32 %v2452, %v2836
    %v2965 = vmul.f32 %v2453, %v2837
    %v2966 = vmul.f32 %v2454, %v2838
    %v2967 = vmul.f32 %v2455, %v2839
    %v2968 = vmul.f32 %v2456, %v2840
    %v2969 = vmul.f32 %v2457, %v2841
    %v2970 = vmul.f32 %v2458, %v2842
    %v2971 = vmul.f32 %v2459, %v2843
    %v2972 = vmul.f32 %v2460, %v2844
    %v2973 = vmul.f32 %v2461, %v2845
    %v2974 = vmul.f32 %v2462, %v2846
    %v2975 = vmul.f32 %v2463, %v2847
    %v2976 = vmul.f32 %v2464, %v2848
    %v2977 = vmul.f32 %v2465, %v2849
    %v2978 = vmul.f32 %v2466, %v2850
    %v2979 = vmul.f32 %v2467, %v2851
    %v2980 = vmul.f32 %v2468, %v2852
    %v2981 = vmul.f32 %v2469, %v2853
    %v2982 = vmul.f32 %v2470, %v2854
    %v2983 = vmul.f32 %v2471, %v2855
    %v2984 = vmul.f32 %v2472, %v2856
    %v2985 = vmul.f32 %v2473, %v2857
    %v2986 = vmul.f32 %v2474, %v2858
    %v2987 = vmul.f32 %v2475, %v2859
    %v2988 = vmul.f32 %v2476, %v2860
    %v2989 = vmul.f32 %v2477, %v2861
    %v2990 = vmul.f32 %v2478, %v2862
    %v2991 = vmul.f32 %v2479, %v2863
    %v2992 = vmul.f32 %v2480, %v2864
    %v2993 = vmul.f32 %v2481, %v2865
    %v2994 = vmul.f32 %v2482, %v2866
    %v2995 = vmul.f32 %v2483, %v2867
    %v2996 = vmul.f32 %v2484, %v2868
    %v2997 = vmul.f32 %v2485, %v2869
    %v2998 = vmul.f32 %v2486, %v2870
    %v2999 = vmul.f32 %v2487, %v2871
    %v3000 = vmul.f32 %v2488, %v2872
    %v3001 = vmul.f32 %v2489, %v2873
    %v3002 = vmul.f32 %v2490, %v2874
    %v3003 = vmul.f32 %v2491, %v2875
    %v3004 = vmul.f32 %v2492, %v2876
    %v3005 = vmul.f32 %v2493, %v2877
    %v3006 = vmul.f32 %v2494, %v2878
    %v3007 = vmul.f32 %v2495, %v2879
    %v3008 = vmul.f32 %v2496, %v2880
    %v3009 = vmul.f32 %v2497, %v2881
    %v3010 = vmul.f32 %v2498, %v2882
    %v3011 = vmul.f32 %v2499, %v2883
    %v3012 = vmul.f32 %v2500, %v2884
    %v3013 = vmul.f32 %v2501, %v2885
    %v3014 = vmul.f32 %v2502, %v2886
    %v3015 = vmul.f32 %v2503, %v2887
    %v3016 = vmul.f32 %v2504, %v2888
    %v3017 = vmul.f32 %v2505, %v2889
    %v3018 = vmul.f32 %v2506, %v2890
    %v3019 = vmul.f32 %v2507, %v2891
    %v3020 = vmul.f32 %v2508, %v2892
    %v3021 = vsub.f32 %v205, %v461
    %v3022 = vsub.f32 %v206, %v462
    %v3023 = vsub.f32 %v207, %v463
    %v3024 = vsub.f32 %v208, %v464
    %v3025 = vsub.f32 %v209, %v465
    %v3026 = vsub.f32 %v210, %v466
    %v3027 = vsub.f32 %v211, %v467
    %v3028 = vsub.f32 %v212, %v468
    %v3029 = vsub.f32 %v213, %v469
    %v3030 = vsub.f32 %v214, %v470
    %v3031 = vsub.f32 %v215, %v471
    %v3032 = vsub.f32 %v216, %v472
    %v3033 = vsub.f32 %v217, %v473
    %v3034 = vsub.f32 %v218, %v474
    %v3035 = vsub.f32 %v219, %v475
    %v3036 = vsub.f32 %v220, %v476
    %v3037 = vsub.f32 %v221, %v477
    %v3038 = vsub.f32 %v222, %v478
    %v3039 = vsub.f32 %v223, %v479
    %v3040 = vsub.f32 %v224, %v480
    %v3041 = vsub.f32 %v225, %v481
    %v3042 = vsub.f32 %v226, %v482
    %v3043 = vsub.f32 %v227, %v483
    %v3044 = vsub.f32 %v228, %v484
    %v3045 = vsub.f32 %v229, %v485
    %v3046 = vsub.f32 %v230, %v486
    %v3047 = vsub.f32 %v231, %v487
    %v3048 = vsub.f32 %v232, %v488
    %v3049 = vsub.f32 %v233, %v489
    %v3050 = vsub.f32 %v234, %v490
    %v3051 = vsub.f32 %v235, %v491
    %v3052 = vsub.f32 %v236, %v492
    %v3053 = vsub.f32 %v237, %v493
    %v3054 = vsub.f32 %v238, %v494
    %v3055 = vsub.f32 %v239, %v495
    %v3056 = vsub.f32 %v240, %v496
    %v3057 = vsub.f32 %v241, %v497
    %v3058 = vsub.f32 %v242, %v498
    %v3059 = vsub.f32 %v243, %v499
    %v3060 = vsub.f32 %v244, %v500
    %v3061 = vsub.f32 %v245, %v501
    %v3062 = vsub.f32 %v246, %v502
    %v3063 = vsub.f32 %v247, %v503
    %v3064 = vsub.f32 %v248, %v504
    %v3065 = vsub.f32 %v249, %v505
    %v3066 = vsub.f32 %v250, %v506
    %v3067 = vsub.f32 %v251, %v507
    %v3068 = vsub.f32 %v252, %v508
    %v3069 = vsub.f32 %v253, %v509
    %v3070 = vsub.f32 %v254, %v510
    %v3071 = vsub.f32 %v255, %v511
    %v3072 = vsub.f32 %v256, %v512
    %v3073 = vsub.f32 %v257, %v513
    %v3074 = vsub.f32 %v258, %v514
    %v3075 = vsub.f32 %v259, %v515
    %v3076 = vsub.f32 %v260, %v516
    %v3077 = vsub.f32 %v261, %v517
    %v3078 = vsub.f32 %v262, %v518
    %v3079 = vsub.f32 %v263, %v519
    %v3080 = vsub.f32 %v264, %v520
    %v3081 = vsub.f32 %v265, %v521
    %v3082 = vsub.f32 %v266, %v522
    %v3083 = vsub.f32 %v267, %v523
    %v3084 = vsub.f32 %v268, %v524
    %v3085 = vsub.f32 %v269, %v525
    %v3086 = vsub.f32 %v270, %v526
    %v3087 = vsub.f32 %v271, %v527
    %v3088 = vsub.f32 %v272, %v528
    %v3089 = vsub.f32 %v273, %v529
    %v3090 = vsub.f32 %v274, %v530
    %v3091 = vsub.f32 %v275, %v531
    %v3092 = vsub.f32 %v276, %v532
    %v3093 = vsub.f32 %v277, %v533
    %v3094 = vsub.f32 %v278, %v534
    %v3095 = vsub.f32 %v279, %v535
    %v3096 = vsub.f32 %v280, %v536
    %v3097 = vsub.f32 %v281, %v537
    %v3098 = vsub.f32 %v282, %v538
    %v3099 = vsub.f32 %v283, %v539
    %v3100 = vsub.f32 %v284, %v540
    %v3101 = vsub.f32 %v285, %v541
    %v3102 = vsub.f32 %v286, %v542
    %v3103 = vsub.f32 %v287, %v543
    %v3104 = vsub.f32 %v288, %v544
    %v3105 = vsub.f32 %v289, %v545
    %v3106 = vsub.f32 %v290, %v546
    %v3107 = vsub.f32 %v291, %v547
    %v3108 = vsub.f32 %v292, %v548
    %v3109 = vsub.f32 %v293, %v549
    %v3110 = vsub.f32 %v294, %v550
    %v3111 = vsub.f32 %v295, %v551
    %v3112 = vsub.f32 %v296, %v552
    %v3113 = vsub.f32 %v297, %v553
    %v3114 = vsub.f32 %v298, %v554
    %v3115 = vsub.f32 %v299, %v555
    %v3116 = vsub.f32 %v300, %v556
    %v3117 = vsub.f32 %v301, %v557
    %v3118 = vsub.f32 %v302, %v558
    %v3119 = vsub.f32 %v303, %v559
    %v3120 = vsub.f32 %v304, %v560
    %v3121 = vsub.f32 %v305, %v561
    %v3122 = vsub.f32 %v306, %v562
    %v3123 = vsub.f32 %v307, %v563
    %v3124 = vsub.f32 %v308, %v564
    %v3125 = vsub.f32 %v309, %v565
    %v3126 = vsub.f32 %v310, %v566
    %v3127 = vsub.f32 %v311, %v567
    %v3128 = vsub.f32 %v312, %v568
    %v3129 = vsub.f32 %v313, %v569
    %v3130 = vsub.f32 %v314, %v570
    %v3131 = vsub.f32 %v315, %v571
    %v3132 = vsub.f32 %v316, %v572
    %v3133 = vsub.f32 %v317, %v573
    %v3134 = vsub.f32 %v318, %v574
    %v3135 = vsub.f32 %v319, %v575
    %v3136 = vsub.f32 %v320, %v576
    %v3137 = vsub.f32 %v321, %v577
    %v3138 = vsub.f32 %v322, %v578
    %v3139 = vsub.f32 %v323, %v579
    %v3140 = vsub.f32 %v324, %v580
    %v3141 = vsub.f32 %v325, %v581
    %v3142 = vsub.f32 %v326, %v582
    %v3143 = vsub.f32 %v327, %v583
    %v3144 = vsub.f32 %v328, %v584
    %v3145 = vsub.f32 %v329, %v585
    %v3146 = vsub.f32 %v330, %v586
    %v3147 = vsub.f32 %v331, %v587
    %v3148 = vsub.f32 %v332, %v588
    %v3149 = vmul.f32 %v3021, %v3021
    %v3150 = vmul.f32 %v3022, %v3022
    %v3151 = vmul.f32 %v3023, %v3023
    %v3152 = vmul.f32 %v3024, %v3024
    %v3153 = vmul.f32 %v3025, %v3025
    %v3154 = vmul.f32 %v3026, %v3026
    %v3155 = vmul.f32 %v3027, %v3027
    %v3156 = vmul.f32 %v3028, %v3028
    %v3157 = vmul.f32 %v3029, %v3029
    %v3158 = vmul.f32 %v3030, %v3030
    %v3159 = vmul.f32 %v3031, %v3031
    %v3160 = vmul.f32 %v3032, %v3032
    %v3161 = vmul.f32 %v3033, %v3033
    %v3162 = vmul.f32 %v3034, %v3034
    %v3163 = vmul.f32 %v3035, %v3035
    %v3164 = vmul.f32 %v3036, %v3036
    %v3165 = vmul.f32 %v3037, %v3037
    %v3166 = vmul.f32 %v3038, %v3038
    %v3167 = vmul.f32 %v3039, %v3039
    %v3168 = vmul.f32 %v3040, %v3040
    %v3169 = vmul.f32 %v3041, %v3041
    %v3170 = vmul.f32 %v3042, %v3042
    %v3171 = vmul.f32 %v3043, %v3043
    %v3172 = vmul.f32 %v3044, %v3044
    %v3173 = vmul.f32 %v3045, %v3045
    %v3174 = vmul.f32 %v3046, %v3046
    %v3175 = vmul.f32 %v3047, %v3047
    %v3176 = vmul.f32 %v3048, %v3048
    %v3177 = vmul.f32 %v3049, %v3049
    %v3178 = vmul.f32 %v3050, %v3050
    %v3179 = vmul.f32 %v3051, %v3051
    %v3180 = vmul.f32 %v3052, %v3052
    %v3181 = vmul.f32 %v3053, %v3053
    %v3182 = vmul.f32 %v3054, %v3054
    %v3183 = vmul.f32 %v3055, %v3055
    %v3184 = vmul.f32 %v3056, %v3056
    %v3185 = vmul.f32 %v3057, %v3057
    %v3186 = vmul.f32 %v3058, %v3058
    %v3187 = vmul.f32 %v3059, %v3059
    %v3188 = vmul.f32 %v3060, %v3060
    %v3189 = vmul.f32 %v3061, %v3061
    %v3190 = vmul.f32 %v3062, %v3062
    %v3191 = vmul.f32 %v3063, %v3063
    %v3192 = vmul.f32 %v3064, %v3064
    %v3193 = vmul.f32 %v3065, %v3065
    %v3194 = vmul.f32 %v3066, %v3066
    %v3195 = vmul.f32 %v3067, %v3067
    %v3196 = vmul.f32 %v3068, %v3068
    %v3197 = vmul.f32 %v3069, %v3069
    %v3198 = vmul.f32 %v3070, %v3070
    %v3199 = vmul.f32 %v3071, %v3071
    %v3200 = vmul.f32 %v3072, %v3072
    %v3201 = vmul.f32 %v3073, %v3073
    %v3202 = vmul.f32 %v3074, %v3074
    %v3203 = vmul.f32 %v3075, %v3075
    %v3204 = vmul.f32 %v3076, %v3076
    %v3205 = vmul.f32 %v3077, %v3077
    %v3206 = vmul.f32 %v3078, %v3078
    %v3207 = vmul.f32 %v3079, %v3079
    %v3208 = vmul.f32 %v3080, %v3080
    %v3209 = vmul.f32 %v3081, %v3081
    %v3210 = vmul.f32 %v3082, %v3082
    %v3211 = vmul.f32 %v3083, %v3083
    %v3212 = vmul.f32 %v3084, %v3084
    %v3213 = vmul.f32 %v3085, %v3085
    %v3214 = vmul.f32 %v3086, %v3086
    %v3215 = vmul.f32 %v3087, %v3087
    %v3216 = vmul.f32 %v3088, %v3088
    %v3217 = vmul.f32 %v3089, %v3089
    %v3218 = vmul.f32 %v3090, %v3090
    %v3219 = vmul.f32 %v3091, %v3091
    %v3220 = vmul.f32 %v3092, %v3092
    %v3221 = vmul.f32 %v3093, %v3093
    %v3222 = vmul.f32 %v3094, %v3094
    %v3223 = vmul.f32 %v3095, %v3095
    %v3224 = vmul.f32 %v3096, %v3096
    %v3225 = vmul.f32 %v3097, %v3097
    %v3226 = vmul.f32 %v3098, %v3098
    %v3227 = vmul.f32 %v3099, %v3099
    %v3228 = vmul.f32 %v3100, %v3100
    %v3229 = vmul.f32 %v3101, %v3101
    %v3230 = vmul.f32 %v3102, %v3102
    %v3231 = vmul.f32 %v3103, %v3103
    %v3232 = vmul.f32 %v3104, %v3104
    %v3233 = vmul.f32 %v3105, %v3105
    %v3234 = vmul.f32 %v3106, %v3106
    %v3235 = vmul.f32 %v3107, %v3107
    %v3236 = vmul.f32 %v3108, %v3108
    %v3237 = vmul.f32 %v3109, %v3109
    %v3238 = vmul.f32 %v3110, %v3110
    %v3239 = vmul.f32 %v3111, %v3111
    %v3240 = vmul.f32 %v3112, %v3112
    %v3241 = vmul.f32 %v3113, %v3113
    %v3242 = vmul.f32 %v3114, %v3114
    %v3243 = vmul.f32 %v3115, %v3115
    %v3244 = vmul.f32 %v3116, %v3116
    %v3245 = vmul.f32 %v3117, %v3117
    %v3246 = vmul.f32 %v3118, %v3118
    %v3247 = vmul.f32 %v3119, %v3119
    %v3248 = vmul.f32 %v3120, %v3120
    %v3249 = vmul.f32 %v3121, %v3121
    %v3250 = vmul.f32 %v3122, %v3122
    %v3251 = vmul.f32 %v3123, %v3123
    %v3252 = vmul.f32 %v3124, %v3124
    %v3253 = vmul.f32 %v3125, %v3125
    %v3254 = vmul.f32 %v3126, %v3126
    %v3255 = vmul.f32 %v3127, %v3127
    %v3256 = vmul.f32 %v3128, %v3128
    %v3257 = vmul.f32 %v3129, %v3129
    %v3258 = vmul.f32 %v3130, %v3130
    %v3259 = vmul.f32 %v3131, %v3131
    %v3260 = vmul.f32 %v3132, %v3132
    %v3261 = vmul.f32 %v3133, %v3133
    %v3262 = vmul.f32 %v3134, %v3134
    %v3263 = vmul.f32 %v3135, %v3135
    %v3264 = vmul.f32 %v3136, %v3136
    %v3265 = vmul.f32 %v3137, %v3137
    %v3266 = vmul.f32 %v3138, %v3138
    %v3267 = vmul.f32 %v3139, %v3139
    %v3268 = vmul.f32 %v3140, %v3140
    %v3269 = vmul.f32 %v3141, %v3141
    %v3270 = vmul.f32 %v3142, %v3142
    %v3271 = vmul.f32 %v3143, %v3143
    %v3272 = vmul.f32 %v3144, %v3144
    %v3273 = vmul.f32 %v3145, %v3145
    %v3274 = vmul.f32 %v3146, %v3146
    %v3275 = vmul.f32 %v3147, %v3147
    %v3276 = vmul.f32 %v3148, %v3148
    %v3277 = vmul.f32 %v3149, %v1101
    %v3278 = vmul.f32 %v3150, %v1102
    %v3279 = vmul.f32 %v3151, %v1103
    %v3280 = vmul.f32 %v3152, %v1104
    %v3281 = vmul.f32 %v3153, %v1105
    %v3282 = vmul.f32 %v3154, %v1106
    %v3283 = vmul.f32 %v3155, %v1107
    %v3284 = vmul.f32 %v3156, %v1108
    %v3285 = vmul.f32 %v3157, %v1109
    %v3286 = vmul.f32 %v3158, %v1110
    %v3287 = vmul.f32 %v3159, %v1111
    %v3288 = vmul.f32 %v3160, %v1112
    %v3289 = vmul.f32 %v3161, %v1113
    %v3290 = vmul.f32 %v3162, %v1114
    %v3291 = vmul.f32 %v3163, %v1115
    %v3292 = vmul.f32 %v3164, %v1116
    %v3293 = vmul.f32 %v3165, %v1117
    %v3294 = vmul.f32 %v3166, %v1118
    %v3295 = vmul.f32 %v3167, %v1119
    %v3296 = vmul.f32 %v3168, %v1120
    %v3297 = vmul.f32 %v3169, %v1121
    %v3298 = vmul.f32 %v3170, %v1122
    %v3299 = vmul.f32 %v3171, %v1123
    %v3300 = vmul.f32 %v3172, %v1124
    %v3301 = vmul.f32 %v3173, %v1125
    %v3302 = vmul.f32 %v3174, %v1126
    %v3303 = vmul.f32 %v3175, %v1127
    %v3304 = vmul.f32 %v3176, %v1128
    %v3305 = vmul.f32 %v3177, %v1129
    %v3306 = vmul.f32 %v3178, %v1130
    %v3307 = vmul.f32 %v3179, %v1131
    %v3308 = vmul.f32 %v3180, %v1132
    %v3309 = vmul.f32 %v3181, %v1133
    %v3310 = vmul.f32 %v3182, %v1134
    %v3311 = vmul.f32 %v3183, %v1135
    %v3312 = vmul.f32 %v3184, %v1136
    %v3313 = vmul.f32 %v3185, %v1137
    %v3314 = vmul.f32 %v3186, %v1138
    %v3315 = vmul.f32 %v3187, %v1139
    %v3316 = vmul.f32 %v3188, %v1140
    %v3317 = vmul.f32 %v3189, %v1141
    %v3318 = vmul.f32 %v3190, %v1142
    %v3319 = vmul.f32 %v3191, %v1143
    %v3320 = vmul.f32 %v3192, %v1144
    %v3321 = vmul.f32 %v3193, %v1145
    %v3322 = vmul.f32 %v3194, %v1146
    %v3323 = vmul.f32 %v3195, %v1147
    %v3324 = vmul.f32 %v3196, %v1148
    %v3325 = vmul.f32 %v3197, %v1149
    %v3326 = vmul.f32 %v3198, %v1150
    %v3327 = vmul.f32 %v3199, %v1151
    %v3328 = vmul.f32 %v3200, %v1152
    %v3329 = vmul.f32 %v3201, %v1153
    %v3330 = vmul.f32 %v3202, %v1154
    %v3331 = vmul.f32 %v3203, %v1155
    %v3332 = vmul.f32 %v3204, %v1156
    %v3333 = vmul.f32 %v3205, %v1157
    %v3334 = vmul.f32 %v3206, %v1158
    %v3335 = vmul.f32 %v3207, %v1159
    %v3336 = vmul.f32 %v3208, %v1160
    %v3337 = vmul.f32 %v3209, %v1161
    %v3338 = vmul.f32 %v3210, %v1162
    %v3339 = vmul.f32 %v3211, %v1163
    %v3340 = vmul.f32 %v3212, %v1164
    %v3341 = vmul.f32 %v3213, %v1165
    %v3342 = vmul.f32 %v3214, %v1166
    %v3343 = vmul.f32 %v3215, %v1167
    %v3344 = vmul.f32 %v3216, %v1168
    %v3345 = vmul.f32 %v3217, %v1169
    %v3346 = vmul.f32 %v3218, %v1170
    %v3347 = vmul.f32 %v3219, %v1171
    %v3348 = vmul.f32 %v3220, %v1172
    %v3349 = vmul.f32 %v3221, %v1173
    %v3350 = vmul.f32 %v3222, %v1174
    %v3351 = vmul.f32 %v3223, %v1175
    %v3352 = vmul.f32 %v3224, %v1176
    %v3353 = vmul.f32 %v3225, %v1177
    %v3354 = vmul.f32 %v3226, %v1178
    %v3355 = vmul.f32 %v3227, %v1179
    %v3356 = vmul.f32 %v3228, %v1180
    %v3357 = vmul.f32 %v3229, %v1181
    %v3358 = vmul.f32 %v3230, %v1182
    %v3359 = vmul.f32 %v3231, %v1183
    %v3360 = vmul.f32 %v3232, %v1184
    %v3361 = vmul.f32 %v3233, %v1185
    %v3362 = vmul.f32 %v3234, %v1186
    %v3363 = vmul.f32 %v3235, %v1187
    %v3364 = vmul.f32 %v3236, %v1188
    %v3365 = vmul.f32 %v3237, %v1189
    %v3366 = vmul.f32 %v3238, %v1190
    %v3367 = vmul.f32 %v3239, %v1191
    %v3368 = vmul.f32 %v3240, %v1192
    %v3369 = vmul.f32 %v3241, %v1193
    %v3370 = vmul.f32 %v3242, %v1194
    %v3371 = vmul.f32 %v3243, %v1195
    %v3372 = vmul.f32 %v3244, %v1196
    %v3373 = vmul.f32 %v3245, %v1197
    %v3374 = vmul.f32 %v3246, %v1198
    %v3375 = vmul.f32 %v3247, %v1199
    %v3376 = vmul.f32 %v3248, %v1200
    %v3377 = vmul.f32 %v3249, %v1201
    %v3378 = vmul.f32 %v3250, %v1202
    %v3379 = vmul.f32 %v3251, %v1203
    %v3380 = vmul.f32 %v3252, %v1204
    %v3381 = vmul.f32 %v3253, %v1205
    %v3382 = vmul.f32 %v3254, %v1206
    %v3383 = vmul.f32 %v3255, %v1207
    %v3384 = vmul.f32 %v3256, %v1208
    %v3385 = vmul.f32 %v3257, %v1209
    %v3386 = vmul.f32 %v3258, %v1210
    %v3387 = vmul.f32 %v3259, %v1211
    %v3388 = vmul.f32 %v3260, %v1212
    %v3389 = vmul.f32 %v3261, %v1213
    %v3390 = vmul.f32 %v3262, %v1214
    %v3391 = vmul.f32 %v3263, %v1215
    %v3392 = vmul.f32 %v3264, %v1216
    %v3393 = vmul.f32 %v3265, %v1217
    %v3394 = vmul.f32 %v3266, %v1218
    %v3395 = vmul.f32 %v3267, %v1219
    %v3396 = vmul.f32 %v3268, %v1220
    %v3397 = vmul.f32 %v3269, %v1221
    %v3398 = vmul.f32 %v3270, %v1222
    %v3399 = vmul.f32 %v3271, %v1223
    %v3400 = vmul.f32 %v3272, %v1224
    %v3401 = vmul.f32 %v3273, %v1225
    %v3402 = vmul.f32 %v3274, %v1226
    %v3403 = vmul.f32 %v3275, %v1227
    %v3404 = vmul.f32 %v3276, %v1228
    %v3405 = vsub.f32 %v333, %v3277
    %v3406 = vsub.f32 %v334, %v3278
    %v3407 = vsub.f32 %v335, %v3279
    %v3408 = vsub.f32 %v336, %v3280
    %v3409 = vsub.f32 %v337, %v3281
    %v3410 = vsub.f32 %v338, %v3282
    %v3411 = vsub.f32 %v339, %v3283
    %v3412 = vsub.f32 %v340, %v3284
    %v3413 = vsub.f32 %v341, %v3285
    %v3414 = vsub.f32 %v342, %v3286
    %v3415 = vsub.f32 %v343, %v3287
    %v3416 = vsub.f32 %v344, %v3288
    %v3417 = vsub.f32 %v345, %v3289
    %v3418 = vsub.f32 %v346, %v3290
    %v3419 = vsub.f32 %v347, %v3291
    %v3420 = vsub.f32 %v348, %v3292
    %v3421 = vsub.f32 %v349, %v3293
    %v3422 = vsub.f32 %v350, %v3294
    %v3423 = vsub.f32 %v351, %v3295
    %v3424 = vsub.f32 %v352, %v3296
    %v3425 = vsub.f32 %v353, %v3297
    %v3426 = vsub.f32 %v354, %v3298
    %v3427 = vsub.f32 %v355, %v3299
    %v3428 = vsub.f32 %v356, %v3300
    %v3429 = vsub.f32 %v357, %v3301
    %v3430 = vsub.f32 %v358, %v3302
    %v3431 = vsub.f32 %v359, %v3303
    %v3432 = vsub.f32 %v360, %v3304
    %v3433 = vsub.f32 %v361, %v3305
    %v3434 = vsub.f32 %v362, %v3306
    %v3435 = vsub.f32 %v363, %v3307
    %v3436 = vsub.f32 %v364, %v3308
    %v3437 = vsub.f32 %v365, %v3309
    %v3438 = vsub.f32 %v366, %v3310
    %v3439 = vsub.f32 %v367, %v3311
    %v3440 = vsub.f32 %v368, %v3312
    %v3441 = vsub.f32 %v369, %v3313
    %v3442 = vsub.f32 %v370, %v3314
    %v3443 = vsub.f32 %v371, %v3315
    %v3444 = vsub.f32 %v372, %v3316
    %v3445 = vsub.f32 %v373, %v3317
    %v3446 = vsub.f32 %v374, %v3318
    %v3447 = vsub.f32 %v375, %v3319
    %v3448 = vsub.f32 %v376, %v3320
    %v3449 = vsub.f32 %v377, %v3321
    %v3450 = vsub.f32 %v378, %v3322
    %v3451 = vsub.f32 %v379, %v3323
    %v3452 = vsub.f32 %v380, %v3324
    %v3453 = vsub.f32 %v381, %v3325
    %v3454 = vsub.f32 %v382, %v3326
    %v3455 = vsub.f32 %v383, %v3327
    %v3456 = vsub.f32 %v384, %v3328
    %v3457 = vsub.f32 %v385, %v3329
    %v3458 = vsub.f32 %v386, %v3330
    %v3459 = vsub.f32 %v387, %v3331
    %v3460 = vsub.f32 %v388, %v3332
    %v3461 = vsub.f32 %v389, %v3333
    %v3462 = vsub.f32 %v390, %v3334
    %v3463 = vsub.f32 %v391, %v3335
    %v3464 = vsub.f32 %v392, %v3336
    %v3465 = vsub.f32 %v393, %v3337
    %v3466 = vsub.f32 %v394, %v3338
    %v3467 = vsub.f32 %v395, %v3339
    %v3468 = vsub.f32 %v396, %v3340
    %v3469 = vsub.f32 %v397, %v3341
    %v3470 = vsub.f32 %v398, %v3342
    %v3471 = vsub.f32 %v399, %v3343
    %v3472 = vsub.f32 %v400, %v3344
    %v3473 = vsub.f32 %v401, %v3345
    %v3474 = vsub.f32 %v402, %v3346
    %v3475 = vsub.f32 %v403, %v3347
    %v3476 = vsub.f32 %v404, %v3348
    %v3477 = vsub.f32 %v405, %v3349
    %v3478 = vsub.f32 %v406, %v3350
    %v3479 = vsub.f32 %v407, %v3351
    %v3480 = vsub.f32 %v408, %v3352
    %v3481 = vsub.f32 %v409, %v3353
    %v3482 = vsub.f32 %v410, %v3354
    %v3483 = vsub.f32 %v411, %v3355
    %v3484 = vsub.f32 %v412, %v3356
    %v3485 = vsub.f32 %v413, %v3357
    %v3486 = vsub.f32 %v414, %v3358
    %v3487 = vsub.f32 %v415, %v3359
    %v3488 = vsub.f32 %v416, %v3360
    %v3489 = vsub.f32 %v417, %v3361
    %v3490 = vsub.f32 %v418, %v3362
    %v3491 = vsub.f32 %v419, %v3363
    %v3492 = vsub.f32 %v420, %v3364
    %v3493 = vsub.f32 %v421, %v3365
    %v3494 = vsub.f32 %v422, %v3366
    %v3495 = vsub.f32 %v423, %v3367
    %v3496 = vsub.f32 %v424, %v3368
    %v3497 = vsub.f32 %v425, %v3369
    %v3498 = vsub.f32 %v426, %v3370
    %v3499 = vsub.f32 %v427, %v3371
    %v3500 = vsub.f32 %v428, %v3372
    %v3501 = vsub.f32 %v429, %v3373
    %v3502 = vsub.f32 %v430, %v3374
    %v3503 = vsub.f32 %v431, %v3375
    %v3504 = vsub.f32 %v432, %v3376
    %v3505 = vsub.f32 %v433, %v3377
    %v3506 = vsub.f32 %v434, %v3378
    %v3507 = vsub.f32 %v435, %v3379
    %v3508 = vsub.f32 %v436, %v3380
    %v3509 = vsub.f32 %v437, %v3381
    %v3510 = vsub.f32 %v438, %v3382
    %v3511 = vsub.f32 %v439, %v3383
    %v3512 = vsub.f32 %v440, %v3384
    %v3513 = vsub.f32 %v441, %v3385
    %v3514 = vsub.f32 %v442, %v3386
    %v3515 = vsub.f32 %v443, %v3387
    %v3516 = vsub.f32 %v444, %v3388
    %v3517 = vsub.f32 %v445, %v3389
    %v3518 = vsub.f32 %v446, %v3390
    %v3519 = vsub.f32 %v447, %v3391
    %v3520 = vsub.f32 %v448, %v3392
    %v3521 = vsub.f32 %v449, %v3393
    %v3522 = vsub.f32 %v450, %v3394
    %v3523 = vsub.f32 %v451, %v3395
    %v3524 = vsub.f32 %v452, %v3396
    %v3525 = vsub.f32 %v453, %v3397
    %v3526 = vsub.f32 %v454, %v3398
    %v3527 = vsub.f32 %v455, %v3399
    %v3528 = vsub.f32 %v456, %v3400
    %v3529 = vsub.f32 %v457, %v3401
    %v3530 = vsub.f32 %v458, %v3402
    %v3531 = vsub.f32 %v459, %v3403
    %v3532 = vsub.f32 %v460, %v3404
    %v3533 = vadd.f32 %v2125, %v2893
    %v3534 = vadd.f32 %v2126, %v2894
    %v3535 = vadd.f32 %v2127, %v2895
    %v3536 = vadd.f32 %v2128, %v2896
    %v3537 = vadd.f32 %v2129, %v2897
    %v3538 = vadd.f32 %v2130, %v2898
    %v3539 = vadd.f32 %v2131, %v2899
    %v3540 = vadd.f32 %v2132, %v2900
    %v3541 = vadd.f32 %v2133, %v2901
    %v3542 = vadd.f32 %v2134, %v2902
    %v3543 = vadd.f32 %v2135, %v2903
    %v3544 = vadd.f32 %v2136, %v2904
    %v3545 = vadd.f32 %v2137, %v2905
    %v3546 = vadd.f32 %v2138, %v2906
    %v3547 = vadd.f32 %v2139, %v2907
    %v3548 = vadd.f32 %v2140, %v2908
    %v3549 = vadd.f32 %v2141, %v2909
    %v3550 = vadd.f32 %v2142, %v2910
    %v3551 = vadd.f32 %v2143, %v2911
    %v3552 = vadd.f32 %v2144, %v2912
    %v3553 = vadd.f32 %v2145, %v2913
    %v3554 = vadd.f32 %v2146, %v2914
    %v3555 = vadd.f32 %v2147, %v2915
    %v3556 = vadd.f32 %v2148, %v2916
    %v3557 = vadd.f32 %v2149, %v2917
    %v3558 = vadd.f32 %v2150, %v2918
    %v3559 = vadd.f32 %v2151, %v2919
    %v3560 = vadd.f32 %v2152, %v2920
    %v3561 = vadd.f32 %v2153, %v2921
    %v3562 = vadd.f32 %v2154, %v2922
    %v3563 = vadd.f32 %v2155, %v2923
    %v3564 = vadd.f32 %v2156, %v2924
    %v3565 = vadd.f32 %v2157, %v2925
    %v3566 = vadd.f32 %v2158, %v2926
    %v3567 = vadd.f32 %v2159, %v2927
    %v3568 = vadd.f32 %v2160, %v2928
    %v3569 = vadd.f32 %v2161, %v2929
    %v3570 = vadd.f32 %v2162, %v2930
    %v3571 = vadd.f32 %v2163, %v2931
    %v3572 = vadd.f32 %v2164, %v2932
    %v3573 = vadd.f32 %v2165, %v2933
    %v3574 = vadd.f32 %v2166, %v2934
    %v3575 = vadd.f32 %v2167, %v2935
    %v3576 = vadd.f32 %v2168, %v2936
    %v3577 = vadd.f32 %v2169, %v2937
    %v3578 = vadd.f32 %v2170, %v2938
    %v3579 = vadd.f32 %v2171, %v2939
    %v3580 = vadd.f32 %v2172, %v2940
    %v3581 = vadd.f32 %v2173, %v2941
    %v3582 = vadd.f32 %v2174, %v2942
    %v3583 = vadd.f32 %v2175, %v2943
    %v3584 = vadd.f32 %v2176, %v2944
    %v3585 = vadd.f32 %v2177, %v2945
    %v3586 = vadd.f32 %v2178, %v2946
    %v3587 = vadd.f32 %v2179, %v2947
    %v3588 = vadd.f32 %v2180, %v2948
    %v3589 = vadd.f32 %v2181, %v2949
    %v3590 = vadd.f32 %v2182, %v2950
    %v3591 = vadd.f32 %v2183, %v2951
    %v3592 = vadd.f32 %v2184, %v2952
    %v3593 = vadd.f32 %v2185, %v2953
    %v3594 = vadd.f32 %v2186, %v2954
    %v3595 = vadd.f32 %v2187, %v2955
    %v3596 = vadd.f32 %v2188, %v2956
    %v3597 = vadd.f32 %v2189, %v2957
    %v3598 = vadd.f32 %v2190, %v2958
    %v3599 = vadd.f32 %v2191, %v2959
    %v3600 = vadd.f32 %v2192, %v2960
    %v3601 = vadd.f32 %v2193, %v2961
    %v3602 = vadd.f32 %v2194, %v2962
    %v3603 = vadd.f32 %v2195, %v2963
    %v3604 = vadd.f32 %v2196, %v2964
    %v3605 = vadd.f32 %v2197, %v2965
    %v3606 = vadd.f32 %v2198, %v2966
    %v3607 = vadd.f32 %v2199, %v2967
    %v3608 = vadd.f32 %v2200, %v2968
    %v3609 = vadd.f32 %v2201, %v2969
    %v3610 = vadd.f32 %v2202, %v2970
    %v3611 = vadd.f32 %v2203, %v2971
    %v3612 = vadd.f32 %v2204, %v2972
    %v3613 = vadd.f32 %v2205, %v2973
    %v3614 = vadd.f32 %v2206, %v2974
    %v3615 = vadd.f32 %v2207, %v2975
    %v3616 = vadd.f32 %v2208, %v2976
    %v3617 = vadd.f32 %v2209, %v2977
    %v3618 = vadd.f32 %v2210, %v2978
    %v3619 = vadd.f32 %v2211, %v2979
    %v3620 = vadd.f32 %v2212, %v2980
    %v3621 = vadd.f32 %v2213, %v2981
    %v3622 = vadd.f32 %v2214, %v2982
    %v3623 = vadd.f32 %v2215, %v2983
    %v3624 = vadd.f32 %v2216, %v2984
    %v3625 = vadd.f32 %v2217, %v2985
    %v3626 = vadd.f32 %v2218, %v2986
    %v3627 = vadd.f32 %v2219, %v2987
    %v3628 = vadd.f32 %v2220, %v2988
    %v3629 = vadd.f32 %v2221, %v2989
    %v3630 = vadd.f32 %v2222, %v2990
    %v3631 = vadd.f32 %v2223, %v2991
    %v3632 = vadd.f32 %v2224, %v2992
    %v3633 = vadd.f32 %v2225, %v2993
    %v3634 = vadd.f32 %v2226, %v2994
    %v3635 = vadd.f32 %v2227, %v2995
    %v3636 = vadd.f32 %v2228, %v2996
    %v3637 = vadd.f32 %v2229, %v2997
    %v3638 = vadd.f32 %v2230, %v2998
    %v3639 = vadd.f32 %v2231, %v2999
    %v3640 = vadd.f32 %v2232, %v3000
    %v3641 = vadd.f32 %v2233, %v3001
    %v3642 = vadd.f32 %v2234, %v3002
    %v3643 = vadd.f32 %v2235, %v3003
    %v3644 = vadd.f32 %v2236, %v3004
    %v3645 = vadd.f32 %v2237, %v3005
    %v3646 = vadd.f32 %v2238, %v3006
    %v3647 = vadd.f32 %v2239, %v3007
    %v3648 = vadd.f32 %v2240, %v3008
    %v3649 = vadd.f32 %v2241, %v3009
    %v3650 = vadd.f32 %v2242, %v3010
    %v3651 = vadd.f32 %v2243, %v3011
    %v3652 = vadd.f32 %v2244, %v3012
    %v3653 = vadd.f32 %v2245, %v3013
    %v3654 = vadd.f32 %v2246, %v3014
    %v3655 = vadd.f32 %v2247, %v3015
    %v3656 = vadd.f32 %v2248, %v3016
    %v3657 = vadd.f32 %v2249, %v3017
    %v3658 = vadd.f32 %v2250, %v3018
    %v3659 = vadd.f32 %v2251, %v3019
    %v3660 = vadd.f32 %v2252, %v3020
    %v3661 = vsub.f32 %v589, %v461
    %v3662 = vsub.f32 %v590, %v462
    %v3663 = vsub.f32 %v591, %v463
    %v3664 = vsub.f32 %v592, %v464
    %v3665 = vsub.f32 %v593, %v465
    %v3666 = vsub.f32 %v594, %v466
    %v3667 = vsub.f32 %v595, %v467
    %v3668 = vsub.f32 %v596, %v468
    %v3669 = vsub.f32 %v597, %v469
    %v3670 = vsub.f32 %v598, %v470
    %v3671 = vsub.f32 %v599, %v471
    %v3672 = vsub.f32 %v600, %v472
    %v3673 = vsub.f32 %v601, %v473
    %v3674 = vsub.f32 %v602, %v474
    %v3675 = vsub.f32 %v603, %v475
    %v3676 = vsub.f32 %v604, %v476
    %v3677 = vsub.f32 %v605, %v477
    %v3678 = vsub.f32 %v606, %v478
    %v3679 = vsub.f32 %v607, %v479
    %v3680 = vsub.f32 %v608, %v480
    %v3681 = vsub.f32 %v609, %v481
    %v3682 = vsub.f32 %v610, %v482
    %v3683 = vsub.f32 %v611, %v483
    %v3684 = vsub.f32 %v612, %v484
    %v3685 = vsub.f32 %v613, %v485
    %v3686 = vsub.f32 %v614, %v486
    %v3687 = vsub.f32 %v615, %v487
    %v3688 = vsub.f32 %v616, %v488
    %v3689 = vsub.f32 %v617, %v489
    %v3690 = vsub.f32 %v618, %v490
    %v3691 = vsub.f32 %v619, %v491
    %v3692 = vsub.f32 %v620, %v492
    %v3693 = vsub.f32 %v621, %v493
    %v3694 = vsub.f32 %v622, %v494
    %v3695 = vsub.f32 %v623, %v495
    %v3696 = vsub.f32 %v624, %v496
    %v3697 = vsub.f32 %v625, %v497
    %v3698 = vsub.f32 %v626, %v498
    %v3699 = vsub.f32 %v627, %v499
    %v3700 = vsub.f32 %v628, %v500
    %v3701 = vsub.f32 %v629, %v501
    %v3702 = vsub.f32 %v630, %v502
    %v3703 = vsub.f32 %v631, %v503
    %v3704 = vsub.f32 %v632, %v504
    %v3705 = vsub.f32 %v633, %v505
    %v3706 = vsub.f32 %v634, %v506
    %v3707 = vsub.f32 %v635, %v507
    %v3708 = vsub.f32 %v636, %v508
    %v3709 = vsub.f32 %v637, %v509
    %v3710 = vsub.f32 %v638, %v510
    %v3711 = vsub.f32 %v639, %v511
    %v3712 = vsub.f32 %v640, %v512
    %v3713 = vsub.f32 %v641, %v513
    %v3714 = vsub.f32 %v642, %v514
    %v3715 = vsub.f32 %v643, %v515
    %v3716 = vsub.f32 %v644, %v516
    %v3717 = vsub.f32 %v645, %v517
    %v3718 = vsub.f32 %v646, %v518
    %v3719 = vsub.f32 %v647, %v519
    %v3720 = vsub.f32 %v648, %v520
    %v3721 = vsub.f32 %v649, %v521
    %v3722 = vsub.f32 %v650, %v522
    %v3723 = vsub.f32 %v651, %v523
    %v3724 = vsub.f32 %v652, %v524
    %v3725 = vsub.f32 %v653, %v525
    %v3726 = vsub.f32 %v654, %v526
    %v3727 = vsub.f32 %v655, %v527
    %v3728 = vsub.f32 %v656, %v528
    %v3729 = vsub.f32 %v657, %v529
    %v3730 = vsub.f32 %v658, %v530
    %v3731 = vsub.f32 %v659, %v531
    %v3732 = vsub.f32 %v660, %v532
    %v3733 = vsub.f32 %v661, %v533
    %v3734 = vsub.f32 %v662, %v534
    %v3735 = vsub.f32 %v663, %v535
    %v3736 = vsub.f32 %v664, %v536
    %v3737 = vsub.f32 %v665, %v537
    %v3738 = vsub.f32 %v666, %v538
    %v3739 = vsub.f32 %v667, %v539
    %v3740 = vsub.f32 %v668, %v540
    %v3741 = vsub.f32 %v669, %v541
    %v3742 = vsub.f32 %v670, %v542
    %v3743 = vsub.f32 %v671, %v543
    %v3744 = vsub.f32 %v672, %v544
    %v3745 = vsub.f32 %v673, %v545
    %v3746 = vsub.f32 %v674, %v546
    %v3747 = vsub.f32 %v675, %v547
    %v3748 = vsub.f32 %v676, %v548
    %v3749 = vsub.f32 %v677, %v549
    %v3750 = vsub.f32 %v678, %v550
    %v3751 = vsub.f32 %v679, %v551
    %v3752 = vsub.f32 %v680, %v552
    %v3753 = vsub.f32 %v681, %v553
    %v3754 = vsub.f32 %v682, %v554
    %v3755 = vsub.f32 %v683, %v555
    %v3756 = vsub.f32 %v684, %v556
    %v3757 = vsub.f32 %v685, %v557
    %v3758 = vsub.f32 %v686, %v558
    %v3759 = vsub.f32 %v687, %v559
    %v3760 = vsub.f32 %v688, %v560
    %v3761 = vsub.f32 %v689, %v561
    %v3762 = vsub.f32 %v690, %v562
    %v3763 = vsub.f32 %v691, %v563
    %v3764 = vsub.f32 %v692, %v564
    %v3765 = vsub.f32 %v693, %v565
    %v3766 = vsub.f32 %v694, %v566
    %v3767 = vsub.f32 %v695, %v567
    %v3768 = vsub.f32 %v696, %v568
    %v3769 = vsub.f32 %v697, %v569
    %v3770 = vsub.f32 %v698, %v570
    %v3771 = vsub.f32 %v699, %v571
    %v3772 = vsub.f32 %v700, %v572
    %v3773 = vsub.f32 %v701, %v573
    %v3774 = vsub.f32 %v702, %v574
    %v3775 = vsub.f32 %v703, %v575
    %v3776 = vsub.f32 %v704, %v576
    %v3777 = vsub.f32 %v705, %v577
    %v3778 = vsub.f32 %v706, %v578
    %v3779 = vsub.f32 %v707, %v579
    %v3780 = vsub.f32 %v708, %v580
    %v3781 = vsub.f32 %v709, %v581
    %v3782 = vsub.f32 %v710, %v582
    %v3783 = vsub.f32 %v711, %v583
    %v3784 = vsub.f32 %v712, %v584
    %v3785 = vsub.f32 %v713, %v585
    %v3786 = vsub.f32 %v714, %v586
    %v3787 = vsub.f32 %v715, %v587
    %v3788 = vsub.f32 %v716, %v588
    %v3789 = vsub.f32 %v3661, %v2125
    %v3790 = vsub.f32 %v3662, %v2126
    %v3791 = vsub.f32 %v3663, %v2127
    %v3792 = vsub.f32 %v3664, %v2128
    %v3793 = vsub.f32 %v3665, %v2129
    %v3794 = vsub.f32 %v3666, %v2130
    %v3795 = vsub.f32 %v3667, %v2131
    %v3796 = vsub.f32 %v3668, %v2132
    %v3797 = vsub.f32 %v3669, %v2133
    %v3798 = vsub.f32 %v3670, %v2134
    %v3799 = vsub.f32 %v3671, %v2135
    %v3800 = vsub.f32 %v3672, %v2136
    %v3801 = vsub.f32 %v3673, %v2137
    %v3802 = vsub.f32 %v3674, %v2138
    %v3803 = vsub.f32 %v3675, %v2139
    %v3804 = vsub.f32 %v3676, %v2140
    %v3805 = vsub.f32 %v3677, %v2141
    %v3806 = vsub.f32 %v3678, %v2142
    %v3807 = vsub.f32 %v3679, %v2143
    %v3808 = vsub.f32 %v3680, %v2144
    %v3809 = vsub.f32 %v3681, %v2145
    %v3810 = vsub.f32 %v3682, %v2146
    %v3811 = vsub.f32 %v3683, %v2147
    %v3812 = vsub.f32 %v3684, %v2148
    %v3813 = vsub.f32 %v3685, %v2149
    %v3814 = vsub.f32 %v3686, %v2150
    %v3815 = vsub.f32 %v3687, %v2151
    %v3816 = vsub.f32 %v3688, %v2152
    %v3817 = vsub.f32 %v3689, %v2153
    %v3818 = vsub.f32 %v3690, %v2154
    %v3819 = vsub.f32 %v3691, %v2155
    %v3820 = vsub.f32 %v3692, %v2156
    %v3821 = vsub.f32 %v3693, %v2157
    %v3822 = vsub.f32 %v3694, %v2158
    %v3823 = vsub.f32 %v3695, %v2159
    %v3824 = vsub.f32 %v3696, %v2160
    %v3825 = vsub.f32 %v3697, %v2161
    %v3826 = vsub.f32 %v3698, %v2162
    %v3827 = vsub.f32 %v3699, %v2163
    %v3828 = vsub.f32 %v3700, %v2164
    %v3829 = vsub.f32 %v3701, %v2165
    %v3830 = vsub.f32 %v3702, %v2166
    %v3831 = vsub.f32 %v3703, %v2167
    %v3832 = vsub.f32 %v3704, %v2168
    %v3833 = vsub.f32 %v3705, %v2169
    %v3834 = vsub.f32 %v3706, %v2170
    %v3835 = vsub.f32 %v3707, %v2171
    %v3836 = vsub.f32 %v3708, %v2172
    %v3837 = vsub.f32 %v3709, %v2173
    %v3838 = vsub.f32 %v3710, %v2174
    %v3839 = vsub.f32 %v3711, %v2175
    %v3840 = vsub.f32 %v3712, %v2176
    %v3841 = vsub.f32 %v3713, %v2177
    %v3842 = vsub.f32 %v3714, %v2178
    %v3843 = vsub.f32 %v3715, %v2179
    %v3844 = vsub.f32 %v3716, %v2180
    %v3845 = vsub.f32 %v3717, %v2181
    %v3846 = vsub.f32 %v3718, %v2182
    %v3847 = vsub.f32 %v3719, %v2183
    %v3848 = vsub.f32 %v3720, %v2184
    %v3849 = vsub.f32 %v3721, %v2185
    %v3850 = vsub.f32 %v3722, %v2186
    %v3851 = vsub.f32 %v3723, %v2187
    %v3852 = vsub.f32 %v3724, %v2188
    %v3853 = vsub.f32 %v3725, %v2189
    %v3854 = vsub.f32 %v3726, %v2190
    %v3855 = vsub.f32 %v3727, %v2191
    %v3856 = vsub.f32 %v3728, %v2192
    %v3857 = vsub.f32 %v3729, %v2193
    %v3858 = vsub.f32 %v3730, %v2194
    %v3859 = vsub.f32 %v3731, %v2195
    %v3860 = vsub.f32 %v3732, %v2196
    %v3861 = vsub.f32 %v3733, %v2197
    %v3862 = vsub.f32 %v3734, %v2198
    %v3863 = vsub.f32 %v3735, %v2199
    %v3864 = vsub.f32 %v3736, %v2200
    %v3865 = vsub.f32 %v3737, %v2201
    %v3866 = vsub.f32 %v3738, %v2202
    %v3867 = vsub.f32 %v3739, %v2203
    %v3868 = vsub.f32 %v3740, %v2204
    %v3869 = vsub.f32 %v3741, %v2205
    %v3870 = vsub.f32 %v3742, %v2206
    %v3871 = vsub.f32 %v3743, %v2207
    %v3872 = vsub.f32 %v3744, %v2208
    %v3873 = vsub.f32 %v3745, %v2209
    %v3874 = vsub.f32 %v3746, %v2210
    %v3875 = vsub.f32 %v3747, %v2211
    %v3876 = vsub.f32 %v3748, %v2212
    %v3877 = vsub.f32 %v3749, %v2213
    %v3878 = vsub.f32 %v3750, %v2214
    %v3879 = vsub.f32 %v3751, %v2215
    %v3880 = vsub.f32 %v3752, %v2216
    %v3881 = vsub.f32 %v3753, %v2217
    %v3882 = vsub.f32 %v3754, %v2218
    %v3883 = vsub.f32 %v3755, %v2219
    %v3884 = vsub.f32 %v3756, %v2220
    %v3885 = vsub.f32 %v3757, %v2221
    %v3886 = vsub.f32 %v3758, %v2222
    %v3887 = vsub.f32 %v3759, %v2223
    %v3888 = vsub.f32 %v3760, %v2224
    %v3889 = vsub.f32 %v3761, %v2225
    %v3890 = vsub.f32 %v3762, %v2226
    %v3891 = vsub.f32 %v3763, %v2227
    %v3892 = vsub.f32 %v3764, %v2228
    %v3893 = vsub.f32 %v3765, %v2229
    %v3894 = vsub.f32 %v3766, %v2230
    %v3895 = vsub.f32 %v3767, %v2231
    %v3896 = vsub.f32 %v3768, %v2232
    %v3897 = vsub.f32 %v3769, %v2233
    %v3898 = vsub.f32 %v3770, %v2234
    %v3899 = vsub.f32 %v3771, %v2235
    %v3900 = vsub.f32 %v3772, %v2236
    %v3901 = vsub.f32 %v3773, %v2237
    %v3902 = vsub.f32 %v3774, %v2238
    %v3903 = vsub.f32 %v3775, %v2239
    %v3904 = vsub.f32 %v3776, %v2240
    %v3905 = vsub.f32 %v3777, %v2241
    %v3906 = vsub.f32 %v3778, %v2242
    %v3907 = vsub.f32 %v3779, %v2243
    %v3908 = vsub.f32 %v3780, %v2244
    %v3909 = vsub.f32 %v3781, %v2245
    %v3910 = vsub.f32 %v3782, %v2246
    %v3911 = vsub.f32 %v3783, %v2247
    %v3912 = vsub.f32 %v3784, %v2248
    %v3913 = vsub.f32 %v3785, %v2249
    %v3914 = vsub.f32 %v3786, %v2250
    %v3915 = vsub.f32 %v3787, %v2251
    %v3916 = vsub.f32 %v3788, %v2252
    %v3917 = vrcp.pop %v3789
    %v3918 = vrcp.pop %v3790
    %v3919 = vrcp.pop %v3791
    %v3920 = vrcp.pop %v3792
    %v3921 = vrcp.pop %v3793
    %v3922 = vrcp.pop %v3794
    %v3923 = vrcp.pop %v3795
    %v3924 = vrcp.pop %v3796
    %v3925 = vrcp.pop %v3797
    %v3926 = vrcp.pop %v3798
    %v3927 = vrcp.pop %v3799
    %v3928 = vrcp.pop %v3800
    %v3929 = vrcp.pop %v3801
    %v3930 = vrcp.pop %v3802
    %v3931 = vrcp.pop %v3803
    %v3932 = vrcp.pop %v3804
    %v3933 = vrcp.pop %v3805
    %v3934 = vrcp.pop %v3806
    %v3935 = vrcp.pop %v3807
    %v3936 = vrcp.pop %v3808
    %v3937 = vrcp.pop %v3809
    %v3938 = vrcp.pop %v3810
    %v3939 = vrcp.pop %v3811
    %v3940 = vrcp.pop %v3812
    %v3941 = vrcp.pop %v3813
    %v3942 = vrcp.pop %v3814
    %v3943 = vrcp.pop %v3815
    %v3944 = vrcp.pop %v3816
    %v3945 = vrcp.pop %v3817
    %v3946 = vrcp.pop %v3818
    %v3947 = vrcp.pop %v3819
    %v3948 = vrcp.pop %v3820
    %v3949 = vrcp.pop %v3821
    %v3950 = vrcp.pop %v3822
    %v3951 = vrcp.pop %v3823
    %v3952 = vrcp.pop %v3824
    %v3953 = vrcp.pop %v3825
    %v3954 = vrcp.pop %v3826
    %v3955 = vrcp.pop %v3827
    %v3956 = vrcp.pop %v3828
    %v3957 = vrcp.pop %v3829
    %v3958 = vrcp.pop %v3830
    %v3959 = vrcp.pop %v3831
    %v3960 = vrcp.pop %v3832
    %v3961 = vrcp.pop %v3833
    %v3962 = vrcp.pop %v3834
    %v3963 = vrcp.pop %v3835
    %v3964 = vrcp.pop %v3836
    %v3965 = vrcp.pop %v3837
    %v3966 = vrcp.pop %v3838
    %v3967 = vrcp.pop %v3839
    %v3968 = vrcp.pop %v3840
    %v3969 = vrcp.pop %v3841
    %v3970 = vrcp.pop %v3842
    %v3971 = vrcp.pop %v3843
    %v3972 = vrcp.pop %v3844
    %v3973 = vrcp.pop %v3845
    %v3974 = vrcp.pop %v3846
    %v3975 = vrcp.pop %v3847
    %v3976 = vrcp.pop %v3848
    %v3977 = vrcp.pop %v3849
    %v3978 = vrcp.pop %v3850
    %v3979 = vrcp.pop %v3851
    %v3980 = vrcp.pop %v3852
    %v3981 = vrcp.pop %v3853
    %v3982 = vrcp.pop %v3854
    %v3983 = vrcp.pop %v3855
    %v3984 = vrcp.pop %v3856
    %v3985 = vrcp.pop %v3857
    %v3986 = vrcp.pop %v3858
    %v3987 = vrcp.pop %v3859
    %v3988 = vrcp.pop %v3860
    %v3989 = vrcp.pop %v3861
    %v3990 = vrcp.pop %v3862
    %v3991 = vrcp.pop %v3863
    %v3992 = vrcp.pop %v3864
    %v3993 = vrcp.pop %v3865
    %v3994 = vrcp.pop %v3866
    %v3995 = vrcp.pop %v3867
    %v3996 = vrcp.pop %v3868
    %v3997 = vrcp.pop %v3869
    %v3998 = vrcp.pop %v3870
    %v3999 = vrcp.pop %v3871
    %v4000 = vrcp.pop %v3872
    %v4001 = vrcp.pop %v3873
    %v4002 = vrcp.pop %v3874
    %v4003 = vrcp.pop %v3875
    %v4004 = vrcp.pop %v3876
    %v4005 = vrcp.pop %v3877
    %v4006 = vrcp.pop %v3878
    %v4007 = vrcp.pop %v3879
    %v4008 = vrcp.pop %v3880
    %v4009 = vrcp.pop %v3881
    %v4010 = vrcp.pop %v3882
    %v4011 = vrcp.pop %v3883
    %v4012 = vrcp.pop %v3884
    %v4013 = vrcp.pop %v3885
    %v4014 = vrcp.pop %v3886
    %v4015 = vrcp.pop %v3887
    %v4016 = vrcp.pop %v3888
    %v4017 = vrcp.pop %v3889
    %v4018 = vrcp.pop %v3890
    %v4019 = vrcp.pop %v3891
    %v4020 = vrcp.pop %v3892
    %v4021 = vrcp.pop %v3893
    %v4022 = vrcp.pop %v3894
    %v4023 = vrcp.pop %v3895
    %v4024 = vrcp.pop %v3896
    %v4025 = vrcp.pop %v3897
    %v4026 = vrcp.pop %v3898
    %v4027 = vrcp.pop %v3899
    %v4028 = vrcp.pop %v3900
    %v4029 = vrcp.pop %v3901
    %v4030 = vrcp.pop %v3902
    %v4031 = vrcp.pop %v3903
    %v4032 = vrcp.pop %v3904
    %v4033 = vrcp.pop %v3905
    %v4034 = vrcp.pop %v3906
    %v4035 = vrcp.pop %v3907
    %v4036 = vrcp.pop %v3908
    %v4037 = vrcp.pop %v3909
    %v4038 = vrcp.pop %v3910
    %v4039 = vrcp.pop %v3911
    %v4040 = vrcp.pop %v3912
    %v4041 = vrcp.pop %v3913
    %v4042 = vrcp.pop %v3914
    %v4043 = vrcp.pop %v3915
    %v4044 = vrcp.pop %v3916
    %v4045 = vmul.f32 %v3789, %v3917
    %v4046 = vmul.f32 %v3790, %v3918
    %v4047 = vmul.f32 %v3791, %v3919
    %v4048 = vmul.f32 %v3792, %v3920
    %v4049 = vmul.f32 %v3793, %v3921
    %v4050 = vmul.f32 %v3794, %v3922
    %v4051 = vmul.f32 %v3795, %v3923
    %v4052 = vmul.f32 %v3796, %v3924
    %v4053 = vmul.f32 %v3797, %v3925
    %v4054 = vmul.f32 %v3798, %v3926
    %v4055 = vmul.f32 %v3799, %v3927
    %v4056 = vmul.f32 %v3800, %v3928
    %v4057 = vmul.f32 %v3801, %v3929
    %v4058 = vmul.f32 %v3802, %v3930
    %v4059 = vmul.f32 %v3803, %v3931
    %v4060 = vmul.f32 %v3804, %v3932
    %v4061 = vmul.f32 %v3805, %v3933
    %v4062 = vmul.f32 %v3806, %v3934
    %v4063 = vmul.f32 %v3807, %v3935
    %v4064 = vmul.f32 %v3808, %v3936
    %v4065 = vmul.f32 %v3809, %v3937
    %v4066 = vmul.f32 %v3810, %v3938
    %v4067 = vmul.f32 %v3811, %v3939
    %v4068 = vmul.f32 %v3812, %v3940
    %v4069 = vmul.f32 %v3813, %v3941
    %v4070 = vmul.f32 %v3814, %v3942
    %v4071 = vmul.f32 %v3815, %v3943
    %v4072 = vmul.f32 %v3816, %v3944
    %v4073 = vmul.f32 %v3817, %v3945
    %v4074 = vmul.f32 %v3818, %v3946
    %v4075 = vmul.f32 %v3819, %v3947
    %v4076 = vmul.f32 %v3820, %v3948
    %v4077 = vmul.f32 %v3821, %v3949
    %v4078 = vmul.f32 %v3822, %v3950
    %v4079 = vmul.f32 %v3823, %v3951
    %v4080 = vmul.f32 %v3824, %v3952
    %v4081 = vmul.f32 %v3825, %v3953
    %v4082 = vmul.f32 %v3826, %v3954
    %v4083 = vmul.f32 %v3827, %v3955
    %v4084 = vmul.f32 %v3828, %v3956
    %v4085 = vmul.f32 %v3829, %v3957
    %v4086 = vmul.f32 %v3830, %v3958
    %v4087 = vmul.f32 %v3831, %v3959
    %v4088 = vmul.f32 %v3832, %v3960
    %v4089 = vmul.f32 %v3833, %v3961
    %v4090 = vmul.f32 %v3834, %v3962
    %v4091 = vmul.f32 %v3835, %v3963
    %v4092 = vmul.f32 %v3836, %v3964
    %v4093 = vmul.f32 %v3837, %v3965
    %v4094 = vmul.f32 %v3838, %v3966
    %v4095 = vmul.f32 %v3839, %v3967
    %v4096 = vmul.f32 %v3840, %v3968
    %v4097 = vmul.f32 %v3841, %v3969
    %v4098 = vmul.f32 %v3842, %v3970
    %v4099 = vmul.f32 %v3843, %v3971
    %v4100 = vmul.f32 %v3844, %v3972
    %v4101 = vmul.f32 %v3845, %v3973
    %v4102 = vmul.f32 %v3846, %v3974
    %v4103 = vmul.f32 %v3847, %v3975
    %v4104 = vmul.f32 %v3848, %v3976
    %v4105 = vmul.f32 %v3849, %v3977
    %v4106 = vmul.f32 %v3850, %v3978
    %v4107 = vmul.f32 %v3851, %v3979
    %v4108 = vmul.f32 %v3852, %v3980
    %v4109 = vmul.f32 %v3853, %v3981
    %v4110 = vmul.f32 %v3854, %v3982
    %v4111 = vmul.f32 %v3855, %v3983
    %v4112 = vmul.f32 %v3856, %v3984
    %v4113 = vmul.f32 %v3857, %v3985
    %v4114 = vmul.f32 %v3858, %v3986
    %v4115 = vmul.f32 %v3859, %v3987
    %v4116 = vmul.f32 %v3860, %v3988
    %v4117 = vmul.f32 %v3861, %v3989
    %v4118 = vmul.f32 %v3862, %v3990
    %v4119 = vmul.f32 %v3863, %v3991
    %v4120 = vmul.f32 %v3864, %v3992
    %v4121 = vmul.f32 %v3865, %v3993
    %v4122 = vmul.f32 %v3866, %v3994
    %v4123 = vmul.f32 %v3867, %v3995
    %v4124 = vmul.f32 %v3868, %v3996
    %v4125 = vmul.f32 %v3869, %v3997
    %v4126 = vmul.f32 %v3870, %v3998
    %v4127 = vmul.f32 %v3871, %v3999
    %v4128 = vmul.f32 %v3872, %v4000
    %v4129 = vmul.f32 %v3873, %v4001
    %v4130 = vmul.f32 %v3874, %v4002
    %v4131 = vmul.f32 %v3875, %v4003
    %v4132 = vmul.f32 %v3876, %v4004
    %v4133 = vmul.f32 %v3877, %v4005
    %v4134 = vmul.f32 %v3878, %v4006
    %v4135 = vmul.f32 %v3879, %v4007
    %v4136 = vmul.f32 %v3880, %v4008
    %v4137 = vmul.f32 %v3881, %v4009
    %v4138 = vmul.f32 %v3882, %v4010
    %v4139 = vmul.f32 %v3883, %v4011
    %v4140 = vmul.f32 %v3884, %v4012
    %v4141 = vmul.f32 %v3885, %v4013
    %v4142 = vmul.f32 %v3886, %v4014
    %v4143 = vmul.f32 %v3887, %v4015
    %v4144 = vmul.f32 %v3888, %v4016
    %v4145 = vmul.f32 %v3889, %v4017
    %v4146 = vmul.f32 %v3890, %v4018
    %v4147 = vmul.f32 %v3891, %v4019
    %v4148 = vmul.f32 %v3892, %v4020
    %v4149 = vmul.f32 %v3893, %v4021
    %v4150 = vmul.f32 %v3894, %v4022
    %v4151 = vmul.f32 %v3895, %v4023
    %v4152 = vmul.f32 %v3896, %v4024
    %v4153 = vmul.f32 %v3897, %v4025
    %v4154 = vmul.f32 %v3898, %v4026
    %v4155 = vmul.f32 %v3899, %v4027
    %v4156 = vmul.f32 %v3900, %v4028
    %v4157 = vmul.f32 %v3901, %v4029
    %v4158 = vmul.f32 %v3902, %v4030
    %v4159 = vmul.f32 %v3903, %v4031
    %v4160 = vmul.f32 %v3904, %v4032
    %v4161 = vmul.f32 %v3905, %v4033
    %v4162 = vmul.f32 %v3906, %v4034
    %v4163 = vmul.f32 %v3907, %v4035
    %v4164 = vmul.f32 %v3908, %v4036
    %v4165 = vmul.f32 %v3909, %v4037
    %v4166 = vmul.f32 %v3910, %v4038
    %v4167 = vmul.f32 %v3911, %v4039
    %v4168 = vmul.f32 %v3912, %v4040
    %v4169 = vmul.f32 %v3913, %v4041
    %v4170 = vmul.f32 %v3914, %v4042
    %v4171 = vmul.f32 %v3915, %v4043
    %v4172 = vmul.f32 %v3916, %v4044
    %v4173 = vsub.f32 2.0, %v4045
    %v4174 = vsub.f32 2.0, %v4046
    %v4175 = vsub.f32 2.0, %v4047
    %v4176 = vsub.f32 2.0, %v4048
    %v4177 = vsub.f32 2.0, %v4049
    %v4178 = vsub.f32 2.0, %v4050
    %v4179 = vsub.f32 2.0, %v4051
    %v4180 = vsub.f32 2.0, %v4052
    %v4181 = vsub.f32 2.0, %v4053
    %v4182 = vsub.f32 2.0, %v4054
    %v4183 = vsub.f32 2.0, %v4055
    %v4184 = vsub.f32 2.0, %v4056
    %v4185 = vsub.f32 2.0, %v4057
    %v4186 = vsub.f32 2.0, %v4058
    %v4187 = vsub.f32 2.0, %v4059
    %v4188 = vsub.f32 2.0, %v4060
    %v4189 = vsub.f32 2.0, %v4061
    %v4190 = vsub.f32 2.0, %v4062
    %v4191 = vsub.f32 2.0, %v4063
    %v4192 = vsub.f32 2.0, %v4064
    %v4193 = vsub.f32 2.0, %v4065
    %v4194 = vsub.f32 2.0, %v4066
    %v4195 = vsub.f32 2.0, %v4067
    %v4196 = vsub.f32 2.0, %v4068
    %v4197 = vsub.f32 2.0, %v4069
    %v4198 = vsub.f32 2.0, %v4070
    %v4199 = vsub.f32 2.0, %v4071
    %v4200 = vsub.f32 2.0, %v4072
    %v4201 = vsub.f32 2.0, %v4073
    %v4202 = vsub.f32 2.0, %v4074
    %v4203 = vsub.f32 2.0, %v4075
    %v4204 = vsub.f32 2.0, %v4076
    %v4205 = vsub.f32 2.0, %v4077
    %v4206 = vsub.f32 2.0, %v4078
    %v4207 = vsub.f32 2.0, %v4079
    %v4208 = vsub.f32 2.0, %v4080
    %v4209 = vsub.f32 2.0, %v4081
    %v4210 = vsub.f32 2.0, %v4082
    %v4211 = vsub.f32 2.0, %v4083
    %v4212 = vsub.f32 2.0, %v4084
    %v4213 = vsub.f32 2.0, %v4085
    %v4214 = vsub.f32 2.0, %v4086
    %v4215 = vsub.f32 2.0, %v4087
    %v4216 = vsub.f32 2.0, %v4088
    %v4217 = vsub.f32 2.0, %v4089
    %v4218 = vsub.f32 2.0, %v4090
    %v4219 = vsub.f32 2.0, %v4091
    %v4220 = vsub.f32 2.0, %v4092
    %v4221 = vsub.f32 2.0, %v4093
    %v4222 = vsub.f32 2.0, %v4094
    %v4223 = vsub.f32 2.0, %v4095
    %v4224 = vsub.f32 2.0, %v4096
    %v4225 = vsub.f32 2.0, %v4097
    %v4226 = vsub.f32 2.0, %v4098
    %v4227 = vsub.f32 2.0, %v4099
    %v4228 = vsub.f32 2.0, %v4100
    %v4229 = vsub.f32 2.0, %v4101
    %v4230 = vsub.f32 2.0, %v4102
    %v4231 = vsub.f32 2.0, %v4103
    %v4232 = vsub.f32 2.0, %v4104
    %v4233 = vsub.f32 2.0, %v4105
    %v4234 = vsub.f32 2.0, %v4106
    %v4235 = vsub.f32 2.0, %v4107
    %v4236 = vsub.f32 2.0, %v4108
    %v4237 = vsub.f32 2.0, %v4109
    %v4238 = vsub.f32 2.0, %v4110
    %v4239 = vsub.f32 2.0, %v4111
    %v4240 = vsub.f32 2.0, %v4112
    %v4241 = vsub.f32 2.0, %v4113
    %v4242 = vsub.f32 2.0, %v4114
    %v4243 = vsub.f32 2.0, %v4115
    %v4244 = vsub.f32 2.0, %v4116
    %v4245 = vsub.f32 2.0, %v4117
    %v4246 = vsub.f32 2.0, %v4118
    %v4247 = vsub.f32 2.0, %v4119
    %v4248 = vsub.f32 2.0, %v4120
    %v4249 = vsub.f32 2.0, %v4121
    %v4250 = vsub.f32 2.0, %v4122
    %v4251 = vsub.f32 2.0, %v4123
    %v4252 = vsub.f32 2.0, %v4124
    %v4253 = vsub.f32 2.0, %v4125
    %v4254 = vsub.f32 2.0, %v4126
    %v4255 = vsub.f32 2.0, %v4127
    %v4256 = vsub.f32 2.0, %v4128
    %v4257 = vsub.f32 2.0, %v4129
    %v4258 = vsub.f32 2.0, %v4130
    %v4259 = vsub.f32 2.0, %v4131
    %v4260 = vsub.f32 2.0, %v4132
    %v4261 = vsub.f32 2.0, %v4133
    %v4262 = vsub.f32 2.0, %v4134
    %v4263 = vsub.f32 2.0, %v4135
    %v4264 = vsub.f32 2.0, %v4136
    %v4265 = vsub.f32 2.0, %v4137
    %v4266 = vsub.f32 2.0, %v4138
    %v4267 = vsub.f32 2.0, %v4139
    %v4268 = vsub.f32 2.0, %v4140
    %v4269 = vsub.f32 2.0, %v4141
    %v4270 = vsub.f32 2.0, %v4142
    %v4271 = vsub.f32 2.0, %v4143
    %v4272 = vsub.f32 2.0, %v4144
    %v4273 = vsub.f32 2.0, %v4145
    %v4274 = vsub.f32 2.0, %v4146
    %v4275 = vsub.f32 2.0, %v4147
    %v4276 = vsub.f32 2.0, %v4148
    %v4277 = vsub.f32 2.0, %v4149
    %v4278 = vsub.f32 2.0, %v4150
    %v4279 = vsub.f32 2.0, %v4151
    %v4280 = vsub.f32 2.0, %v4152
    %v4281 = vsub.f32 2.0, %v4153
    %v4282 = vsub.f32 2.0, %v4154
    %v4283 = vsub.f32 2.0, %v4155
    %v4284 = vsub.f32 2.0, %v4156
    %v4285 = vsub.f32 2.0, %v4157
    %v4286 = vsub.f32 2.0, %v4158
    %v4287 = vsub.f32 2.0, %v4159
    %v4288 = vsub.f32 2.0, %v4160
    %v4289 = vsub.f32 2.0, %v4161
    %v4290 = vsub.f32 2.0, %v4162
    %v4291 = vsub.f32 2.0, %v4163
    %v4292 = vsub.f32 2.0, %v4164
    %v4293 = vsub.f32 2.0, %v4165
    %v4294 = vsub.f32 2.0, %v4166
    %v4295 = vsub.f32 2.0, %v4167
    %v4296 = vsub.f32 2.0, %v4168
    %v4297 = vsub.f32 2.0, %v4169
    %v4298 = vsub.f32 2.0, %v4170
    %v4299 = vsub.f32 2.0, %v4171
    %v4300 = vsub.f32 2.0, %v4172
    %v4301 = vmul.f32 %v3917, %v4173
    %v4302 = vmul.f32 %v3918, %v4174
    %v4303 = vmul.f32 %v3919, %v4175
    %v4304 = vmul.f32 %v3920, %v4176
    %v4305 = vmul.f32 %v3921, %v4177
    %v4306 = vmul.f32 %v3922, %v4178
    %v4307 = vmul.f32 %v3923, %v4179
    %v4308 = vmul.f32 %v3924, %v4180
    %v4309 = vmul.f32 %v3925, %v4181
    %v4310 = vmul.f32 %v3926, %v4182
    %v4311 = vmul.f32 %v3927, %v4183
    %v4312 = vmul.f32 %v3928, %v4184
    %v4313 = vmul.f32 %v3929, %v4185
    %v4314 = vmul.f32 %v3930, %v4186
    %v4315 = vmul.f32 %v3931, %v4187
    %v4316 = vmul.f32 %v3932, %v4188
    %v4317 = vmul.f32 %v3933, %v4189
    %v4318 = vmul.f32 %v3934, %v4190
    %v4319 = vmul.f32 %v3935, %v4191
    %v4320 = vmul.f32 %v3936, %v4192
    %v4321 = vmul.f32 %v3937, %v4193
    %v4322 = vmul.f32 %v3938, %v4194
    %v4323 = vmul.f32 %v3939, %v4195
    %v4324 = vmul.f32 %v3940, %v4196
    %v4325 = vmul.f32 %v3941, %v4197
    %v4326 = vmul.f32 %v3942, %v4198
    %v4327 = vmul.f32 %v3943, %v4199
    %v4328 = vmul.f32 %v3944, %v4200
    %v4329 = vmul.f32 %v3945, %v4201
    %v4330 = vmul.f32 %v3946, %v4202
    %v4331 = vmul.f32 %v3947, %v4203
    %v4332 = vmul.f32 %v3948, %v4204
    %v4333 = vmul.f32 %v3949, %v4205
    %v4334 = vmul.f32 %v3950, %v4206
    %v4335 = vmul.f32 %v3951, %v4207
    %v4336 = vmul.f32 %v3952, %v4208
    %v4337 = vmul.f32 %v3953, %v4209
    %v4338 = vmul.f32 %v3954, %v4210
    %v4339 = vmul.f32 %v3955, %v4211
    %v4340 = vmul.f32 %v3956, %v4212
    %v4341 = vmul.f32 %v3957, %v4213
    %v4342 = vmul.f32 %v3958, %v4214
    %v4343 = vmul.f32 %v3959, %v4215
    %v4344 = vmul.f32 %v3960, %v4216
    %v4345 = vmul.f32 %v3961, %v4217
    %v4346 = vmul.f32 %v3962, %v4218
    %v4347 = vmul.f32 %v3963, %v4219
    %v4348 = vmul.f32 %v3964, %v4220
    %v4349 = vmul.f32 %v3965, %v4221
    %v4350 = vmul.f32 %v3966, %v4222
    %v4351 = vmul.f32 %v3967, %v4223
    %v4352 = vmul.f32 %v3968, %v4224
    %v4353 = vmul.f32 %v3969, %v4225
    %v4354 = vmul.f32 %v3970, %v4226
    %v4355 = vmul.f32 %v3971, %v4227
    %v4356 = vmul.f32 %v3972, %v4228
    %v4357 = vmul.f32 %v3973, %v4229
    %v4358 = vmul.f32 %v3974, %v4230
    %v4359 = vmul.f32 %v3975, %v4231
    %v4360 = vmul.f32 %v3976, %v4232
    %v4361 = vmul.f32 %v3977, %v4233
    %v4362 = vmul.f32 %v3978, %v4234
    %v4363 = vmul.f32 %v3979, %v4235
    %v4364 = vmul.f32 %v3980, %v4236
    %v4365 = vmul.f32 %v3981, %v4237
    %v4366 = vmul.f32 %v3982, %v4238
    %v4367 = vmul.f32 %v3983, %v4239
    %v4368 = vmul.f32 %v3984, %v4240
    %v4369 = vmul.f32 %v3985, %v4241
    %v4370 = vmul.f32 %v3986, %v4242
    %v4371 = vmul.f32 %v3987, %v4243
    %v4372 = vmul.f32 %v3988, %v4244
    %v4373 = vmul.f32 %v3989, %v4245
    %v4374 = vmul.f32 %v3990, %v4246
    %v4375 = vmul.f32 %v3991, %v4247
    %v4376 = vmul.f32 %v3992, %v4248
    %v4377 = vmul.f32 %v3993, %v4249
    %v4378 = vmul.f32 %v3994, %v4250
    %v4379 = vmul.f32 %v3995, %v4251
    %v4380 = vmul.f32 %v3996, %v4252
    %v4381 = vmul.f32 %v3997, %v4253
    %v4382 = vmul.f32 %v3998, %v4254
    %v4383 = vmul.f32 %v3999, %v4255
    %v4384 = vmul.f32 %v4000, %v4256
    %v4385 = vmul.f32 %v4001, %v4257
    %v4386 = vmul.f32 %v4002, %v4258
    %v4387 = vmul.f32 %v4003, %v4259
    %v4388 = vmul.f32 %v4004, %v4260
    %v4389 = vmul.f32 %v4005, %v4261
    %v4390 = vmul.f32 %v4006, %v4262
    %v4391 = vmul.f32 %v4007, %v4263
    %v4392 = vmul.f32 %v4008, %v4264
    %v4393 = vmul.f32 %v4009, %v4265
    %v4394 = vmul.f32 %v4010, %v4266
    %v4395 = vmul.f32 %v4011, %v4267
    %v4396 = vmul.f32 %v4012, %v4268
    %v4397 = vmul.f32 %v4013, %v4269
    %v4398 = vmul.f32 %v4014, %v4270
    %v4399 = vmul.f32 %v4015, %v4271
    %v4400 = vmul.f32 %v4016, %v4272
    %v4401 = vmul.f32 %v4017, %v4273
    %v4402 = vmul.f32 %v4018, %v4274
    %v4403 = vmul.f32 %v4019, %v4275
    %v4404 = vmul.f32 %v4020, %v4276
    %v4405 = vmul.f32 %v4021, %v4277
    %v4406 = vmul.f32 %v4022, %v4278
    %v4407 = vmul.f32 %v4023, %v4279
    %v4408 = vmul.f32 %v4024, %v4280
    %v4409 = vmul.f32 %v4025, %v4281
    %v4410 = vmul.f32 %v4026, %v4282
    %v4411 = vmul.f32 %v4027, %v4283
    %v4412 = vmul.f32 %v4028, %v4284
    %v4413 = vmul.f32 %v4029, %v4285
    %v4414 = vmul.f32 %v4030, %v4286
    %v4415 = vmul.f32 %v4031, %v4287
    %v4416 = vmul.f32 %v4032, %v4288
    %v4417 = vmul.f32 %v4033, %v4289
    %v4418 = vmul.f32 %v4034, %v4290
    %v4419 = vmul.f32 %v4035, %v4291
    %v4420 = vmul.f32 %v4036, %v4292
    %v4421 = vmul.f32 %v4037, %v4293
    %v4422 = vmul.f32 %v4038, %v4294
    %v4423 = vmul.f32 %v4039, %v4295
    %v4424 = vmul.f32 %v4040, %v4296
    %v4425 = vmul.f32 %v4041, %v4297
    %v4426 = vmul.f32 %v4042, %v4298
    %v4427 = vmul.f32 %v4043, %v4299
    %v4428 = vmul.f32 %v4044, %v4300
    %v4429 = vmul.f32 %v3405, %v4301
    %v4430 = vmul.f32 %v3406, %v4302
    %v4431 = vmul.f32 %v3407, %v4303
    %v4432 = vmul.f32 %v3408, %v4304
    %v4433 = vmul.f32 %v3409, %v4305
    %v4434 = vmul.f32 %v3410, %v4306
    %v4435 = vmul.f32 %v3411, %v4307
    %v4436 = vmul.f32 %v3412, %v4308
    %v4437 = vmul.f32 %v3413, %v4309
    %v4438 = vmul.f32 %v3414, %v4310
    %v4439 = vmul.f32 %v3415, %v4311
    %v4440 = vmul.f32 %v3416, %v4312
    %v4441 = vmul.f32 %v3417, %v4313
    %v4442 = vmul.f32 %v3418, %v4314
    %v4443 = vmul.f32 %v3419, %v4315
    %v4444 = vmul.f32 %v3420, %v4316
    %v4445 = vmul.f32 %v3421, %v4317
    %v4446 = vmul.f32 %v3422, %v4318
    %v4447 = vmul.f32 %v3423, %v4319
    %v4448 = vmul.f32 %v3424, %v4320
    %v4449 = vmul.f32 %v3425, %v4321
    %v4450 = vmul.f32 %v3426, %v4322
    %v4451 = vmul.f32 %v3427, %v4323
    %v4452 = vmul.f32 %v3428, %v4324
    %v4453 = vmul.f32 %v3429, %v4325
    %v4454 = vmul.f32 %v3430, %v4326
    %v4455 = vmul.f32 %v3431, %v4327
    %v4456 = vmul.f32 %v3432, %v4328
    %v4457 = vmul.f32 %v3433, %v4329
    %v4458 = vmul.f32 %v3434, %v4330
    %v4459 = vmul.f32 %v3435, %v4331
    %v4460 = vmul.f32 %v3436, %v4332
    %v4461 = vmul.f32 %v3437, %v4333
    %v4462 = vmul.f32 %v3438, %v4334
    %v4463 = vmul.f32 %v3439, %v4335
    %v4464 = vmul.f32 %v3440, %v4336
    %v4465 = vmul.f32 %v3441, %v4337
    %v4466 = vmul.f32 %v3442, %v4338
    %v4467 = vmul.f32 %v3443, %v4339
    %v4468 = vmul.f32 %v3444, %v4340
    %v4469 = vmul.f32 %v3445, %v4341
    %v4470 = vmul.f32 %v3446, %v4342
    %v4471 = vmul.f32 %v3447, %v4343
    %v4472 = vmul.f32 %v3448, %v4344
    %v4473 = vmul.f32 %v3449, %v4345
    %v4474 = vmul.f32 %v3450, %v4346
    %v4475 = vmul.f32 %v3451, %v4347
    %v4476 = vmul.f32 %v3452, %v4348
    %v4477 = vmul.f32 %v3453, %v4349
    %v4478 = vmul.f32 %v3454, %v4350
    %v4479 = vmul.f32 %v3455, %v4351
    %v4480 = vmul.f32 %v3456, %v4352
    %v4481 = vmul.f32 %v3457, %v4353
    %v4482 = vmul.f32 %v3458, %v4354
    %v4483 = vmul.f32 %v3459, %v4355
    %v4484 = vmul.f32 %v3460, %v4356
    %v4485 = vmul.f32 %v3461, %v4357
    %v4486 = vmul.f32 %v3462, %v4358
    %v4487 = vmul.f32 %v3463, %v4359
    %v4488 = vmul.f32 %v3464, %v4360
    %v4489 = vmul.f32 %v3465, %v4361
    %v4490 = vmul.f32 %v3466, %v4362
    %v4491 = vmul.f32 %v3467, %v4363
    %v4492 = vmul.f32 %v3468, %v4364
    %v4493 = vmul.f32 %v3469, %v4365
    %v4494 = vmul.f32 %v3470, %v4366
    %v4495 = vmul.f32 %v3471, %v4367
    %v4496 = vmul.f32 %v3472, %v4368
    %v4497 = vmul.f32 %v3473, %v4369
    %v4498 = vmul.f32 %v3474, %v4370
    %v4499 = vmul.f32 %v3475, %v4371
    %v4500 = vmul.f32 %v3476, %v4372
    %v4501 = vmul.f32 %v3477, %v4373
    %v4502 = vmul.f32 %v3478, %v4374
    %v4503 = vmul.f32 %v3479, %v4375
    %v4504 = vmul.f32 %v3480, %v4376
    %v4505 = vmul.f32 %v3481, %v4377
    %v4506 = vmul.f32 %v3482, %v4378
    %v4507 = vmul.f32 %v3483, %v4379
    %v4508 = vmul.f32 %v3484, %v4380
    %v4509 = vmul.f32 %v3485, %v4381
    %v4510 = vmul.f32 %v3486, %v4382
    %v4511 = vmul.f32 %v3487, %v4383
    %v4512 = vmul.f32 %v3488, %v4384
    %v4513 = vmul.f32 %v3489, %v4385
    %v4514 = vmul.f32 %v3490, %v4386
    %v4515 = vmul.f32 %v3491, %v4387
    %v4516 = vmul.f32 %v3492, %v4388
    %v4517 = vmul.f32 %v3493, %v4389
    %v4518 = vmul.f32 %v3494, %v4390
    %v4519 = vmul.f32 %v3495, %v4391
    %v4520 = vmul.f32 %v3496, %v4392
    %v4521 = vmul.f32 %v3497, %v4393
    %v4522 = vmul.f32 %v3498, %v4394
    %v4523 = vmul.f32 %v3499, %v4395
    %v4524 = vmul.f32 %v3500, %v4396
    %v4525 = vmul.f32 %v3501, %v4397
    %v4526 = vmul.f32 %v3502, %v4398
    %v4527 = vmul.f32 %v3503, %v4399
    %v4528 = vmul.f32 %v3504, %v4400
    %v4529 = vmul.f32 %v3505, %v4401
    %v4530 = vmul.f32 %v3506, %v4402
    %v4531 = vmul.f32 %v3507, %v4403
    %v4532 = vmul.f32 %v3508, %v4404
    %v4533 = vmul.f32 %v3509, %v4405
    %v4534 = vmul.f32 %v3510, %v4406
    %v4535 = vmul.f32 %v3511, %v4407
    %v4536 = vmul.f32 %v3512, %v4408
    %v4537 = vmul.f32 %v3513, %v4409
    %v4538 = vmul.f32 %v3514, %v4410
    %v4539 = vmul.f32 %v3515, %v4411
    %v4540 = vmul.f32 %v3516, %v4412
    %v4541 = vmul.f32 %v3517, %v4413
    %v4542 = vmul.f32 %v3518, %v4414
    %v4543 = vmul.f32 %v3519, %v4415
    %v4544 = vmul.f32 %v3520, %v4416
    %v4545 = vmul.f32 %v3521, %v4417
    %v4546 = vmul.f32 %v3522, %v4418
    %v4547 = vmul.f32 %v3523, %v4419
    %v4548 = vmul.f32 %v3524, %v4420
    %v4549 = vmul.f32 %v3525, %v4421
    %v4550 = vmul.f32 %v3526, %v4422
    %v4551 = vmul.f32 %v3527, %v4423
    %v4552 = vmul.f32 %v3528, %v4424
    %v4553 = vmul.f32 %v3529, %v4425
    %v4554 = vmul.f32 %v3530, %v4426
    %v4555 = vmul.f32 %v3531, %v4427
    %v4556 = vmul.f32 %v3532, %v4428
    %v4557 = vadd.f32 %v3533, %v4429
    %v4558 = vadd.f32 %v3534, %v4430
    %v4559 = vadd.f32 %v3535, %v4431
    %v4560 = vadd.f32 %v3536, %v4432
    %v4561 = vadd.f32 %v3537, %v4433
    %v4562 = vadd.f32 %v3538, %v4434
    %v4563 = vadd.f32 %v3539, %v4435
    %v4564 = vadd.f32 %v3540, %v4436
    %v4565 = vadd.f32 %v3541, %v4437
    %v4566 = vadd.f32 %v3542, %v4438
    %v4567 = vadd.f32 %v3543, %v4439
    %v4568 = vadd.f32 %v3544, %v4440
    %v4569 = vadd.f32 %v3545, %v4441
    %v4570 = vadd.f32 %v3546, %v4442
    %v4571 = vadd.f32 %v3547, %v4443
    %v4572 = vadd.f32 %v3548, %v4444
    %v4573 = vadd.f32 %v3549, %v4445
    %v4574 = vadd.f32 %v3550, %v4446
    %v4575 = vadd.f32 %v3551, %v4447
    %v4576 = vadd.f32 %v3552, %v4448
    %v4577 = vadd.f32 %v3553, %v4449
    %v4578 = vadd.f32 %v3554, %v4450
    %v4579 = vadd.f32 %v3555, %v4451
    %v4580 = vadd.f32 %v3556, %v4452
    %v4581 = vadd.f32 %v3557, %v4453
    %v4582 = vadd.f32 %v3558, %v4454
    %v4583 = vadd.f32 %v3559, %v4455
    %v4584 = vadd.f32 %v3560, %v4456
    %v4585 = vadd.f32 %v3561, %v4457
    %v4586 = vadd.f32 %v3562, %v4458
    %v4587 = vadd.f32 %v3563, %v4459
    %v4588 = vadd.f32 %v3564, %v4460
    %v4589 = vadd.f32 %v3565, %v4461
    %v4590 = vadd.f32 %v3566, %v4462
    %v4591 = vadd.f32 %v3567, %v4463
    %v4592 = vadd.f32 %v3568, %v4464
    %v4593 = vadd.f32 %v3569, %v4465
    %v4594 = vadd.f32 %v3570, %v4466
    %v4595 = vadd.f32 %v3571, %v4467
    %v4596 = vadd.f32 %v3572, %v4468
    %v4597 = vadd.f32 %v3573, %v4469
    %v4598 = vadd.f32 %v3574, %v4470
    %v4599 = vadd.f32 %v3575, %v4471
    %v4600 = vadd.f32 %v3576, %v4472
    %v4601 = vadd.f32 %v3577, %v4473
    %v4602 = vadd.f32 %v3578, %v4474
    %v4603 = vadd.f32 %v3579, %v4475
    %v4604 = vadd.f32 %v3580, %v4476
    %v4605 = vadd.f32 %v3581, %v4477
    %v4606 = vadd.f32 %v3582, %v4478
    %v4607 = vadd.f32 %v3583, %v4479
    %v4608 = vadd.f32 %v3584, %v4480
    %v4609 = vadd.f32 %v3585, %v4481
    %v4610 = vadd.f32 %v3586, %v4482
    %v4611 = vadd.f32 %v3587, %v4483
    %v4612 = vadd.f32 %v3588, %v4484
    %v4613 = vadd.f32 %v3589, %v4485
    %v4614 = vadd.f32 %v3590, %v4486
    %v4615 = vadd.f32 %v3591, %v4487
    %v4616 = vadd.f32 %v3592, %v4488
    %v4617 = vadd.f32 %v3593, %v4489
    %v4618 = vadd.f32 %v3594, %v4490
    %v4619 = vadd.f32 %v3595, %v4491
    %v4620 = vadd.f32 %v3596, %v4492
    %v4621 = vadd.f32 %v3597, %v4493
    %v4622 = vadd.f32 %v3598, %v4494
    %v4623 = vadd.f32 %v3599, %v4495
    %v4624 = vadd.f32 %v3600, %v4496
    %v4625 = vadd.f32 %v3601, %v4497
    %v4626 = vadd.f32 %v3602, %v4498
    %v4627 = vadd.f32 %v3603, %v4499
    %v4628 = vadd.f32 %v3604, %v4500
    %v4629 = vadd.f32 %v3605, %v4501
    %v4630 = vadd.f32 %v3606, %v4502
    %v4631 = vadd.f32 %v3607, %v4503
    %v4632 = vadd.f32 %v3608, %v4504
    %v4633 = vadd.f32 %v3609, %v4505
    %v4634 = vadd.f32 %v3610, %v4506
    %v4635 = vadd.f32 %v3611, %v4507
    %v4636 = vadd.f32 %v3612, %v4508
    %v4637 = vadd.f32 %v3613, %v4509
    %v4638 = vadd.f32 %v3614, %v4510
    %v4639 = vadd.f32 %v3615, %v4511
    %v4640 = vadd.f32 %v3616, %v4512
    %v4641 = vadd.f32 %v3617, %v4513
    %v4642 = vadd.f32 %v3618, %v4514
    %v4643 = vadd.f32 %v3619, %v4515
    %v4644 = vadd.f32 %v3620, %v4516
    %v4645 = vadd.f32 %v3621, %v4517
    %v4646 = vadd.f32 %v3622, %v4518
    %v4647 = vadd.f32 %v3623, %v4519
    %v4648 = vadd.f32 %v3624, %v4520
    %v4649 = vadd.f32 %v3625, %v4521
    %v4650 = vadd.f32 %v3626, %v4522
    %v4651 = vadd.f32 %v3627, %v4523
    %v4652 = vadd.f32 %v3628, %v4524
    %v4653 = vadd.f32 %v3629, %v4525
    %v4654 = vadd.f32 %v3630, %v4526
    %v4655 = vadd.f32 %v3631, %v4527
    %v4656 = vadd.f32 %v3632, %v4528
    %v4657 = vadd.f32 %v3633, %v4529
    %v4658 = vadd.f32 %v3634, %v4530
    %v4659 = vadd.f32 %v3635, %v4531
    %v4660 = vadd.f32 %v3636, %v4532
    %v4661 = vadd.f32 %v3637, %v4533
    %v4662 = vadd.f32 %v3638, %v4534
    %v4663 = vadd.f32 %v3639, %v4535
    %v4664 = vadd.f32 %v3640, %v4536
    %v4665 = vadd.f32 %v3641, %v4537
    %v4666 = vadd.f32 %v3642, %v4538
    %v4667 = vadd.f32 %v3643, %v4539
    %v4668 = vadd.f32 %v3644, %v4540
    %v4669 = vadd.f32 %v3645, %v4541
    %v4670 = vadd.f32 %v3646, %v4542
    %v4671 = vadd.f32 %v3647, %v4543
    %v4672 = vadd.f32 %v3648, %v4544
    %v4673 = vadd.f32 %v3649, %v4545
    %v4674 = vadd.f32 %v3650, %v4546
    %v4675 = vadd.f32 %v3651, %v4547
    %v4676 = vadd.f32 %v3652, %v4548
    %v4677 = vadd.f32 %v3653, %v4549
    %v4678 = vadd.f32 %v3654, %v4550
    %v4679 = vadd.f32 %v3655, %v4551
    %v4680 = vadd.f32 %v3656, %v4552
    %v4681 = vadd.f32 %v3657, %v4553
    %v4682 = vadd.f32 %v3658, %v4554
    %v4683 = vadd.f32 %v3659, %v4555
    %v4684 = vadd.f32 %v3660, %v4556
    %4685 = vst [vmem:[#allocation10] sm:$0xff] %v4557
    %4686 = vst [vmem:[#allocation10 + $0x8] sm:$0xff] %v4558
    %4687 = vst [vmem:[#allocation10 + $0x10] sm:$0xff] %v4559
    %4688 = vst [vmem:[#allocation10 + $0x18] sm:$0xff] %v4560
    %4689 = vst [vmem:[#allocation10 + $0x20] sm:$0xff] %v4561
    %4690 = vst [vmem:[#allocation10 + $0x28] sm:$0xff] %v4562
    %4691 = vst [vmem:[#allocation10 + $0x30] sm:$0xff] %v4563
    %4692 = vst [vmem:[#allocation10 + $0x38] sm:$0xff] %v4564
    %4693 = vst [vmem:[#allocation10 + $0x40] sm:$0xff] %v4565
    %4694 = vst [vmem:[#allocation10 + $0x48] sm:$0xff] %v4566
    %4695 = vst [vmem:[#allocation10 + $0x50] sm:$0xff] %v4567
    %4696 = vst [vmem:[#allocation10 + $0x58] sm:$0xff] %v4568
    %4697 = vst [vmem:[#allocation10 + $0x60] sm:$0xff] %v4569
    %4698 = vst [vmem:[#allocation10 + $0x68] sm:$0xff] %v4570
    %4699 = vst [vmem:[#allocation10 + $0x70] sm:$0xff] %v4571
    %4700 = vst [vmem:[#allocation10 + $0x78] sm:$0xff] %v4572
    %4701 = vst [vmem:[#allocation10 + $0x80] sm:$0xff] %v4573
    %4702 = vst [vmem:[#allocation10 + $0x88] sm:$0xff] %v4574
    %4703 = vst [vmem:[#allocation10 + $0x90] sm:$0xff] %v4575
    %4704 = vst [vmem:[#allocation10 + $0x98] sm:$0xff] %v4576
    %4705 = vst [vmem:[#allocation10 + $0xa0] sm:$0xff] %v4577
    %4706 = vst [vmem:[#allocation10 + $0xa8] sm:$0xff] %v4578
    %4707 = vst [vmem:[#allocation10 + $0xb0] sm:$0xff] %v4579
    %4708 = vst [vmem:[#allocation10 + $0xb8] sm:$0xff] %v4580
    %4709 = vst [vmem:[#allocation10 + $0xc0] sm:$0xff] %v4581
    %4710 = vst [vmem:[#allocation10 + $0xc8] sm:$0xff] %v4582
    %4711 = vst [vmem:[#allocation10 + $0xd0] sm:$0xff] %v4583
    %4712 = vst [vmem:[#allocation10 + $0xd8] sm:$0xff] %v4584
    %4713 = vst [vmem:[#allocation10 + $0xe0] sm:$0xff] %v4585
    %4714 = vst [vmem:[#allocation10 + $0xe8] sm:$0xff] %v4586
    %4715 = vst [vmem:[#allocation10 + $0xf0] sm:$0xff] %v4587
    %4716 = vst [vmem:[#allocation10 + $0xf8] sm:$0xff] %v4588
    %4717 = vst [vmem:[#allocation10 + $0x100] sm:$0xff] %v4589
    %4718 = vst [vmem:[#allocation10 + $0x108] sm:$0xff] %v4590
    %4719 = vst [vmem:[#allocation10 + $0x110] sm:$0xff] %v4591
    %4720 = vst [vmem:[#allocation10 + $0x118] sm:$0xff] %v4592
    %4721 = vst [vmem:[#allocation10 + $0x120] sm:$0xff] %v4593
    %4722 = vst [vmem:[#allocation10 + $0x128] sm:$0xff] %v4594
    %4723 = vst [vmem:[#allocation10 + $0x130] sm:$0xff] %v4595
    %4724 = vst [vmem:[#allocation10 + $0x138] sm:$0xff] %v4596
    %4725 = vst [vmem:[#allocation10 + $0x140] sm:$0xff] %v4597
    %4726 = vst [vmem:[#allocation10 + $0x148] sm:$0xff] %v4598
    %4727 = vst [vmem:[#allocation10 + $0x150] sm:$0xff] %v4599
    %4728 = vst [vmem:[#allocation10 + $0x158] sm:$0xff] %v4600
    %4729 = vst [vmem:[#allocation10 + $0x160] sm:$0xff] %v4601
    %4730 = vst [vmem:[#allocation10 + $0x168] sm:$0xff] %v4602
    %4731 = vst [vmem:[#allocation10 + $0x170] sm:$0xff] %v4603
    %4732 = vst [vmem:[#allocation10 + $0x178] sm:$0xff] %v4604
    %4733 = vst [vmem:[#allocation10 + $0x180] sm:$0xff] %v4605
    %4734 = vst [vmem:[#allocation10 + $0x188] sm:$0xff] %v4606
    %4735 = vst [vmem:[#allocation10 + $0x190] sm:$0xff] %v4607
    %4736 = vst [vmem:[#allocation10 + $0x198] sm:$0xff] %v4608
    %4737 = vst [vmem:[#allocation10 + $0x1a0] sm:$0xff] %v4609
    %4738 = vst [vmem:[#allocation10 + $0x1a8] sm:$0xff] %v4610
    %4739 = vst [vmem:[#allocation10 + $0x1b0] sm:$0xff] %v4611
    %4740 = vst [vmem:[#allocation10 + $0x1b8] sm:$0xff] %v4612
    %4741 = vst [vmem:[#allocation10 + $0x1c0] sm:$0xff] %v4613
    %4742 = vst [vmem:[#allocation10 + $0x1c8] sm:$0xff] %v4614
    %4743 = vst [vmem:[#allocation10 + $0x1d0] sm:$0xff] %v4615
    %4744 = vst [vmem:[#allocation10 + $0x1d8] sm:$0xff] %v4616
    %4745 = vst [vmem:[#allocation10 + $0x1e0] sm:$0xff] %v4617
    %4746 = vst [vmem:[#allocation10 + $0x1e8] sm:$0xff] %v4618
    %4747 = vst [vmem:[#allocation10 + $0x1f0] sm:$0xff] %v4619
    %4748 = vst [vmem:[#allocation10 + $0x1f8] sm:$0xff] %v4620
    %4749 = vst [vmem:[#allocation10 + $0x200] sm:$0xff] %v4621
    %4750 = vst [vmem:[#allocation10 + $0x208] sm:$0xff] %v4622
    %4751 = vst [vmem:[#allocation10 + $0x210] sm:$0xff] %v4623
    %4752 = vst [vmem:[#allocation10 + $0x218] sm:$0xff] %v4624
    %4753 = vst [vmem:[#allocation10 + $0x220] sm:$0xff] %v4625
    %4754 = vst [vmem:[#allocation10 + $0x228] sm:$0xff] %v4626
    %4755 = vst [vmem:[#allocation10 + $0x230] sm:$0xff] %v4627
    %4756 = vst [vmem:[#allocation10 + $0x238] sm:$0xff] %v4628
    %4757 = vst [vmem:[#allocation10 + $0x240] sm:$0xff] %v4629
    %4758 = vst [vmem:[#allocation10 + $0x248] sm:$0xff] %v4630
    %4759 = vst [vmem:[#allocation10 + $0x250] sm:$0xff] %v4631
    %4760 = vst [vmem:[#allocation10 + $0x258] sm:$0xff] %v4632
    %4761 = vst [vmem:[#allocation10 + $0x260] sm:$0xff] %v4633
    %4762 = vst [vmem:[#allocation10 + $0x268] sm:$0xff] %v4634
    %4763 = vst [vmem:[#allocation10 + $0x270] sm:$0xff] %v4635
    %4764 = vst [vmem:[#allocation10 + $0x278] sm:$0xff] %v4636
    %4765 = vst [vmem:[#allocation10 + $0x280] sm:$0xff] %v4637
    %4766 = vst [vmem:[#allocation10 + $0x288] sm:$0xff] %v4638
    %4767 = vst [vmem:[#allocation10 + $0x290] sm:$0xff] %v4639
    %4768 = vst [vmem:[#allocation10 + $0x298] sm:$0xff] %v4640
    %4769 = vst [vmem:[#allocation10 + $0x2a0] sm:$0xff] %v4641
    %4770 = vst [vmem:[#allocation10 + $0x2a8] sm:$0xff] %v4642
    %4771 = vst [vmem:[#allocation10 + $0x2b0] sm:$0xff] %v4643
    %4772 = vst [vmem:[#allocation10 + $0x2b8] sm:$0xff] %v4644
    %4773 = vst [vmem:[#allocation10 + $0x2c0] sm:$0xff] %v4645
    %4774 = vst [vmem:[#allocation10 + $0x2c8] sm:$0xff] %v4646
    %4775 = vst [vmem:[#allocation10 + $0x2d0] sm:$0xff] %v4647
    %4776 = vst [vmem:[#allocation10 + $0x2d8] sm:$0xff] %v4648
    %4777 = vst [vmem:[#allocation10 + $0x2e0] sm:$0xff] %v4649
    %4778 = vst [vmem:[#allocation10 + $0x2e8] sm:$0xff] %v4650
    %4779 = vst [vmem:[#allocation10 + $0x2f0] sm:$0xff] %v4651
    %4780 = vst [vmem:[#allocation10 + $0x2f8] sm:$0xff] %v4652
    %4781 = vst [vmem:[#allocation10 + $0x300] sm:$0xff] %v4653
    %4782 = vst [vmem:[#allocation10 + $0x308] sm:$0xff] %v4654
    %4783 = vst [vmem:[#allocation10 + $0x310] sm:$0xff] %v4655
    %4784 = vst [vmem:[#allocation10 + $0x318] sm:$0xff] %v4656
    %4785 = vst [vmem:[#allocation10 + $0x320] sm:$0xff] %v4657
    %4786 = vst [vmem:[#allocation10 + $0x328] sm:$0xff] %v4658
    %4787 = vst [vmem:[#allocation10 + $0x330] sm:$0xff] %v4659
    %4788 = vst [vmem:[#allocation10 + $0x338] sm:$0xff] %v4660
    %4789 = vst [vmem:[#allocation10 + $0x340] sm:$0xff] %v4661
    %4790 = vst [vmem:[#allocation10 + $0x348] sm:$0xff] %v4662
    %4791 = vst [vmem:[#allocation10 + $0x350] sm:$0xff] %v4663
    %4792 = vst [vmem:[#allocation10 + $0x358] sm:$0xff] %v4664
    %4793 = vst [vmem:[#allocation10 + $0x360] sm:$0xff] %v4665
    %4794 = vst [vmem:[#allocation10 + $0x368] sm:$0xff] %v4666
    %4795 = vst [vmem:[#allocation10 + $0x370] sm:$0xff] %v4667
    %4796 = vst [vmem:[#allocation10 + $0x378] sm:$0xff] %v4668
    %4797 = vst [vmem:[#allocation10 + $0x380] sm:$0xff] %v4669
    %4798 = vst [vmem:[#allocation10 + $0x388] sm:$0xff] %v4670
    %4799 = vst [vmem:[#allocation10 + $0x390] sm:$0xff] %v4671
    %4800 = vst [vmem:[#allocation10 + $0x398] sm:$0xff] %v4672
    %4801 = vst [vmem:[#allocation10 + $0x3a0] sm:$0xff] %v4673
    %4802 = vst [vmem:[#allocation10 + $0x3a8] sm:$0xff] %v4674
    %4803 = vst [vmem:[#allocation10 + $0x3b0] sm:$0xff] %v4675
    %4804 = vst [vmem:[#allocation10 + $0x3b8] sm:$0xff] %v4676
    %4805 = vst [vmem:[#allocation10 + $0x3c0] sm:$0xff] %v4677
    %4806 = vst [vmem:[#allocation10 + $0x3c8] sm:$0xff] %v4678
    %4807 = vst [vmem:[#allocation10 + $0x3d0] sm:$0xff] %v4679
    %4808 = vst [vmem:[#allocation10 + $0x3d8] sm:$0xff] %v4680
    %4809 = vst [vmem:[#allocation10 + $0x3e0] sm:$0xff] %v4681
    %4810 = vst [vmem:[#allocation10 + $0x3e8] sm:$0xff] %v4682
    %4811 = vst [vmem:[#allocation10 + $0x3f0] sm:$0xff] %v4683
    %4812 = vst [vmem:[#allocation10 + $0x3f8] sm:$0xff] %v4684
    %4813 = vst [vmem:[#allocation11] sm:$0xff] %v3789
    %4814 = vst [vmem:[#allocation11 + $0x8] sm:$0xff] %v3790
    %4815 = vst [vmem:[#allocation11 + $0x10] sm:$0xff] %v3791
    %4816 = vst [vmem:[#allocation11 + $0x18] sm:$0xff] %v3792
    %4817 = vst [vmem:[#allocation11 + $0x20] sm:$0xff] %v3793
    %4818 = vst [vmem:[#allocation11 + $0x28] sm:$0xff] %v3794
    %4819 = vst [vmem:[#allocation11 + $0x30] sm:$0xff] %v3795
    %4820 = vst [vmem:[#allocation11 + $0x38] sm:$0xff] %v3796
    %4821 = vst [vmem:[#allocation11 + $0x40] sm:$0xff] %v3797
    %4822 = vst [vmem:[#allocation11 + $0x48] sm:$0xff] %v3798
    %4823 = vst [vmem:[#allocation11 + $0x50] sm:$0xff] %v3799
    %4824 = vst [vmem:[#allocation11 + $0x58] sm:$0xff] %v3800
    %4825 = vst [vmem:[#allocation11 + $0x60] sm:$0xff] %v3801
    %4826 = vst [vmem:[#allocation11 + $0x68] sm:$0xff] %v3802
    %4827 = vst [vmem:[#allocation11 + $0x70] sm:$0xff] %v3803
    %4828 = vst [vmem:[#allocation11 + $0x78] sm:$0xff] %v3804
    %4829 = vst [vmem:[#allocation11 + $0x80] sm:$0xff] %v3805
    %4830 = vst [vmem:[#allocation11 + $0x88] sm:$0xff] %v3806
    %4831 = vst [vmem:[#allocation11 + $0x90] sm:$0xff] %v3807
    %4832 = vst [vmem:[#allocation11 + $0x98] sm:$0xff] %v3808
    %4833 = vst [vmem:[#allocation11 + $0xa0] sm:$0xff] %v3809
    %4834 = vst [vmem:[#allocation11 + $0xa8] sm:$0xff] %v3810
    %4835 = vst [vmem:[#allocation11 + $0xb0] sm:$0xff] %v3811
    %4836 = vst [vmem:[#allocation11 + $0xb8] sm:$0xff] %v3812
    %4837 = vst [vmem:[#allocation11 + $0xc0] sm:$0xff] %v3813
    %4838 = vst [vmem:[#allocation11 + $0xc8] sm:$0xff] %v3814
    %4839 = vst [vmem:[#allocation11 + $0xd0] sm:$0xff] %v3815
    %4840 = vst [vmem:[#allocation11 + $0xd8] sm:$0xff] %v3816
    %4841 = vst [vmem:[#allocation11 + $0xe0] sm:$0xff] %v3817
    %4842 = vst [vmem:[#allocation11 + $0xe8] sm:$0xff] %v3818
    %4843 = vst [vmem:[#allocation11 + $0xf0] sm:$0xff] %v3819
    %4844 = vst [vmem:[#allocation11 + $0xf8] sm:$0xff] %v3820
    %4845 = vst [vmem:[#allocation11 + $0x100] sm:$0xff] %v3821
    %4846 = vst [vmem:[#allocation11 + $0x108] sm:$0xff] %v3822
    %4847 = vst [vmem:[#allocation11 + $0x110] sm:$0xff] %v3823
    %4848 = vst [vmem:[#allocation11 + $0x118] sm:$0xff] %v3824
    %4849 = vst [vmem:[#allocation11 + $0x120] sm:$0xff] %v3825
    %4850 = vst [vmem:[#allocation11 + $0x128] sm:$0xff] %v3826
    %4851 = vst [vmem:[#allocation11 + $0x130] sm:$0xff] %v3827
    %4852 = vst [vmem:[#allocation11 + $0x138] sm:$0xff] %v3828
    %4853 = vst [vmem:[#allocation11 + $0x140] sm:$0xff] %v3829
    %4854 = vst [vmem:[#allocation11 + $0x148] sm:$0xff] %v3830
    %4855 = vst [vmem:[#allocation11 + $0x150] sm:$0xff] %v3831
    %4856 = vst [vmem:[#allocation11 + $0x158] sm:$0xff] %v3832
    %4857 = vst [vmem:[#allocation11 + $0x160] sm:$0xff] %v3833
    %4858 = vst [vmem:[#allocation11 + $0x168] sm:$0xff] %v3834
    %4859 = vst [vmem:[#allocation11 + $0x170] sm:$0xff] %v3835
    %4860 = vst [vmem:[#allocation11 + $0x178] sm:$0xff] %v3836
    %4861 = vst [vmem:[#allocation11 + $0x180] sm:$0xff] %v3837
    %4862 = vst [vmem:[#allocation11 + $0x188] sm:$0xff] %v3838
    %4863 = vst [vmem:[#allocation11 + $0x190] sm:$0xff] %v3839
    %4864 = vst [vmem:[#allocation11 + $0x198] sm:$0xff] %v3840
    %4865 = vst [vmem:[#allocation11 + $0x1a0] sm:$0xff] %v3841
    %4866 = vst [vmem:[#allocation11 + $0x1a8] sm:$0xff] %v3842
    %4867 = vst [vmem:[#allocation11 + $0x1b0] sm:$0xff] %v3843
    %4868 = vst [vmem:[#allocation11 + $0x1b8] sm:$0xff] %v3844
    %4869 = vst [vmem:[#allocation11 + $0x1c0] sm:$0xff] %v3845
    %4870 = vst [vmem:[#allocation11 + $0x1c8] sm:$0xff] %v3846
    %4871 = vst [vmem:[#allocation11 + $0x1d0] sm:$0xff] %v3847
    %4872 = vst [vmem:[#allocation11 + $0x1d8] sm:$0xff] %v3848
    %4873 = vst [vmem:[#allocation11 + $0x1e0] sm:$0xff] %v3849
    %4874 = vst [vmem:[#allocation11 + $0x1e8] sm:$0xff] %v3850
    %4875 = vst [vmem:[#allocation11 + $0x1f0] sm:$0xff] %v3851
    %4876 = vst [vmem:[#allocation11 + $0x1f8] sm:$0xff] %v3852
    %4877 = vst [vmem:[#allocation11 + $0x200] sm:$0xff] %v3853
    %4878 = vst [vmem:[#allocation11 + $0x208] sm:$0xff] %v3854
    %4879 = vst [vmem:[#allocation11 + $0x210] sm:$0xff] %v3855
    %4880 = vst [vmem:[#allocation11 + $0x218] sm:$0xff] %v3856
    %4881 = vst [vmem:[#allocation11 + $0x220] sm:$0xff] %v3857
    %4882 = vst [vmem:[#allocation11 + $0x228] sm:$0xff] %v3858
    %4883 = vst [vmem:[#allocation11 + $0x230] sm:$0xff] %v3859
    %4884 = vst [vmem:[#allocation11 + $0x238] sm:$0xff] %v3860
    %4885 = vst [vmem:[#allocation11 + $0x240] sm:$0xff] %v3861
    %4886 = vst [vmem:[#allocation11 + $0x248] sm:$0xff] %v3862
    %4887 = vst [vmem:[#allocation11 + $0x250] sm:$0xff] %v3863
    %4888 = vst [vmem:[#allocation11 + $0x258] sm:$0xff] %v3864
    %4889 = vst [vmem:[#allocation11 + $0x260] sm:$0xff] %v3865
    %4890 = vst [vmem:[#allocation11 + $0x268] sm:$0xff] %v3866
    %4891 = vst [vmem:[#allocation11 + $0x270] sm:$0xff] %v3867
    %4892 = vst [vmem:[#allocation11 + $0x278] sm:$0xff] %v3868
    %4893 = vst [vmem:[#allocation11 + $0x280] sm:$0xff] %v3869
    %4894 = vst [vmem:[#allocation11 + $0x288] sm:$0xff] %v3870
    %4895 = vst [vmem:[#allocation11 + $0x290] sm:$0xff] %v3871
    %4896 = vst [vmem:[#allocation11 + $0x298] sm:$0xff] %v3872
    %4897 = vst [vmem:[#allocation11 + $0x2a0] sm:$0xff] %v3873
    %4898 = vst [vmem:[#allocation11 + $0x2a8] sm:$0xff] %v3874
    %4899 = vst [vmem:[#allocation11 + $0x2b0] sm:$0xff] %v3875
    %4900 = vst [vmem:[#allocation11 + $0x2b8] sm:$0xff] %v3876
    %4901 = vst [vmem:[#allocation11 + $0x2c0] sm:$0xff] %v3877
    %4902 = vst [vmem:[#allocation11 + $0x2c8] sm:$0xff] %v3878
    %4903 = vst [vmem:[#allocation11 + $0x2d0] sm:$0xff] %v3879
    %4904 = vst [vmem:[#allocation11 + $0x2d8] sm:$0xff] %v3880
    %4905 = vst [vmem:[#allocation11 + $0x2e0] sm:$0xff] %v3881
    %4906 = vst [vmem:[#allocation11 + $0x2e8] sm:$0xff] %v3882
    %4907 = vst [vmem:[#allocation11 + $0x2f0] sm:$0xff] %v3883
    %4908 = vst [vmem:[#allocation11 + $0x2f8] sm:$0xff] %v3884
    %4909 = vst [vmem:[#allocation11 + $0x300] sm:$0xff] %v3885
    %4910 = vst [vmem:[#allocation11 + $0x308] sm:$0xff] %v3886
    %4911 = vst [vmem:[#allocation11 + $0x310] sm:$0xff] %v3887
    %4912 = vst [vmem:[#allocation11 + $0x318] sm:$0xff] %v3888
    %4913 = vst [vmem:[#allocation11 + $0x320] sm:$0xff] %v3889
    %4914 = vst [vmem:[#allocation11 + $0x328] sm:$0xff] %v3890
    %4915 = vst [vmem:[#allocation11 + $0x330] sm:$0xff] %v3891
    %4916 = vst [vmem:[#allocation11 + $0x338] sm:$0xff] %v3892
    %4917 = vst [vmem:[#allocation11 + $0x340] sm:$0xff] %v3893
    %4918 = vst [vmem:[#allocation11 + $0x348] sm:$0xff] %v3894
    %4919 = vst [vmem:[#allocation11 + $0x350] sm:$0xff] %v3895
    %4920 = vst [vmem:[#allocation11 + $0x358] sm:$0xff] %v3896
    %4921 = vst [vmem:[#allocation11 + $0x360] sm:$0xff] %v3897
    %4922 = vst [vmem:[#allocation11 + $0x368] sm:$0xff] %v3898
    %4923 = vst [vmem:[#allocation11 + $0x370] sm:$0xff] %v3899
    %4924 = vst [vmem:[#allocation11 + $0x378] sm:$0xff] %v3900
    %4925 = vst [vmem:[#allocation11 + $0x380] sm:$0xff] %v3901
    %4926 = vst [vmem:[#allocation11 + $0x388] sm:$0xff] %v3902
    %4927 = vst [vmem:[#allocation11 + $0x390] sm:$0xff] %v3903
    %4928 = vst [vmem:[#allocation11 + $0x398] sm:$0xff] %v3904
    %4929 = vst [vmem:[#allocation11 + $0x3a0] sm:$0xff] %v3905
    %4930 = vst [vmem:[#allocation11 + $0x3a8] sm:$0xff] %v3906
    %4931 = vst [vmem:[#allocation11 + $0x3b0] sm:$0xff] %v3907
    %4932 = vst [vmem:[#allocation11 + $0x3b8] sm:$0xff] %v3908
    %4933 = vst [vmem:[#allocation11 + $0x3c0] sm:$0xff] %v3909
    %4934 = vst [vmem:[#allocation11 + $0x3c8] sm:$0xff] %v3910
    %4935 = vst [vmem:[#allocation11 + $0x3d0] sm:$0xff] %v3911
    %4936 = vst [vmem:[#allocation11 + $0x3d8] sm:$0xff] %v3912
    %4937 = vst [vmem:[#allocation11 + $0x3e0] sm:$0xff] %v3913
    %4938 = vst [vmem:[#allocation11 + $0x3e8] sm:$0xff] %v3914
    %4939 = vst [vmem:[#allocation11 + $0x3f0] sm:$0xff] %v3915
    %4940 = vst [vmem:[#allocation11 + $0x3f8] sm:$0xff] %v3916
    // Predicated region
    $region34: #{tpu_custom_call.1} parent=1 // pred_check
      _
    $region35: #{tpu_custom_call.1} parent=1 // pred_check_branch
      %4942 = sbr.rel (0) target = $region37
    $region36: #{tpu_custom_call.1} parent=1 // pred_region
      %s4944 = ssub.s32 16384, 16384
      %4945 = vsyncadd [#allocation4], %s4944
      %s4946 = sshll.u32 [#allocation10], 4
      %s4947 = int_to_ptr.vmem [resolvable:$true] %s4946
      %4952 = dma.vmem_to_hbm [thread:$0]  %s4947, 16384, %s4, [#allocation4], 1024, 1024, 64
    $region37: #{tpu_custom_call.1} parent=1 // pred_fallthru
      _
    // Predicated region
    $region38: #{tpu_custom_call.1} parent=1 // pred_check
      _
    $region39: #{tpu_custom_call.1} parent=1 // pred_check_branch
      %4954 = sbr.rel (0) target = $region41
    $region40: #{tpu_custom_call.1} parent=1 // pred_region
      %s4956 = ssub.s32 16384, 16384
      %4957 = vsyncadd [#allocation12], %s4956
      %s4958 = sshll.u32 [#allocation11], 4
      %s4959 = int_to_ptr.vmem [resolvable:$true] %s4958
      %4964 = dma.vmem_to_hbm [thread:$0]  %s4959, 16384, %s5, [#allocation12], 1024, 1024, 64
    $region41: #{tpu_custom_call.1} parent=1 // pred_fallthru
      _
    // Predicated region
    $region42: #{tpu_custom_call.1} parent=1 // pred_check
      _
    $region43: #{tpu_custom_call.1} parent=1 // pred_check_branch
      %4966 = sbr.rel (0) target = $region45
    $region44: #{tpu_custom_call.1} parent=1 // pred_region
      %4967 = dma.done [#allocation4], 16384
    $region45: #{tpu_custom_call.1} parent=1 // pred_fallthru
      _
    // Predicated region
    $region46: #{tpu_custom_call.1} parent=1 // pred_check
      _
    $region47: #{tpu_custom_call.1} parent=1 // pred_check_branch
      %4969 = sbr.rel (0) target = $region49
    $region48: #{tpu_custom_call.1} parent=1 // pred_region
      %4970 = dma.done [#allocation12], 16384
    $region49: #{tpu_custom_call.1} parent=1 // pred_fallthru
      _
    %4971 = vsyncpa [#allocation3], 1
    %4972 = vsyncpa [#allocation6], 1
    %4973 = vsyncpa [#allocation9], 1
    %4974 = vsyncpa [#allocation4], 1
    %4975 = vsyncpa [#allocation12], 1

</llo_original>
